<compile_context>
chip_gen: v6e
topology: v6e:2x2x1
jax: 0.10.0
libtpu: 0.0.40
codegen_flags: <defaults>
</compile_context>

<pallas_src>
import functools
import math

import jax
import jax.numpy as jnp
from jax import lax
from jax.experimental import pallas as pl
from jax.experimental.pallas import tpu as pltpu


# ---------------------------------------------------------------------------
# Kernels
# ---------------------------------------------------------------------------
def _degree_kernel(a_ref, d_ref, acc_ref):
    """d = rsqrt(rowsum(A) + 1)  (the +1 is the diagonal of the implicit +I)."""
    k = pl.program_id(1)

    @pl.when(k == 0)
    def _():
        acc_ref[...] = jnp.zeros_like(acc_ref)

    acc_ref[...] += jnp.sum(a_ref[...], axis=1, keepdims=True)

    @pl.when(k == pl.num_programs(1) - 1)
    def _():
        # NOTE: assumes non-negative adjacency so rowsum + 1 >= 1 (no NaN/Inf),
        # same implicit assumption as the PyTorch module.
        d_ref[...] = lax.rsqrt(acc_ref[...] + 1.0)


def _support_kernel(x_ref, w_ref, d_ref, z_ref):
    """Z = d ⊙ (X @ W) — bf16 MXU operands, f32 accumulation."""
    xb = x_ref[...].astype(jnp.bfloat16)
    wb = w_ref[...].astype(jnp.bfloat16)
    s = jnp.dot(xb, wb, preferred_element_type=jnp.float32)
    z_ref[...] = d_ref[...] * s


def _aggregate_kernel(a_ref, zk_ref, zi_ref, d_ref, out_ref, acc_ref,
                      *, negative_slope):
    """out[i] = d[i] ⊙ (sum_k A[k, i] * Z[k] + Z[i]),  optional LeakyReLU."""
    k = pl.program_id(1)

    @pl.when(k == 0)
    def _():
        acc_ref[...] = zi_ref[...]            # the "+I" term (already d-prescaled)

    a_bf = a_ref[...].astype(jnp.bfloat16)    # (tk, ti) block of A
    z_bf = zk_ref[...].astype(jnp.bfloat16)   # (tk, H)  block of Z
    # Contract over A's first axis (== A.T @ Z) — no transpose materialized.
    acc_ref[...] += lax.dot_general(
        a_bf, z_bf, (((0,), (0,)), ((), ())),
        preferred_element_type=jnp.float32)

    @pl.when(k == pl.num_programs(1) - 1)
    def _():
        y = d_ref[...] * acc_ref[...]         # post-scale rows by d
        if negative_slope is not None:
            y = jnp.where(y >= 0, y, negative_slope * y)
        out_ref[...] = y.astype(out_ref.dtype)


# ---------------------------------------------------------------------------
# pallas_call wrappers
# ---------------------------------------------------------------------------
def _degree(a, tile):
    n = a.shape[0]
    return pl.pallas_call(
        _degree_kernel,
        out_shape=jax.ShapeDtypeStruct((n, 1), jnp.float32),
        grid=(n // tile, n // tile),
        in_specs=[pl.BlockSpec((tile, tile), lambda i, k: (i, k))],
        out_specs=pl.BlockSpec((tile, 1), lambda i, k: (i, 0)),
        scratch_shapes=[pltpu.VMEM((tile, 1), jnp.float32)],
        compiler_params=pltpu.CompilerParams(
            dimension_semantics=("parallel", "arbitrary")),
    )(a)


def _support(x, w, d, tile):
    n, c_in = x.shape
    h = w.shape[1]
    return pl.pallas_call(
        _support_kernel,
        out_shape=jax.ShapeDtypeStruct((n, h), jnp.float32),
        grid=(n // tile,),
        in_specs=[pl.BlockSpec((tile, c_in), lambda i: (i, 0)),
                  pl.BlockSpec((c_in, h), lambda i: (0, 0)),
                  pl.BlockSpec((tile, 1), lambda i: (i, 0))],
        out_specs=pl.BlockSpec((tile, h), lambda i: (i, 0)),
        compiler_params=pltpu.CompilerParams(
            dimension_semantics=("parallel",)),
    )(x, w, d)


def _aggregate(a, z, d, tile, negative_slope):
    n = a.shape[0]
    h = z.shape[1]
    kernel = functools.partial(_aggregate_kernel, negative_slope=negative_slope)
    return pl.pallas_call(
        kernel,
        out_shape=jax.ShapeDtypeStruct((n, h), jnp.float32),
        grid=(n // tile, n // tile),
        in_specs=[pl.BlockSpec((tile, tile), lambda i, k: (k, i)),   # A[k-blk, i-blk]
                  pl.BlockSpec((tile, h), lambda i, k: (k, 0)),      # Z[k-blk]
                  pl.BlockSpec((tile, h), lambda i, k: (i, 0)),      # Z[i-blk]
                  pl.BlockSpec((tile, 1), lambda i, k: (i, 0))],     # d[i-blk]
        out_specs=pl.BlockSpec((tile, h), lambda i, k: (i, 0)),
        scratch_shapes=[pltpu.VMEM((tile, h), jnp.float32)],
        compiler_params=pltpu.CompilerParams(
            dimension_semantics=("parallel", "arbitrary")),
    )(a, z, z, d)


def gcn_forward(adj_matrix, inp, w1, w2, negative_slope=0.2):
    """Forward pass of the PyTorch GCN module. Returns (C_out, N) == x.transpose(0,1)."""
    n = adj_matrix.shape[0]

    # Row/reduction tile; pad N so the grid divides evenly. Zero padding is inert:
    # padded rows/cols of A are 0 and padded rows of inp are 0, so padded outputs
    # are 0 and real rows are unaffected.
    tile = 256 if n > 128 else 128
    n_pad = -(-n // tile) * tile
    a_p = jnp.pad(adj_matrix.astype(jnp.float32), ((0, n_pad - n), (0, n_pad - n)))
    x_p = jnp.pad(inp.astype(jnp.float32), ((0, n_pad - n), (0, 0)))

    d = _degree(a_p, tile)                                  # (Np, 1)
    z1 = _support(x_p, w1, d, tile)                         # d ⊙ (inp @ W1)
    x1 = _aggregate(a_p, z1, d, tile, negative_slope)       # gc1 + LeakyReLU(0.2)
    z2 = _support(x1, w2, d, tile)                          # d ⊙ (x1 @ W2)
    x2 = _aggregate(a_p, z2, d, tile, None)                 # gc2

    # Final transpose + un-padding in the wrapper (kernels store lane-dense blocks).
    return x2[:n, :].T


def _init_gc_weight(key, in_features, out_features):
    # GraphConvolution.reset_parameters: U(-stdv, stdv), stdv = 1/sqrt(out_features)
    stdv = 1.0 / math.sqrt(out_features)
    return jax.random.uniform(key, (in_features, out_features),
                              dtype=jnp.float32, minval=-stdv, maxval=stdv)


if __name__ == "__main__":
    # Small demo shapes consistent with the module (gc1: in -> 512, gc2: 512 -> out).
    # NOTE: at this size the kernel is fixed-overhead dominated; for real speedups
    # batch multiple graphs / use MXU-native N (>= 128 rows per tile).
    N = 8
    IN_CHANNEL = 16
    OUT_CHANNEL = 16
    HIDDEN = 512

    key = jax.random.PRNGKey(0)
    k_adj, k_inp, k_w1, k_w2 = jax.random.split(key, 4)

    # Non-negative adjacency so D^-0.5 is finite (same assumption as the module).
    adj_matrix = jax.random.uniform(k_adj, (N, N), dtype=jnp.float32)
    inp = jax.random.normal(k_inp, (N, IN_CHANNEL), dtype=jnp.float32)
    w1 = _init_gc_weight(k_w1, IN_CHANNEL, HIDDEN)
    w2 = _init_gc_weight(k_w2, HIDDEN, OUT_CHANNEL)

    fwd = jax.jit(gcn_forward)
    out = jax.block_until_ready(fwd(adj_matrix, inp, w1, w2))
    assert out.shape == (OUT_CHANNEL, N)

    # --- reference 1: same algebra / same bf16-operand MXU precision as the kernel ---
    d_ref = lax.rsqrt(jnp.sum(adj_matrix, axis=1) + 1.0)

    def _mm(a, b, dn=(((1,), (0,)), ((), ()))):
        return lax.dot_general(a.astype(jnp.bfloat16), b.astype(jnp.bfloat16), dn,
                               preferred_element_type=jnp.float32)

    def _layer(x, w, slope):
        z = d_ref[:, None] * _mm(x, w)
        y = d_ref[:, None] * (_mm(adj_matrix, z, (((0,), (0,)), ((), ()))) + z)
        return jnp.where(y >= 0, y, slope * y) if slope is not None else y

    ref_bf16 = _layer(_layer(inp, w1, 0.2), w2, None).T
    assert jnp.allclose(out, ref_bf16, atol=1e-3, rtol=1e-3), \
        float(jnp.max(jnp.abs(out - ref_bf16)))

    # --- reference 2: plain f32 reference of the PyTorch module (loose tolerance
    # because the kernel uses bf16 MXU operands with f32 accumulation) ---
    A = adj_matrix + jnp.eye(N, dtype=jnp.float32)
    dd = jnp.sum(A, axis=1) ** -0.5
    adj = (A @ jnp.diag(dd)).T @ jnp.diag(dd)
    xr = adj @ (inp @ w1)
    xr = jnp.where(xr >= 0, xr, 0.2 * xr)
    ref_f32 = (adj @ (xr @ w2)).T
    assert jnp.allclose(out, ref_f32, atol=5e-2, rtol=5e-2), \
        float(jnp.max(jnp.abs(out - ref_f32)))

    print("KERNEL_OK")
</pallas_src>

<mosaic_0001>
module attributes {stable_mosaic.version = 11 : i64} {
  func.func @_degree_kernel(%arg0: i32, %arg1: i32, %arg2: memref<128x128xf32, #tpu.memory_space<vmem>>, %arg3: memref<128x1xf32, #tpu.memory_space<vmem>>, %arg4: memref<128x1xf32, #tpu.memory_space<vmem>>) attributes {dimension_semantics = [#tpu.dimension_semantics<parallel>, #tpu.dimension_semantics<arbitrary>], iteration_bounds = array<i64: 1, 1>, scalar_prefetch = 0 : i64, scratch_operands = 1 : i64, tpu.core_type = #tpu.core_type<tc>, window_params = [{transform_indices = @transform_0, window_bounds = array<i64: 128, 128>}, {transform_indices = @transform_1, window_bounds = array<i64: 128, 1>}]} {
    %c0_i32 = arith.constant 0 : i32
    %0 = arith.cmpi eq, %arg1, %c0_i32 : i32
    %1 = arith.extui %0 : i1 to i32
    %c0_i32_0 = arith.constant 0 : i32
    %2 = arith.cmpi ne, %1, %c0_i32_0 : i32
    scf.if %2 {
      %cst_8 = arith.constant 0.000000e+00 : f32
      %12 = vector.broadcast %cst_8 : f32 to vector<128x1xf32>
      %c0_9 = arith.constant 0 : index
      %c0_10 = arith.constant 0 : index
      %13 = vector.load %arg4[%c0_9, %c0_10] : memref<128x1xf32, #tpu.memory_space<vmem>>, vector<128x1xf32>
      tpu.vector_store %arg4[%c0_9, %c0_10], %12 {strides = array<i32>} : memref<128x1xf32, #tpu.memory_space<vmem>>, vector<128x1xf32>,
    } else {
    }
    %c0 = arith.constant 0 : index
    %c0_1 = arith.constant 0 : index
    %3 = vector.load %arg4[%c0, %c0_1] : memref<128x1xf32, #tpu.memory_space<vmem>>, vector<128x1xf32>
    %c0_2 = arith.constant 0 : index
    %c0_3 = arith.constant 0 : index
    %4 = vector.load %arg2[%c0_2, %c0_3] : memref<128x128xf32, #tpu.memory_space<vmem>>, vector<128x128xf32>
    %cst = arith.constant dense<0.000000e+00> : vector<128xf32>
    %5 = vector.multi_reduction <add>, %4, %cst [1] : vector<128x128xf32> to vector<128xf32>
    %6 = vector.shape_cast %5 : vector<128xf32> to vector<128x1xf32>
    %7 = arith.addf %3, %6 : vector<128x1xf32>
    %c0_4 = arith.constant 0 : index
    %c0_5 = arith.constant 0 : index
    %8 = vector.load %arg4[%c0_4, %c0_5] : memref<128x1xf32, #tpu.memory_space<vmem>>, vector<128x1xf32>
    tpu.vector_store %arg4[%c0_4, %c0_5], %7 {strides = array<i32>} : memref<128x1xf32, #tpu.memory_space<vmem>>, vector<128x1xf32>,
    %c0_i32_6 = arith.constant 0 : i32
    %9 = arith.cmpi eq, %arg1, %c0_i32_6 : i32
    %10 = arith.extui %9 : i1 to i32
    %c0_i32_7 = arith.constant 0 : i32
    %11 = arith.cmpi ne, %10, %c0_i32_7 : i32
    scf.if %11 {
      %c0_8 = arith.constant 0 : index
      %c0_9 = arith.constant 0 : index
      %12 = vector.load %arg4[%c0_8, %c0_9] : memref<128x1xf32, #tpu.memory_space<vmem>>, vector<128x1xf32>
      %cst_10 = arith.constant 1.000000e+00 : f32
      %13 = vector.broadcast %cst_10 : f32 to vector<128x1xf32>
      %14 = arith.addf %12, %13 : vector<128x1xf32>
      %15 = math.rsqrt %14 : vector<128x1xf32>
      %c0_11 = arith.constant 0 : index
      %c0_12 = arith.constant 0 : index
      %16 = vector.load %arg3[%c0_11, %c0_12] : memref<128x1xf32, #tpu.memory_space<vmem>>, vector<128x1xf32>
      tpu.vector_store %arg3[%c0_11, %c0_12], %15 {strides = array<i32>} : memref<128x1xf32, #tpu.memory_space<vmem>>, vector<128x1xf32>,
    } else {
    }
    return
  }
  func.func @transform_0(%arg0: i32, %arg1: i32) -> (i32, i32) {
    %c0_i32 = arith.constant 0 : i32
    return %arg0, %arg1 : i32, i32
  }
  func.func @transform_1(%arg0: i32, %arg1: i32) -> (i32, i32) {
    %c0_i32 = arith.constant 0 : i32
    %c0_i32_0 = arith.constant 0 : i32
    return %arg0, %c0_i32 : i32, i32
  }
}

module attributes {stable_mosaic.version = 11 : i64} {
  func.func @_support_kernel(%arg0: i32, %arg1: memref<128x16xf32, #tpu.memory_space<vmem>>, %arg2: memref<16x512xf32, #tpu.memory_space<vmem>>, %arg3: memref<128x1xf32, #tpu.memory_space<vmem>>, %arg4: memref<128x512xf32, #tpu.memory_space<vmem>>) attributes {dimension_semantics = [#tpu.dimension_semantics<parallel>], iteration_bounds = array<i64: 1>, scalar_prefetch = 0 : i64, scratch_operands = 0 : i64, tpu.core_type = #tpu.core_type<tc>, window_params = [{transform_indices = @transform_0, window_bounds = array<i64: 128, 16>}, {pipeline_mode = #tpu.pipeline_mode<synchronous>, transform_indices = @transform_1, window_bounds = array<i64: 16, 512>}, {transform_indices = @transform_2, window_bounds = array<i64: 128, 1>}, {transform_indices = @transform_3, window_bounds = array<i64: 128, 512>}]} {
    %c0 = arith.constant 0 : index
    %c0_0 = arith.constant 0 : index
    %0 = vector.load %arg1[%c0, %c0_0] : memref<128x16xf32, #tpu.memory_space<vmem>>, vector<128x16xf32>
    %1 = arith.truncf %0 : vector<128x16xf32> to vector<128x16xbf16>
    %c0_1 = arith.constant 0 : index
    %c0_2 = arith.constant 0 : index
    %2 = vector.load %arg2[%c0_1, %c0_2] : memref<16x512xf32, #tpu.memory_space<vmem>>, vector<16x512xf32>
    %3 = arith.truncf %2 : vector<16x512xf32> to vector<16x512xbf16>
    %cst = arith.constant dense<0.000000e+00> : vector<128x512xf32>
    %4 = tpu.matmul %1, %3, %cst {dimension_numbers = #tpu.dot_dimension_numbers<[1], [0], [0], [1], [0, 0, 1, 1], [], []>} : vector<128x16xbf16>, vector<16x512xbf16>, vector<128x512xf32> -> vector<128x512xf32>
    %c0_3 = arith.constant 0 : index
    %c0_4 = arith.constant 0 : index
    %5 = vector.load %arg3[%c0_3, %c0_4] : memref<128x1xf32, #tpu.memory_space<vmem>>, vector<128x1xf32>
    %6 = vector.broadcast %5 : vector<128x1xf32> to vector<128x512xf32>
    %7 = arith.mulf %6, %4 : vector<128x512xf32>
    %c0_5 = arith.constant 0 : index
    %c0_6 = arith.constant 0 : index
    %8 = vector.load %arg4[%c0_5, %c0_6] : memref<128x512xf32, #tpu.memory_space<vmem>>, vector<128x512xf32>
    tpu.vector_store %arg4[%c0_5, %c0_6], %7 {strides = array<i32>} : memref<128x512xf32, #tpu.memory_space<vmem>>, vector<128x512xf32>,
    return
  }
  func.func @transform_0(%arg0: i32) -> (i32, i32) {
    %c0_i32 = arith.constant 0 : i32
    %c0_i32_0 = arith.constant 0 : i32
    return %arg0, %c0_i32 : i32, i32
  }
  func.func @transform_1(%arg0: i32) -> (i32, i32) {
    %c0_i32 = arith.constant 0 : i32
    %c0_i32_0 = arith.constant 0 : i32
    %c0_i32_1 = arith.constant 0 : i32
    return %c0_i32, %c0_i32_0 : i32, i32
  }
  func.func @transform_2(%arg0: i32) -> (i32, i32) {
    %c0_i32 = arith.constant 0 : i32
    %c0_i32_0 = arith.constant 0 : i32
    return %arg0, %c0_i32 : i32, i32
  }
  func.func @transform_3(%arg0: i32) -> (i32, i32) {
    %c0_i32 = arith.constant 0 : i32
    %c0_i32_0 = arith.constant 0 : i32
    return %arg0, %c0_i32 : i32, i32
  }
}

module attributes {stable_mosaic.version = 11 : i64} {
  func.func @_aggregate_kernel(%arg0: i32, %arg1: i32, %arg2: memref<128x128xf32, #tpu.memory_space<vmem>>, %arg3: memref<128x512xf32, #tpu.memory_space<vmem>>, %arg4: memref<128x512xf32, #tpu.memory_space<vmem>>, %arg5: memref<128x1xf32, #tpu.memory_space<vmem>>, %arg6: memref<128x512xf32, #tpu.memory_space<vmem>>, %arg7: memref<128x512xf32, #tpu.memory_space<vmem>>) attributes {dimension_semantics = [#tpu.dimension_semantics<parallel>, #tpu.dimension_semantics<arbitrary>], iteration_bounds = array<i64: 1, 1>, scalar_prefetch = 0 : i64, scratch_operands = 1 : i64, tpu.core_type = #tpu.core_type<tc>, window_params = [{transform_indices = @transform_0, window_bounds = array<i64: 128, 128>}, {transform_indices = @transform_1, window_bounds = array<i64: 128, 512>}, {transform_indices = @transform_2, window_bounds = array<i64: 128, 512>}, {transform_indices = @transform_3, window_bounds = array<i64: 128, 1>}, {transform_indices = @transform_4, window_bounds = array<i64: 128, 512>}]} {
    %c0_i32 = arith.constant 0 : i32
    %0 = arith.cmpi eq, %arg1, %c0_i32 : i32
    %1 = arith.extui %0 : i1 to i32
    %c0_i32_0 = arith.constant 0 : i32
    %2 = arith.cmpi ne, %1, %c0_i32_0 : i32
    scf.if %2 {
      %c0_10 = arith.constant 0 : index
      %c0_11 = arith.constant 0 : index
      %14 = vector.load %arg4[%c0_10, %c0_11] : memref<128x512xf32, #tpu.memory_space<vmem>>, vector<128x512xf32>
      %c0_12 = arith.constant 0 : index
      %c0_13 = arith.constant 0 : index
      %15 = vector.load %arg7[%c0_12, %c0_13] : memref<128x512xf32, #tpu.memory_space<vmem>>, vector<128x512xf32>
      tpu.vector_store %arg7[%c0_12, %c0_13], %14 {strides = array<i32>} : memref<128x512xf32, #tpu.memory_space<vmem>>, vector<128x512xf32>,
    } else {
    }
    %c0 = arith.constant 0 : index
    %c0_1 = arith.constant 0 : index
    %3 = vector.load %arg2[%c0, %c0_1] : memref<128x128xf32, #tpu.memory_space<vmem>>, vector<128x128xf32>
    %4 = arith.truncf %3 : vector<128x128xf32> to vector<128x128xbf16>
    %c0_2 = arith.constant 0 : index
    %c0_3 = arith.constant 0 : index
    %5 = vector.load %arg3[%c0_2, %c0_3] : memref<128x512xf32, #tpu.memory_space<vmem>>, vector<128x512xf32>
    %6 = arith.truncf %5 : vector<128x512xf32> to vector<128x512xbf16>
    %c0_4 = arith.constant 0 : index
    %c0_5 = arith.constant 0 : index
    %7 = vector.load %arg7[%c0_4, %c0_5] : memref<128x512xf32, #tpu.memory_space<vmem>>, vector<128x512xf32>
    %cst = arith.constant dense<0.000000e+00> : vector<128x512xf32>
    %8 = tpu.matmul %4, %6, %cst {dimension_numbers = #tpu.dot_dimension_numbers<[0], [0], [1], [1], [0, 1, 1, 1], [], []>} : vector<128x128xbf16>, vector<128x512xbf16>, vector<128x512xf32> -> vector<128x512xf32>
    %9 = arith.addf %7, %8 : vector<128x512xf32>
    %c0_6 = arith.constant 0 : index
    %c0_7 = arith.constant 0 : index
    %10 = vector.load %arg7[%c0_6, %c0_7] : memref<128x512xf32, #tpu.memory_space<vmem>>, vector<128x512xf32>
    tpu.vector_store %arg7[%c0_6, %c0_7], %9 {strides = array<i32>} : memref<128x512xf32, #tpu.memory_space<vmem>>, vector<128x512xf32>,
    %c0_i32_8 = arith.constant 0 : i32
    %11 = arith.cmpi eq, %arg1, %c0_i32_8 : i32
    %12 = arith.extui %11 : i1 to i32
    %c0_i32_9 = arith.constant 0 : i32
    %13 = arith.cmpi ne, %12, %c0_i32_9 : i32
    scf.if %13 {
      %c0_10 = arith.constant 0 : index
      %c0_11 = arith.constant 0 : index
      %14 = vector.load %arg5[%c0_10, %c0_11] : memref<128x1xf32, #tpu.memory_space<vmem>>, vector<128x1xf32>
      %c0_12 = arith.constant 0 : index
      %c0_13 = arith.constant 0 : index
      %15 = vector.load %arg7[%c0_12, %c0_13] : memref<128x512xf32, #tpu.memory_space<vmem>>, vector<128x512xf32>
      %16 = vector.broadcast %14 : vector<128x1xf32> to vector<128x512xf32>
      %17 = arith.mulf %16, %15 : vector<128x512xf32>
      %cst_14 = arith.constant 0.000000e+00 : f32
      %18 = vector.broadcast %cst_14 : f32 to vector<128x512xf32>
      %19 = arith.cmpf oge, %17, %18 : vector<128x512xf32>
      %cst_15 = arith.constant 2.000000e-01 : f32
      %20 = vector.broadcast %cst_15 : f32 to vector<128x512xf32>
      %21 = arith.mulf %20, %17 : vector<128x512xf32>
      %22 = arith.select %19, %17, %21 : vector<128x512xi1>, vector<128x512xf32>
      %c0_16 = arith.constant 0 : index
      %c0_17 = arith.constant 0 : index
      %23 = vector.load %arg6[%c0_16, %c0_17] : memref<128x512xf32, #tpu.memory_space<vmem>>, vector<128x512xf32>
      tpu.vector_store %arg6[%c0_16, %c0_17], %22 {strides = array<i32>} : memref<128x512xf32, #tpu.memory_space<vmem>>, vector<128x512xf32>,
    } else {
    }
    return
  }
  func.func @transform_0(%arg0: i32, %arg1: i32) -> (i32, i32) {
    %c0_i32 = arith.constant 0 : i32
    return %arg1, %arg0 : i32, i32
  }
  func.func @transform_1(%arg0: i32, %arg1: i32) -> (i32, i32) {
    %c0_i32 = arith.constant 0 : i32
    %c0_i32_0 = arith.constant 0 : i32
    return %arg1, %c0_i32 : i32, i32
  }
  func.func @transform_2(%arg0: i32, %arg1: i32) -> (i32, i32) {
    %c0_i32 = arith.constant 0 : i32
    %c0_i32_0 = arith.constant 0 : i32
    return %arg0, %c0_i32 : i32, i32
  }
  func.func @transform_3(%arg0: i32, %arg1: i32) -> (i32, i32) {
    %c0_i32 = arith.constant 0 : i32
    %c0_i32_0 = arith.constant 0 : i32
    return %arg0, %c0_i32 : i32, i32
  }
  func.func @transform_4(%arg0: i32, %arg1: i32) -> (i32, i32) {
    %c0_i32 = arith.constant 0 : i32
    %c0_i32_0 = arith.constant 0 : i32
    return %arg0, %c0_i32 : i32, i32
  }
}

module attributes {stable_mosaic.version = 11 : i64} {
  func.func @_support_kernel(%arg0: i32, %arg1: memref<128x512xf32, #tpu.memory_space<vmem>>, %arg2: memref<512x16xf32, #tpu.memory_space<vmem>>, %arg3: memref<128x1xf32, #tpu.memory_space<vmem>>, %arg4: memref<128x16xf32, #tpu.memory_space<vmem>>) attributes {dimension_semantics = [#tpu.dimension_semantics<parallel>], iteration_bounds = array<i64: 1>, scalar_prefetch = 0 : i64, scratch_operands = 0 : i64, tpu.core_type = #tpu.core_type<tc>, window_params = [{transform_indices = @transform_0, window_bounds = array<i64: 128, 512>}, {pipeline_mode = #tpu.pipeline_mode<synchronous>, transform_indices = @transform_1, window_bounds = array<i64: 512, 16>}, {transform_indices = @transform_2, window_bounds = array<i64: 128, 1>}, {transform_indices = @transform_3, window_bounds = array<i64: 128, 16>}]} {
    %c0 = arith.constant 0 : index
    %c0_0 = arith.constant 0 : index
    %0 = vector.load %arg1[%c0, %c0_0] : memref<128x512xf32, #tpu.memory_space<vmem>>, vector<128x512xf32>
    %1 = arith.truncf %0 : vector<128x512xf32> to vector<128x512xbf16>
    %c0_1 = arith.constant 0 : index
    %c0_2 = arith.constant 0 : index
    %2 = vector.load %arg2[%c0_1, %c0_2] : memref<512x16xf32, #tpu.memory_space<vmem>>, vector<512x16xf32>
    %3 = arith.truncf %2 : vector<512x16xf32> to vector<512x16xbf16>
    %cst = arith.constant dense<0.000000e+00> : vector<128x16xf32>
    %4 = tpu.matmul %1, %3, %cst {dimension_numbers = #tpu.dot_dimension_numbers<[1], [0], [0], [1], [0, 0, 1, 1], [], []>} : vector<128x512xbf16>, vector<512x16xbf16>, vector<128x16xf32> -> vector<128x16xf32>
    %c0_3 = arith.constant 0 : index
    %c0_4 = arith.constant 0 : index
    %5 = vector.load %arg3[%c0_3, %c0_4] : memref<128x1xf32, #tpu.memory_space<vmem>>, vector<128x1xf32>
    %6 = vector.broadcast %5 : vector<128x1xf32> to vector<128x16xf32>
    %7 = arith.mulf %6, %4 : vector<128x16xf32>
    %c0_5 = arith.constant 0 : index
    %c0_6 = arith.constant 0 : index
    %8 = vector.load %arg4[%c0_5, %c0_6] : memref<128x16xf32, #tpu.memory_space<vmem>>, vector<128x16xf32>
    tpu.vector_store %arg4[%c0_5, %c0_6], %7 {strides = array<i32>} : memref<128x16xf32, #tpu.memory_space<vmem>>, vector<128x16xf32>,
    return
  }
  func.func @transform_0(%arg0: i32) -> (i32, i32) {
    %c0_i32 = arith.constant 0 : i32
    %c0_i32_0 = arith.constant 0 : i32
    return %arg0, %c0_i32 : i32, i32
  }
  func.func @transform_1(%arg0: i32) -> (i32, i32) {
    %c0_i32 = arith.constant 0 : i32
    %c0_i32_0 = arith.constant 0 : i32
    %c0_i32_1 = arith.constant 0 : i32
    return %c0_i32, %c0_i32_0 : i32, i32
  }
  func.func @transform_2(%arg0: i32) -> (i32, i32) {
    %c0_i32 = arith.constant 0 : i32
    %c0_i32_0 = arith.constant 0 : i32
    return %arg0, %c0_i32 : i32, i32
  }
  func.func @transform_3(%arg0: i32) -> (i32, i32) {
    %c0_i32 = arith.constant 0 : i32
    %c0_i32_0 = arith.constant 0 : i32
    return %arg0, %c0_i32 : i32, i32
  }
}

module attributes {stable_mosaic.version = 11 : i64} {
  func.func @_aggregate_kernel(%arg0: i32, %arg1: i32, %arg2: memref<128x128xf32, #tpu.memory_space<vmem>>, %arg3: memref<128x16xf32, #tpu.memory_space<vmem>>, %arg4: memref<128x16xf32, #tpu.memory_space<vmem>>, %arg5: memref<128x1xf32, #tpu.memory_space<vmem>>, %arg6: memref<128x16xf32, #tpu.memory_space<vmem>>, %arg7: memref<128x16xf32, #tpu.memory_space<vmem>>) attributes {dimension_semantics = [#tpu.dimension_semantics<parallel>, #tpu.dimension_semantics<arbitrary>], iteration_bounds = array<i64: 1, 1>, scalar_prefetch = 0 : i64, scratch_operands = 1 : i64, tpu.core_type = #tpu.core_type<tc>, window_params = [{transform_indices = @transform_0, window_bounds = array<i64: 128, 128>}, {transform_indices = @transform_1, window_bounds = array<i64: 128, 16>}, {transform_indices = @transform_2, window_bounds = array<i64: 128, 16>}, {transform_indices = @transform_3, window_bounds = array<i64: 128, 1>}, {transform_indices = @transform_4, window_bounds = array<i64: 128, 16>}]} {
    %c0_i32 = arith.constant 0 : i32
    %0 = arith.cmpi eq, %arg1, %c0_i32 : i32
    %1 = arith.extui %0 : i1 to i32
    %c0_i32_0 = arith.constant 0 : i32
    %2 = arith.cmpi ne, %1, %c0_i32_0 : i32
    scf.if %2 {
      %c0_10 = arith.constant 0 : index
      %c0_11 = arith.constant 0 : index
      %14 = vector.load %arg4[%c0_10, %c0_11] : memref<128x16xf32, #tpu.memory_space<vmem>>, vector<128x16xf32>
      %c0_12 = arith.constant 0 : index
      %c0_13 = arith.constant 0 : index
      %15 = vector.load %arg7[%c0_12, %c0_13] : memref<128x16xf32, #tpu.memory_space<vmem>>, vector<128x16xf32>
      tpu.vector_store %arg7[%c0_12, %c0_13], %14 {strides = array<i32>} : memref<128x16xf32, #tpu.memory_space<vmem>>, vector<128x16xf32>,
    } else {
    }
    %c0 = arith.constant 0 : index
    %c0_1 = arith.constant 0 : index
    %3 = vector.load %arg2[%c0, %c0_1] : memref<128x128xf32, #tpu.memory_space<vmem>>, vector<128x128xf32>
    %4 = arith.truncf %3 : vector<128x128xf32> to vector<128x128xbf16>
    %c0_2 = arith.constant 0 : index
    %c0_3 = arith.constant 0 : index
    %5 = vector.load %arg3[%c0_2, %c0_3] : memref<128x16xf32, #tpu.memory_space<vmem>>, vector<128x16xf32>
    %6 = arith.truncf %5 : vector<128x16xf32> to vector<128x16xbf16>
    %c0_4 = arith.constant 0 : index
    %c0_5 = arith.constant 0 : index
    %7 = vector.load %arg7[%c0_4, %c0_5] : memref<128x16xf32, #tpu.memory_space<vmem>>, vector<128x16xf32>
    %cst = arith.constant dense<0.000000e+00> : vector<128x16xf32>
    %8 = tpu.matmul %4, %6, %cst {dimension_numbers = #tpu.dot_dimension_numbers<[0], [0], [1], [1], [0, 1, 1, 1], [], []>} : vector<128x128xbf16>, vector<128x16xbf16>, vector<128x16xf32> -> vector<128x16xf32>
    %9 = arith.addf %7, %8 : vector<128x16xf32>
    %c0_6 = arith.constant 0 : index
    %c0_7 = arith.constant 0 : index
    %10 = vector.load %arg7[%c0_6, %c0_7] : memref<128x16xf32, #tpu.memory_space<vmem>>, vector<128x16xf32>
    tpu.vector_store %arg7[%c0_6, %c0_7], %9 {strides = array<i32>} : memref<128x16xf32, #tpu.memory_space<vmem>>, vector<128x16xf32>,
    %c0_i32_8 = arith.constant 0 : i32
    %11 = arith.cmpi eq, %arg1, %c0_i32_8 : i32
    %12 = arith.extui %11 : i1 to i32
    %c0_i32_9 = arith.constant 0 : i32
    %13 = arith.cmpi ne, %12, %c0_i32_9 : i32
    scf.if %13 {
      %c0_10 = arith.constant 0 : index
      %c0_11 = arith.constant 0 : index
      %14 = vector.load %arg5[%c0_10, %c0_11] : memref<128x1xf32, #tpu.memory_space<vmem>>, vector<128x1xf32>
      %c0_12 = arith.constant 0 : index
      %c0_13 = arith.constant 0 : index
      %15 = vector.load %arg7[%c0_12, %c0_13] : memref<128x16xf32, #tpu.memory_space<vmem>>, vector<128x16xf32>
      %16 = vector.broadcast %14 : vector<128x1xf32> to vector<128x16xf32>
      %17 = arith.mulf %16, %15 : vector<128x16xf32>
      %c0_14 = arith.constant 0 : index
      %c0_15 = arith.constant 0 : index
      %18 = vector.load %arg6[%c0_14, %c0_15] : memref<128x16xf32, #tpu.memory_space<vmem>>, vector<128x16xf32>
      tpu.vector_store %arg6[%c0_14, %c0_15], %17 {strides = array<i32>} : memref<128x16xf32, #tpu.memory_space<vmem>>, vector<128x16xf32>,
    } else {
    }
    return
  }
  func.func @transform_0(%arg0: i32, %arg1: i32) -> (i32, i32) {
    %c0_i32 = arith.constant 0 : i32
    return %arg1, %arg0 : i32, i32
  }
  func.func @transform_1(%arg0: i32, %arg1: i32) -> (i32, i32) {
    %c0_i32 = arith.constant 0 : i32
    %c0_i32_0 = arith.constant 0 : i32
    return %arg1, %c0_i32 : i32, i32
  }
  func.func @transform_2(%arg0: i32, %arg1: i32) -> (i32, i32) {
    %c0_i32 = arith.constant 0 : i32
    %c0_i32_0 = arith.constant 0 : i32
    return %arg0, %c0_i32 : i32, i32
  }
  func.func @transform_3(%arg0: i32, %arg1: i32) -> (i32, i32) {
    %c0_i32 = arith.constant 0 : i32
    %c0_i32_0 = arith.constant 0 : i32
    return %arg0, %c0_i32 : i32, i32
  }
  func.func @transform_4(%arg0: i32, %arg1: i32) -> (i32, i32) {
    %c0_i32 = arith.constant 0 : i32
    %c0_i32_0 = arith.constant 0 : i32
    return %arg0, %c0_i32 : i32, i32
  }
}

</mosaic_0001>

<llo_original>
// kernel: gcn_forward.5
$region0: #{gcn_forward.5}
  #allocation0 [shape = 'u32[]', space=smem, size = 0x4, offset = 0x4, fixed_abs, tag = 'smem constant byte address 0x4 - core index']
  #allocation1 [shape = 'u32[144,128]{1,0:T(1,128)}', space=vmem, size = 0x12000, scoped, tag = 'internal scratch']
  #allocation2 [shape = 'f32[128,1]{1,0:T(8,128)}', space=vmem, size = 0x10000, scoped, tag = 'scratch operand']
  %s0 = inlined_call_operand.vmem [shape: f32[128,128], index: 0, kind: input, shape index: {}]
  %s1 = inlined_call_operand.vmem [shape: f32[128,1], index: 1, kind: output, shape index: {}]
  %s2 = sld [smem:[#allocation0]]
  $region22: #{gcn_forward.5} parent=0
    _
  %s4 = ssub.s32 1, %s2
  %s5 = scalar_select 0, %s4, %s2
  // Predicated region
  $region2: #{gcn_forward.5} parent=0 // pred_check
    _
  $region3: #{gcn_forward.5} parent=0 // pred_check_branch
    %7 = sbr.rel (0) target = $region5
  $region4: #{gcn_forward.5} parent=0 // pred_region
    _
  $region5: #{gcn_forward.5} parent=0 // pred_fallthru
    _
  %p8 = scmp.eq.s32.totalorder 0, 0
  // Predicated region
  $region6: #{gcn_forward.5} parent=0 // pred_check
    %p9 = pneg %p8
  $region7: #{gcn_forward.5} parent=0 // pred_check_branch
    %11 = sbr.rel (%p9) target = $region9
  $region8: #{gcn_forward.5} parent=0 // pred_region
    %vm12 = vcmask 7168
    %13 = vst.msk [vmem:[#allocation2] sm:$0xff] %vm12, 0.0
    %14 = vst.msk [vmem:[#allocation2 + $0x8] sm:$0xff] %vm12, 0.0
    %15 = vst.msk [vmem:[#allocation2 + $0x10] sm:$0xff] %vm12, 0.0
    %16 = vst.msk [vmem:[#allocation2 + $0x18] sm:$0xff] %vm12, 0.0
    %17 = vst.msk [vmem:[#allocation2 + $0x20] sm:$0xff] %vm12, 0.0
    %18 = vst.msk [vmem:[#allocation2 + $0x28] sm:$0xff] %vm12, 0.0
    %19 = vst.msk [vmem:[#allocation2 + $0x30] sm:$0xff] %vm12, 0.0
    %20 = vst.msk [vmem:[#allocation2 + $0x38] sm:$0xff] %vm12, 0.0
    %21 = vst.msk [vmem:[#allocation2 + $0x40] sm:$0xff] %vm12, 0.0
    %22 = vst.msk [vmem:[#allocation2 + $0x48] sm:$0xff] %vm12, 0.0
    %23 = vst.msk [vmem:[#allocation2 + $0x50] sm:$0xff] %vm12, 0.0
    %24 = vst.msk [vmem:[#allocation2 + $0x58] sm:$0xff] %vm12, 0.0
    %25 = vst.msk [vmem:[#allocation2 + $0x60] sm:$0xff] %vm12, 0.0
    %26 = vst.msk [vmem:[#allocation2 + $0x68] sm:$0xff] %vm12, 0.0
    %27 = vst.msk [vmem:[#allocation2 + $0x70] sm:$0xff] %vm12, 0.0
    %28 = vst.msk [vmem:[#allocation2 + $0x78] sm:$0xff] %vm12, 0.0
  $region9: #{gcn_forward.5} parent=0 // pred_fallthru
    _
  %v29 = vld [vmem:[#allocation2] sm:$0xff]
  %v30 = vld [vmem:[#allocation2 + $0x8] sm:$0xff]
  %v31 = vld [vmem:[#allocation2 + $0x10] sm:$0xff]
  %v32 = vld [vmem:[#allocation2 + $0x18] sm:$0xff]
  %v33 = vld [vmem:[#allocation2 + $0x20] sm:$0xff]
  %v34 = vld [vmem:[#allocation2 + $0x28] sm:$0xff]
  %v35 = vld [vmem:[#allocation2 + $0x30] sm:$0xff]
  %v36 = vld [vmem:[#allocation2 + $0x38] sm:$0xff]
  %v37 = vld [vmem:[#allocation2 + $0x40] sm:$0xff]
  %v38 = vld [vmem:[#allocation2 + $0x48] sm:$0xff]
  %v39 = vld [vmem:[#allocation2 + $0x50] sm:$0xff]
  %v40 = vld [vmem:[#allocation2 + $0x58] sm:$0xff]
  %v41 = vld [vmem:[#allocation2 + $0x60] sm:$0xff]
  %v42 = vld [vmem:[#allocation2 + $0x68] sm:$0xff]
  %v43 = vld [vmem:[#allocation2 + $0x70] sm:$0xff]
  %v44 = vld [vmem:[#allocation2 + $0x78] sm:$0xff]
  %v45 = vld [vmem:[%s0] sm:$0xff]
  %v46 = vld [vmem:[%s0 + $0x8] sm:$0xff]
  %v47 = vld [vmem:[%s0 + $0x10] sm:$0xff]
  %v48 = vld [vmem:[%s0 + $0x18] sm:$0xff]
  %v49 = vld [vmem:[%s0 + $0x20] sm:$0xff]
  %v50 = vld [vmem:[%s0 + $0x28] sm:$0xff]
  %v51 = vld [vmem:[%s0 + $0x30] sm:$0xff]
  %v52 = vld [vmem:[%s0 + $0x38] sm:$0xff]
  %v53 = vld [vmem:[%s0 + $0x40] sm:$0xff]
  %v54 = vld [vmem:[%s0 + $0x48] sm:$0xff]
  %v55 = vld [vmem:[%s0 + $0x50] sm:$0xff]
  %v56 = vld [vmem:[%s0 + $0x58] sm:$0xff]
  %v57 = vld [vmem:[%s0 + $0x60] sm:$0xff]
  %v58 = vld [vmem:[%s0 + $0x68] sm:$0xff]
  %v59 = vld [vmem:[%s0 + $0x70] sm:$0xff]
  %v60 = vld [vmem:[%s0 + $0x78] sm:$0xff]
  %61 = vadd.xlane.f32.xlu0 %v45
  %v62 = vpop.xlane.xlu0 %61
  %63 = vadd.xlane.f32.xlu0 %v46
  %v64 = vpop.xlane.xlu0 %63
  %65 = vadd.xlane.f32.xlu0 %v47
  %v66 = vpop.xlane.xlu0 %65
  %67 = vadd.xlane.f32.xlu0 %v48
  %v68 = vpop.xlane.xlu0 %67
  %69 = vadd.xlane.f32.xlu0 %v49
  %v70 = vpop.xlane.xlu0 %69
  %71 = vadd.xlane.f32.xlu0 %v50
  %v72 = vpop.xlane.xlu0 %71
  %73 = vadd.xlane.f32.xlu0 %v51
  %v74 = vpop.xlane.xlu0 %73
  %75 = vadd.xlane.f32.xlu0 %v52
  %v76 = vpop.xlane.xlu0 %75
  %77 = vadd.xlane.f32.xlu0 %v53
  %v78 = vpop.xlane.xlu0 %77
  %79 = vadd.xlane.f32.xlu0 %v54
  %v80 = vpop.xlane.xlu0 %79
  %81 = vadd.xlane.f32.xlu0 %v55
  %v82 = vpop.xlane.xlu0 %81
  %83 = vadd.xlane.f32.xlu0 %v56
  %v84 = vpop.xlane.xlu0 %83
  %85 = vadd.xlane.f32.xlu0 %v57
  %v86 = vpop.xlane.xlu0 %85
  %87 = vadd.xlane.f32.xlu0 %v58
  %v88 = vpop.xlane.xlu0 %87
  %89 = vadd.xlane.f32.xlu0 %v59
  %v90 = vpop.xlane.xlu0 %89
  %91 = vadd.xlane.f32.xlu0 %v60
  %v92 = vpop.xlane.xlu0 %91
  %v93 = vadd.f32 %v29, %v62
  %v94 = vadd.f32 %v30, %v64
  %v95 = vadd.f32 %v31, %v66
  %v96 = vadd.f32 %v32, %v68
  %v97 = vadd.f32 %v33, %v70
  %v98 = vadd.f32 %v34, %v72
  %v99 = vadd.f32 %v35, %v74
  %v100 = vadd.f32 %v36, %v76
  %v101 = vadd.f32 %v37, %v78
  %v102 = vadd.f32 %v38, %v80
  %v103 = vadd.f32 %v39, %v82
  %v104 = vadd.f32 %v40, %v84
  %v105 = vadd.f32 %v41, %v86
  %v106 = vadd.f32 %v42, %v88
  %v107 = vadd.f32 %v43, %v90
  %v108 = vadd.f32 %v44, %v92
  %vm109 = vcmask 7168
  %110 = vst.msk [vmem:[#allocation2] sm:$0xff] %vm109, %v93
  %111 = vst.msk [vmem:[#allocation2 + $0x8] sm:$0xff] %vm109, %v94
  %112 = vst.msk [vmem:[#allocation2 + $0x10] sm:$0xff] %vm109, %v95
  %113 = vst.msk [vmem:[#allocation2 + $0x18] sm:$0xff] %vm109, %v96
  %114 = vst.msk [vmem:[#allocation2 + $0x20] sm:$0xff] %vm109, %v97
  %115 = vst.msk [vmem:[#allocation2 + $0x28] sm:$0xff] %vm109, %v98
  %116 = vst.msk [vmem:[#allocation2 + $0x30] sm:$0xff] %vm109, %v99
  %117 = vst.msk [vmem:[#allocation2 + $0x38] sm:$0xff] %vm109, %v100
  %118 = vst.msk [vmem:[#allocation2 + $0x40] sm:$0xff] %vm109, %v101
  %119 = vst.msk [vmem:[#allocation2 + $0x48] sm:$0xff] %vm109, %v102
  %120 = vst.msk [vmem:[#allocation2 + $0x50] sm:$0xff] %vm109, %v103
  %121 = vst.msk [vmem:[#allocation2 + $0x58] sm:$0xff] %vm109, %v104
  %122 = vst.msk [vmem:[#allocation2 + $0x60] sm:$0xff] %vm109, %v105
  %123 = vst.msk [vmem:[#allocation2 + $0x68] sm:$0xff] %vm109, %v106
  %124 = vst.msk [vmem:[#allocation2 + $0x70] sm:$0xff] %vm109, %v107
  %125 = vst.msk [vmem:[#allocation2 + $0x78] sm:$0xff] %vm109, %v108
  // Predicated region
  $region10: #{gcn_forward.5} parent=0 // pred_check
    %p126 = pneg %p8
  $region11: #{gcn_forward.5} parent=0 // pred_check_branch
    %128 = sbr.rel (%p126) target = $region13
  $region12: #{gcn_forward.5} parent=0 // pred_region
    %v129 = vld [vmem:[#allocation2] sm:$0xff]
    %v130 = vld [vmem:[#allocation2 + $0x8] sm:$0xff]
    %v131 = vld [vmem:[#allocation2 + $0x10] sm:$0xff]
    %v132 = vld [vmem:[#allocation2 + $0x18] sm:$0xff]
    %v133 = vld [vmem:[#allocation2 + $0x20] sm:$0xff]
    %v134 = vld [vmem:[#allocation2 + $0x28] sm:$0xff]
    %v135 = vld [vmem:[#allocation2 + $0x30] sm:$0xff]
    %v136 = vld [vmem:[#allocation2 + $0x38] sm:$0xff]
    %v137 = vld [vmem:[#allocation2 + $0x40] sm:$0xff]
    %v138 = vld [vmem:[#allocation2 + $0x48] sm:$0xff]
    %v139 = vld [vmem:[#allocation2 + $0x50] sm:$0xff]
    %v140 = vld [vmem:[#allocation2 + $0x58] sm:$0xff]
    %v141 = vld [vmem:[#allocation2 + $0x60] sm:$0xff]
    %v142 = vld [vmem:[#allocation2 + $0x68] sm:$0xff]
    %v143 = vld [vmem:[#allocation2 + $0x70] sm:$0xff]
    %v144 = vld [vmem:[#allocation2 + $0x78] sm:$0xff]
    %v145 = vadd.f32 %v129, 1.0
    %v146 = vadd.f32 %v130, 1.0
    %v147 = vadd.f32 %v131, 1.0
    %v148 = vadd.f32 %v132, 1.0
    %v149 = vadd.f32 %v133, 1.0
    %v150 = vadd.f32 %v134, 1.0
    %v151 = vadd.f32 %v135, 1.0
    %v152 = vadd.f32 %v136, 1.0
    %v153 = vadd.f32 %v137, 1.0
    %v154 = vadd.f32 %v138, 1.0
    %v155 = vadd.f32 %v139, 1.0
    %v156 = vadd.f32 %v140, 1.0
    %v157 = vadd.f32 %v141, 1.0
    %v158 = vadd.f32 %v142, 1.0
    %v159 = vadd.f32 %v143, 1.0
    %v160 = vadd.f32 %v144, 1.0
    %v161 = vrsqrt.pop %v145
    %v162 = vrsqrt.pop %v146
    %v163 = vrsqrt.pop %v147
    %v164 = vrsqrt.pop %v148
    %v165 = vrsqrt.pop %v149
    %v166 = vrsqrt.pop %v150
    %v167 = vrsqrt.pop %v151
    %v168 = vrsqrt.pop %v152
    %v169 = vrsqrt.pop %v153
    %v170 = vrsqrt.pop %v154
    %v171 = vrsqrt.pop %v155
    %v172 = vrsqrt.pop %v156
    %v173 = vrsqrt.pop %v157
    %v174 = vrsqrt.pop %v158
    %v175 = vrsqrt.pop %v159
    %v176 = vrsqrt.pop %v160
    %177 = vst.msk [vmem:[%s1] sm:$0xff] %vm109, %v161
    %178 = vst.msk [vmem:[%s1 + $0x8] sm:$0xff] %vm109, %v162
    %179 = vst.msk [vmem:[%s1 + $0x10] sm:$0xff] %vm109, %v163
    %180 = vst.msk [vmem:[%s1 + $0x18] sm:$0xff] %vm109, %v164
    %181 = vst.msk [vmem:[%s1 + $0x20] sm:$0xff] %vm109, %v165
    %182 = vst.msk [vmem:[%s1 + $0x28] sm:$0xff] %vm109, %v166
    %183 = vst.msk [vmem:[%s1 + $0x30] sm:$0xff] %vm109, %v167
    %184 = vst.msk [vmem:[%s1 + $0x38] sm:$0xff] %vm109, %v168
    %185 = vst.msk [vmem:[%s1 + $0x40] sm:$0xff] %vm109, %v169
    %186 = vst.msk [vmem:[%s1 + $0x48] sm:$0xff] %vm109, %v170
    %187 = vst.msk [vmem:[%s1 + $0x50] sm:$0xff] %vm109, %v171
    %188 = vst.msk [vmem:[%s1 + $0x58] sm:$0xff] %vm109, %v172
    %189 = vst.msk [vmem:[%s1 + $0x60] sm:$0xff] %vm109, %v173
    %190 = vst.msk [vmem:[%s1 + $0x68] sm:$0xff] %vm109, %v174
    %191 = vst.msk [vmem:[%s1 + $0x70] sm:$0xff] %vm109, %v175
    %192 = vst.msk [vmem:[%s1 + $0x78] sm:$0xff] %vm109, %v176
  $region13: #{gcn_forward.5} parent=0 // pred_fallthru
    _
  // Predicated region
  $region14: #{gcn_forward.5} parent=0 // pred_check
    _
  $region15: #{gcn_forward.5} parent=0 // pred_check_branch
    %194 = sbr.rel (0) target = $region17
  $region16: #{gcn_forward.5} parent=0 // pred_region
    _
  $region17: #{gcn_forward.5} parent=0 // pred_fallthru
    _
  // Predicated region
  $region18: #{gcn_forward.5} parent=0 // pred_check
    _
  $region19: #{gcn_forward.5} parent=0 // pred_check_branch
    %196 = sbr.rel (0) target = $region21
  $region20: #{gcn_forward.5} parent=0 // pred_region
    _
  $region21: #{gcn_forward.5} parent=0 // pred_fallthru
    _

// kernel: gcn_forward.6
$region0: #{gcn_forward.6}
  #allocation0 [shape = 'u32[]', space=smem, size = 0x4, offset = 0x4, fixed_abs, tag = 'smem constant byte address 0x4 - core index']
  #allocation1 [shape = 'u32[144,128]{1,0:T(1,128)}', space=vmem, size = 0x12000, scoped, tag = 'internal scratch']
  %s0 = inlined_call_operand.vmem [shape: f32[128,16], index: 0, kind: input, shape index: {}]
  %s1 = inlined_call_operand.vmem [shape: f32[16,512], index: 1, kind: input, shape index: {}]
  %s2 = inlined_call_operand.vmem [shape: f32[128,1], index: 2, kind: input, shape index: {}]
  %s3 = inlined_call_operand.vmem [shape: f32[128,512], index: 3, kind: output, shape index: {}]
  %s4 = sld [smem:[#allocation0]]
  $region22: #{gcn_forward.6} parent=0
    _
  %s6 = ssub.s32 1, %s4
  %s7 = scalar_select 0, %s6, %s4
  // Predicated region
  $region2: #{gcn_forward.6} parent=0 // pred_check
    _
  $region3: #{gcn_forward.6} parent=0 // pred_check_branch
    %9 = sbr.rel (0) target = $region5
  $region4: #{gcn_forward.6} parent=0 // pred_region
    _
  $region5: #{gcn_forward.6} parent=0 // pred_fallthru
    _
  // Predicated region
  $region6: #{gcn_forward.6} parent=0 // pred_check
    _
  $region7: #{gcn_forward.6} parent=0 // pred_check_branch
    %11 = sbr.rel (0) target = $region9
  $region8: #{gcn_forward.6} parent=0 // pred_region
    _
  $region9: #{gcn_forward.6} parent=0 // pred_fallthru
    _
  // Predicated region
  $region10: #{gcn_forward.6} parent=0 // pred_check
    _
  $region11: #{gcn_forward.6} parent=0 // pred_check_branch
    %13 = sbr.rel (0) target = $region13
  $region12: #{gcn_forward.6} parent=0 // pred_region
    _
  $region13: #{gcn_forward.6} parent=0 // pred_fallthru
    _
  %v15 = vld [vmem:[%s0] sm:$0xff]
  %v16 = vld [vmem:[%s0 + $0x8] sm:$0xff]
  %v17 = vld [vmem:[%s0 + $0x10] sm:$0xff]
  %v18 = vld [vmem:[%s0 + $0x18] sm:$0xff]
  %v19 = vld [vmem:[%s0 + $0x20] sm:$0xff]
  %v20 = vld [vmem:[%s0 + $0x28] sm:$0xff]
  %v21 = vld [vmem:[%s0 + $0x30] sm:$0xff]
  %v22 = vld [vmem:[%s0 + $0x38] sm:$0xff]
  %v23 = vld [vmem:[%s0 + $0x40] sm:$0xff]
  %v24 = vld [vmem:[%s0 + $0x48] sm:$0xff]
  %v25 = vld [vmem:[%s0 + $0x50] sm:$0xff]
  %v26 = vld [vmem:[%s0 + $0x58] sm:$0xff]
  %v27 = vld [vmem:[%s0 + $0x60] sm:$0xff]
  %v28 = vld [vmem:[%s0 + $0x68] sm:$0xff]
  %v29 = vld [vmem:[%s0 + $0x70] sm:$0xff]
  %v30 = vld [vmem:[%s0 + $0x78] sm:$0xff]
  %v31 = vpack.c.bf16 %v16, %v15
  %v32 = vpack.c.bf16 %v18, %v17
  %v33 = vpack.c.bf16 %v20, %v19
  %v34 = vpack.c.bf16 %v22, %v21
  %v35 = vpack.c.bf16 %v24, %v23
  %v36 = vpack.c.bf16 %v26, %v25
  %v37 = vpack.c.bf16 %v28, %v27
  %v38 = vpack.c.bf16 %v30, %v29
  %v39 = vld [vmem:[%s1] sm:$0xff]
  %v40 = vld [vmem:[%s1 + $0x8] sm:$0xff]
  %v41 = vld [vmem:[%s1 + $0x10] sm:$0xff]
  %v42 = vld [vmem:[%s1 + $0x18] sm:$0xff]
  %v43 = vld [vmem:[%s1 + $0x20] sm:$0xff]
  %v44 = vld [vmem:[%s1 + $0x28] sm:$0xff]
  %v45 = vld [vmem:[%s1 + $0x30] sm:$0xff]
  %v46 = vld [vmem:[%s1 + $0x38] sm:$0xff]
  %v47 = vpack.c.bf16 %v43, %v39
  %v48 = vpack.c.bf16 %v44, %v40
  %v49 = vpack.c.bf16 %v45, %v41
  %v50 = vpack.c.bf16 %v46, %v42
  %vm51 = vcmask 130048
  %v53 = vsel %vm51, %v31, 0
  %v56 = vsel %vm51, %v32, 0
  %v59 = vsel %vm51, %v33, 0
  %v62 = vsel %vm51, %v34, 0
  %v65 = vsel %vm51, %v35, 0
  %v68 = vsel %vm51, %v36, 0
  %v71 = vsel %vm51, %v37, 0
  %v74 = vsel %vm51, %v38, 0
  %76 = vmatprep.subr.bf16.mxu0 0
  %77 = vmatpush1.bf16.msra.mxu0 0
  %78 = vmatprep.subr.bf16.mxu0 0
  %79 = vmatpush1.bf16.msra.mxu0 0
  %80 = vmatprep.subr.bf16.mxu0 0
  %81 = vmatpush1.bf16.msra.mxu0 0
  %82 = vmatprep.subr.bf16.mxu0 0
  %83 = vmatpush1.bf16.msra.mxu0 0
  %84 = vmatprep.subr.bf16.mxu0 0
  %85 = vmatpush1.bf16.msra.mxu0 0
  %86 = vmatprep.subr.bf16.mxu0 0
  %87 = vmatpush1.bf16.msra.mxu0 0
  %88 = vmatprep.subr.bf16.mxu0 0
  %89 = vmatpush1.bf16.msra.mxu0 0
  %90 = vmatprep.subr.bf16.mxu0 %v48
  %91 = vmatpush1.bf16.msra.mxu0 %v47
  %92 = vmatprep.subr.bf16.mxu0 0
  %93 = vmatpush2.bf16.msra.mxu0 0
  %94 = vmatprep.subr.bf16.mxu0 0
  %95 = vmatpush2.bf16.msra.mxu0 0
  %96 = vmatprep.subr.bf16.mxu0 0
  %97 = vmatpush2.bf16.msra.mxu0 0
  %98 = vmatprep.subr.bf16.mxu0 0
  %99 = vmatpush2.bf16.msra.mxu0 0
  %100 = vmatprep.subr.bf16.mxu0 0
  %101 = vmatpush2.bf16.msra.mxu0 0
  %102 = vmatprep.subr.bf16.mxu0 0
  %103 = vmatpush2.bf16.msra.mxu0 0
  %104 = vmatprep.subr.bf16.mxu0 0
  %105 = vmatpush2.bf16.msra.mxu0 0
  %106 = vmatprep.subr.bf16.mxu0 0
  %107 = vmatpush2.bf16.msra.mxu0 0
  %108 = vmatprep.mubr.bf16.mxu0 0
  %109 = vmatmul.mubr.bf16.gmra.mxu0 %v53
  %v110 = vpop.f32.mrf.mxu0
  %v111 = vadd.f32 0.0, %v110
  %v112 = vpop.f32.mrf.mxu0
  %v113 = vadd.f32 0.0, %v112
  %v114 = vpop.f32.mrf.mxu0
  %v115 = vadd.f32 0.0, %v114
  %v116 = vpop.f32.mrf.mxu0
  %v117 = vadd.f32 0.0, %v116
  %118 = vmatprep.mubr.bf16.mxu0 0
  %119 = vmatmul.mubr.bf16.gmra.mxu0 %v56
  %v120 = vpop.f32.mrf.mxu0
  %v121 = vadd.f32 0.0, %v120
  %v122 = vpop.f32.mrf.mxu0
  %v123 = vadd.f32 0.0, %v122
  %v124 = vpop.f32.mrf.mxu0
  %v125 = vadd.f32 0.0, %v124
  %v126 = vpop.f32.mrf.mxu0
  %v127 = vadd.f32 0.0, %v126
  %128 = vmatprep.mubr.bf16.mxu0 0
  %129 = vmatmul.mubr.bf16.gmra.mxu0 %v59
  %v130 = vpop.f32.mrf.mxu0
  %v131 = vadd.f32 0.0, %v130
  %v132 = vpop.f32.mrf.mxu0
  %v133 = vadd.f32 0.0, %v132
  %v134 = vpop.f32.mrf.mxu0
  %v135 = vadd.f32 0.0, %v134
  %v136 = vpop.f32.mrf.mxu0
  %v137 = vadd.f32 0.0, %v136
  %138 = vmatprep.mubr.bf16.mxu0 0
  %139 = vmatmul.mubr.bf16.gmra.mxu0 %v62
  %v140 = vpop.f32.mrf.mxu0
  %v141 = vadd.f32 0.0, %v140
  %v142 = vpop.f32.mrf.mxu0
  %v143 = vadd.f32 0.0, %v142
  %v144 = vpop.f32.mrf.mxu0
  %v145 = vadd.f32 0.0, %v144
  %v146 = vpop.f32.mrf.mxu0
  %v147 = vadd.f32 0.0, %v146
  %148 = vmatprep.mubr.bf16.mxu0 0
  %149 = vmatmul.mubr.bf16.gmra.mxu0 %v65
  %v150 = vpop.f32.mrf.mxu0
  %v151 = vadd.f32 0.0, %v150
  %v152 = vpop.f32.mrf.mxu0
  %v153 = vadd.f32 0.0, %v152
  %v154 = vpop.f32.mrf.mxu0
  %v155 = vadd.f32 0.0, %v154
  %v156 = vpop.f32.mrf.mxu0
  %v157 = vadd.f32 0.0, %v156
  %158 = vmatprep.mubr.bf16.mxu0 0
  %159 = vmatmul.mubr.bf16.gmra.mxu0 %v68
  %v160 = vpop.f32.mrf.mxu0
  %v161 = vadd.f32 0.0, %v160
  %v162 = vpop.f32.mrf.mxu0
  %v163 = vadd.f32 0.0, %v162
  %v164 = vpop.f32.mrf.mxu0
  %v165 = vadd.f32 0.0, %v164
  %v166 = vpop.f32.mrf.mxu0
  %v167 = vadd.f32 0.0, %v166
  %168 = vmatprep.mubr.bf16.mxu0 0
  %169 = vmatmul.mubr.bf16.gmra.mxu0 %v71
  %v170 = vpop.f32.mrf.mxu0
  %v171 = vadd.f32 0.0, %v170
  %v172 = vpop.f32.mrf.mxu0
  %v173 = vadd.f32 0.0, %v172
  %v174 = vpop.f32.mrf.mxu0
  %v175 = vadd.f32 0.0, %v174
  %v176 = vpop.f32.mrf.mxu0
  %v177 = vadd.f32 0.0, %v176
  %178 = vmatprep.mubr.bf16.mxu0 0
  %179 = vmatmul.mubr.bf16.gmra.mxu0 %v74
  %v180 = vpop.f32.mrf.mxu0
  %v181 = vadd.f32 0.0, %v180
  %v182 = vpop.f32.mrf.mxu0
  %v183 = vadd.f32 0.0, %v182
  %v184 = vpop.f32.mrf.mxu0
  %v185 = vadd.f32 0.0, %v184
  %v186 = vpop.f32.mrf.mxu0
  %v187 = vadd.f32 0.0, %v186
  %188 = vdwg.mxu0
  %189 = vmatprep.subr.bf16.mxu0 0
  %190 = vmatpush1.bf16.msra.mxu0 0
  %191 = vmatprep.subr.bf16.mxu0 0
  %192 = vmatpush1.bf16.msra.mxu0 0
  %193 = vmatprep.subr.bf16.mxu0 0
  %194 = vmatpush1.bf16.msra.mxu0 0
  %195 = vmatprep.subr.bf16.mxu0 0
  %196 = vmatpush1.bf16.msra.mxu0 0
  %197 = vmatprep.subr.bf16.mxu0 0
  %198 = vmatpush1.bf16.msra.mxu0 0
  %199 = vmatprep.subr.bf16.mxu0 0
  %200 = vmatpush1.bf16.msra.mxu0 0
  %201 = vmatprep.subr.bf16.mxu0 0
  %202 = vmatpush1.bf16.msra.mxu0 0
  %203 = vmatprep.subr.bf16.mxu0 %v50
  %204 = vmatpush1.bf16.msra.mxu0 %v49
  %205 = vmatprep.subr.bf16.mxu0 0
  %206 = vmatpush2.bf16.msra.mxu0 0
  %207 = vmatprep.subr.bf16.mxu0 0
  %208 = vmatpush2.bf16.msra.mxu0 0
  %209 = vmatprep.subr.bf16.mxu0 0
  %210 = vmatpush2.bf16.msra.mxu0 0
  %211 = vmatprep.subr.bf16.mxu0 0
  %212 = vmatpush2.bf16.msra.mxu0 0
  %213 = vmatprep.subr.bf16.mxu0 0
  %214 = vmatpush2.bf16.msra.mxu0 0
  %215 = vmatprep.subr.bf16.mxu0 0
  %216 = vmatpush2.bf16.msra.mxu0 0
  %217 = vmatprep.subr.bf16.mxu0 0
  %218 = vmatpush2.bf16.msra.mxu0 0
  %219 = vmatprep.subr.bf16.mxu0 0
  %220 = vmatpush2.bf16.msra.mxu0 0
  %221 = vmatprep.mubr.bf16.mxu0 0
  %222 = vmatmul.mubr.bf16.gmra.mxu0 %v53
  %v223 = vpop.f32.mrf.mxu0
  %v224 = vadd.f32 0.0, %v223
  %v225 = vpop.f32.mrf.mxu0
  %v226 = vadd.f32 0.0, %v225
  %v227 = vpop.f32.mrf.mxu0
  %v228 = vadd.f32 0.0, %v227
  %v229 = vpop.f32.mrf.mxu0
  %v230 = vadd.f32 0.0, %v229
  %231 = vmatprep.mubr.bf16.mxu0 0
  %232 = vmatmul.mubr.bf16.gmra.mxu0 %v56
  %v233 = vpop.f32.mrf.mxu0
  %v234 = vadd.f32 0.0, %v233
  %v235 = vpop.f32.mrf.mxu0
  %v236 = vadd.f32 0.0, %v235
  %v237 = vpop.f32.mrf.mxu0
  %v238 = vadd.f32 0.0, %v237
  %v239 = vpop.f32.mrf.mxu0
  %v240 = vadd.f32 0.0, %v239
  %241 = vmatprep.mubr.bf16.mxu0 0
  %242 = vmatmul.mubr.bf16.gmra.mxu0 %v59
  %v243 = vpop.f32.mrf.mxu0
  %v244 = vadd.f32 0.0, %v243
  %v245 = vpop.f32.mrf.mxu0
  %v246 = vadd.f32 0.0, %v245
  %v247 = vpop.f32.mrf.mxu0
  %v248 = vadd.f32 0.0, %v247
  %v249 = vpop.f32.mrf.mxu0
  %v250 = vadd.f32 0.0, %v249
  %251 = vmatprep.mubr.bf16.mxu0 0
  %252 = vmatmul.mubr.bf16.gmra.mxu0 %v62
  %v253 = vpop.f32.mrf.mxu0
  %v254 = vadd.f32 0.0, %v253
  %v255 = vpop.f32.mrf.mxu0
  %v256 = vadd.f32 0.0, %v255
  %v257 = vpop.f32.mrf.mxu0
  %v258 = vadd.f32 0.0, %v257
  %v259 = vpop.f32.mrf.mxu0
  %v260 = vadd.f32 0.0, %v259
  %261 = vmatprep.mubr.bf16.mxu0 0
  %262 = vmatmul.mubr.bf16.gmra.mxu0 %v65
  %v263 = vpop.f32.mrf.mxu0
  %v264 = vadd.f32 0.0, %v263
  %v265 = vpop.f32.mrf.mxu0
  %v266 = vadd.f32 0.0, %v265
  %v267 = vpop.f32.mrf.mxu0
  %v268 = vadd.f32 0.0, %v267
  %v269 = vpop.f32.mrf.mxu0
  %v270 = vadd.f32 0.0, %v269
  %271 = vmatprep.mubr.bf16.mxu0 0
  %272 = vmatmul.mubr.bf16.gmra.mxu0 %v68
  %v273 = vpop.f32.mrf.mxu0
  %v274 = vadd.f32 0.0, %v273
  %v275 = vpop.f32.mrf.mxu0
  %v276 = vadd.f32 0.0, %v275
  %v277 = vpop.f32.mrf.mxu0
  %v278 = vadd.f32 0.0, %v277
  %v279 = vpop.f32.mrf.mxu0
  %v280 = vadd.f32 0.0, %v279
  %281 = vmatprep.mubr.bf16.mxu0 0
  %282 = vmatmul.mubr.bf16.gmra.mxu0 %v71
  %v283 = vpop.f32.mrf.mxu0
  %v284 = vadd.f32 0.0, %v283
  %v285 = vpop.f32.mrf.mxu0
  %v286 = vadd.f32 0.0, %v285
  %v287 = vpop.f32.mrf.mxu0
  %v288 = vadd.f32 0.0, %v287
  %v289 = vpop.f32.mrf.mxu0
  %v290 = vadd.f32 0.0, %v289
  %291 = vmatprep.mubr.bf16.mxu0 0
  %292 = vmatmul.mubr.bf16.gmra.mxu0 %v74
  %v293 = vpop.f32.mrf.mxu0
  %v294 = vadd.f32 0.0, %v293
  %v295 = vpop.f32.mrf.mxu0
  %v296 = vadd.f32 0.0, %v295
  %v297 = vpop.f32.mrf.mxu0
  %v298 = vadd.f32 0.0, %v297
  %v299 = vpop.f32.mrf.mxu0
  %v300 = vadd.f32 0.0, %v299
  %301 = vdwg.mxu0
  %v302 = vld [vmem:[%s2] sm:$0xff]
  %v303 = vld [vmem:[%s2 + $0x8] sm:$0xff]
  %v304 = vld [vmem:[%s2 + $0x10] sm:$0xff]
  %v305 = vld [vmem:[%s2 + $0x18] sm:$0xff]
  %v306 = vld [vmem:[%s2 + $0x20] sm:$0xff]
  %v307 = vld [vmem:[%s2 + $0x28] sm:$0xff]
  %v308 = vld [vmem:[%s2 + $0x30] sm:$0xff]
  %v309 = vld [vmem:[%s2 + $0x38] sm:$0xff]
  %v310 = vld [vmem:[%s2 + $0x40] sm:$0xff]
  %v311 = vld [vmem:[%s2 + $0x48] sm:$0xff]
  %v312 = vld [vmem:[%s2 + $0x50] sm:$0xff]
  %v313 = vld [vmem:[%s2 + $0x58] sm:$0xff]
  %v314 = vld [vmem:[%s2 + $0x60] sm:$0xff]
  %v315 = vld [vmem:[%s2 + $0x68] sm:$0xff]
  %v316 = vld [vmem:[%s2 + $0x70] sm:$0xff]
  %v317 = vld [vmem:[%s2 + $0x78] sm:$0xff]
  %319 = vset.pattern.permute.xlu0 0
  %320 = vperm.xlu0 %319, %v302
  %v321 = vpop.permute.xlu0 %320
  %324 = vset.pattern.permute.xlu0 0
  %325 = vperm.xlu0 %324, %v303
  %v326 = vpop.permute.xlu0 %325
  %329 = vset.pattern.permute.xlu0 0
  %330 = vperm.xlu0 %329, %v304
  %v331 = vpop.permute.xlu0 %330
  %334 = vset.pattern.permute.xlu0 0
  %335 = vperm.xlu0 %334, %v305
  %v336 = vpop.permute.xlu0 %335
  %339 = vset.pattern.permute.xlu0 0
  %340 = vperm.xlu0 %339, %v306
  %v341 = vpop.permute.xlu0 %340
  %344 = vset.pattern.permute.xlu0 0
  %345 = vperm.xlu0 %344, %v307
  %v346 = vpop.permute.xlu0 %345
  %349 = vset.pattern.permute.xlu0 0
  %350 = vperm.xlu0 %349, %v308
  %v351 = vpop.permute.xlu0 %350
  %354 = vset.pattern.permute.xlu0 0
  %355 = vperm.xlu0 %354, %v309
  %v356 = vpop.permute.xlu0 %355
  %359 = vset.pattern.permute.xlu0 0
  %360 = vperm.xlu0 %359, %v310
  %v361 = vpop.permute.xlu0 %360
  %364 = vset.pattern.permute.xlu0 0
  %365 = vperm.xlu0 %364, %v311
  %v366 = vpop.permute.xlu0 %365
  %369 = vset.pattern.permute.xlu0 0
  %370 = vperm.xlu0 %369, %v312
  %v371 = vpop.permute.xlu0 %370
  %374 = vset.pattern.permute.xlu0 0
  %375 = vperm.xlu0 %374, %v313
  %v376 = vpop.permute.xlu0 %375
  %379 = vset.pattern.permute.xlu0 0
  %380 = vperm.xlu0 %379, %v314
  %v381 = vpop.permute.xlu0 %380
  %384 = vset.pattern.permute.xlu0 0
  %385 = vperm.xlu0 %384, %v315
  %v386 = vpop.permute.xlu0 %385
  %389 = vset.pattern.permute.xlu0 0
  %390 = vperm.xlu0 %389, %v316
  %v391 = vpop.permute.xlu0 %390
  %394 = vset.pattern.permute.xlu0 0
  %395 = vperm.xlu0 %394, %v317
  %v396 = vpop.permute.xlu0 %395
  %v398 = vmul.f32 %v321, %v111
  %v399 = vmul.f32 %v321, %v113
  %v400 = vmul.f32 %v321, %v224
  %v401 = vmul.f32 %v321, %v226
  %v402 = vmul.f32 %v326, %v115
  %v403 = vmul.f32 %v326, %v117
  %v404 = vmul.f32 %v326, %v228
  %v405 = vmul.f32 %v326, %v230
  %v406 = vmul.f32 %v331, %v121
  %v407 = vmul.f32 %v331, %v123
  %v408 = vmul.f32 %v331, %v234
  %v409 = vmul.f32 %v331, %v236
  %v410 = vmul.f32 %v336, %v125
  %v411 = vmul.f32 %v336, %v127
  %v412 = vmul.f32 %v336, %v238
  %v413 = vmul.f32 %v336, %v240
  %v414 = vmul.f32 %v341, %v131
  %v415 = vmul.f32 %v341, %v133
  %v416 = vmul.f32 %v341, %v244
  %v417 = vmul.f32 %v341, %v246
  %v418 = vmul.f32 %v346, %v135
  %v419 = vmul.f32 %v346, %v137
  %v420 = vmul.f32 %v346, %v248
  %v421 = vmul.f32 %v346, %v250
  %v422 = vmul.f32 %v351, %v141
  %v423 = vmul.f32 %v351, %v143
  %v424 = vmul.f32 %v351, %v254
  %v425 = vmul.f32 %v351, %v256
  %v426 = vmul.f32 %v356, %v145
  %v427 = vmul.f32 %v356, %v147
  %v428 = vmul.f32 %v356, %v258
  %v429 = vmul.f32 %v356, %v260
  %v430 = vmul.f32 %v361, %v151
  %v431 = vmul.f32 %v361, %v153
  %v432 = vmul.f32 %v361, %v264
  %v433 = vmul.f32 %v361, %v266
  %v434 = vmul.f32 %v366, %v155
  %v435 = vmul.f32 %v366, %v157
  %v436 = vmul.f32 %v366, %v268
  %v437 = vmul.f32 %v366, %v270
  %v438 = vmul.f32 %v371, %v161
  %v439 = vmul.f32 %v371, %v163
  %v440 = vmul.f32 %v371, %v274
  %v441 = vmul.f32 %v371, %v276
  %v442 = vmul.f32 %v376, %v165
  %v443 = vmul.f32 %v376, %v167
  %v444 = vmul.f32 %v376, %v278
  %v445 = vmul.f32 %v376, %v280
  %v446 = vmul.f32 %v381, %v171
  %v447 = vmul.f32 %v381, %v173
  %v448 = vmul.f32 %v381, %v284
  %v449 = vmul.f32 %v381, %v286
  %v450 = vmul.f32 %v386, %v175
  %v451 = vmul.f32 %v386, %v177
  %v452 = vmul.f32 %v386, %v288
  %v453 = vmul.f32 %v386, %v290
  %v454 = vmul.f32 %v391, %v181
  %v455 = vmul.f32 %v391, %v183
  %v456 = vmul.f32 %v391, %v294
  %v457 = vmul.f32 %v391, %v296
  %v458 = vmul.f32 %v396, %v185
  %v459 = vmul.f32 %v396, %v187
  %v460 = vmul.f32 %v396, %v298
  %v461 = vmul.f32 %v396, %v300
  %462 = vst [vmem:[%s3] sm:$0xff] %v398
  %463 = vst [vmem:[%s3 + $0x8] sm:$0xff] %v399
  %464 = vst [vmem:[%s3 + $0x10] sm:$0xff] %v400
  %465 = vst [vmem:[%s3 + $0x18] sm:$0xff] %v401
  %466 = vst [vmem:[%s3 + $0x20] sm:$0xff] %v402
  %467 = vst [vmem:[%s3 + $0x28] sm:$0xff] %v403
  %468 = vst [vmem:[%s3 + $0x30] sm:$0xff] %v404
  %469 = vst [vmem:[%s3 + $0x38] sm:$0xff] %v405
  %470 = vst [vmem:[%s3 + $0x40] sm:$0xff] %v406
  %471 = vst [vmem:[%s3 + $0x48] sm:$0xff] %v407
  %472 = vst [vmem:[%s3 + $0x50] sm:$0xff] %v408
  %473 = vst [vmem:[%s3 + $0x58] sm:$0xff] %v409
  %474 = vst [vmem:[%s3 + $0x60] sm:$0xff] %v410
  %475 = vst [vmem:[%s3 + $0x68] sm:$0xff] %v411
  %476 = vst [vmem:[%s3 + $0x70] sm:$0xff] %v412
  %477 = vst [vmem:[%s3 + $0x78] sm:$0xff] %v413
  %478 = vst [vmem:[%s3 + $0x80] sm:$0xff] %v414
  %479 = vst [vmem:[%s3 + $0x88] sm:$0xff] %v415
  %480 = vst [vmem:[%s3 + $0x90] sm:$0xff] %v416
  %481 = vst [vmem:[%s3 + $0x98] sm:$0xff] %v417
  %482 = vst [vmem:[%s3 + $0xa0] sm:$0xff] %v418
  %483 = vst [vmem:[%s3 + $0xa8] sm:$0xff] %v419
  %484 = vst [vmem:[%s3 + $0xb0] sm:$0xff] %v420
  %485 = vst [vmem:[%s3 + $0xb8] sm:$0xff] %v421
  %486 = vst [vmem:[%s3 + $0xc0] sm:$0xff] %v422
  %487 = vst [vmem:[%s3 + $0xc8] sm:$0xff] %v423
  %488 = vst [vmem:[%s3 + $0xd0] sm:$0xff] %v424
  %489 = vst [vmem:[%s3 + $0xd8] sm:$0xff] %v425
  %490 = vst [vmem:[%s3 + $0xe0] sm:$0xff] %v426
  %491 = vst [vmem:[%s3 + $0xe8] sm:$0xff] %v427
  %492 = vst [vmem:[%s3 + $0xf0] sm:$0xff] %v428
  %493 = vst [vmem:[%s3 + $0xf8] sm:$0xff] %v429
  %494 = vst [vmem:[%s3 + $0x100] sm:$0xff] %v430
  %495 = vst [vmem:[%s3 + $0x108] sm:$0xff] %v431
  %496 = vst [vmem:[%s3 + $0x110] sm:$0xff] %v432
  %497 = vst [vmem:[%s3 + $0x118] sm:$0xff] %v433
  %498 = vst [vmem:[%s3 + $0x120] sm:$0xff] %v434
  %499 = vst [vmem:[%s3 + $0x128] sm:$0xff] %v435
  %500 = vst [vmem:[%s3 + $0x130] sm:$0xff] %v436
  %501 = vst [vmem:[%s3 + $0x138] sm:$0xff] %v437
  %502 = vst [vmem:[%s3 + $0x140] sm:$0xff] %v438
  %503 = vst [vmem:[%s3 + $0x148] sm:$0xff] %v439
  %504 = vst [vmem:[%s3 + $0x150] sm:$0xff] %v440
  %505 = vst [vmem:[%s3 + $0x158] sm:$0xff] %v441
  %506 = vst [vmem:[%s3 + $0x160] sm:$0xff] %v442
  %507 = vst [vmem:[%s3 + $0x168] sm:$0xff] %v443
  %508 = vst [vmem:[%s3 + $0x170] sm:$0xff] %v444
  %509 = vst [vmem:[%s3 + $0x178] sm:$0xff] %v445
  %510 = vst [vmem:[%s3 + $0x180] sm:$0xff] %v446
  %511 = vst [vmem:[%s3 + $0x188] sm:$0xff] %v447
  %512 = vst [vmem:[%s3 + $0x190] sm:$0xff] %v448
  %513 = vst [vmem:[%s3 + $0x198] sm:$0xff] %v449
  %514 = vst [vmem:[%s3 + $0x1a0] sm:$0xff] %v450
  %515 = vst [vmem:[%s3 + $0x1a8] sm:$0xff] %v451
  %516 = vst [vmem:[%s3 + $0x1b0] sm:$0xff] %v452
  %517 = vst [vmem:[%s3 + $0x1b8] sm:$0xff] %v453
  %518 = vst [vmem:[%s3 + $0x1c0] sm:$0xff] %v454
  %519 = vst [vmem:[%s3 + $0x1c8] sm:$0xff] %v455
  %520 = vst [vmem:[%s3 + $0x1d0] sm:$0xff] %v456
  %521 = vst [vmem:[%s3 + $0x1d8] sm:$0xff] %v457
  %522 = vst [vmem:[%s3 + $0x1e0] sm:$0xff] %v458
  %523 = vst [vmem:[%s3 + $0x1e8] sm:$0xff] %v459
  %524 = vst [vmem:[%s3 + $0x1f0] sm:$0xff] %v460
  %525 = vst [vmem:[%s3 + $0x1f8] sm:$0xff] %v461
  // Predicated region
  $region14: #{gcn_forward.6} parent=0 // pred_check
    _
  $region15: #{gcn_forward.6} parent=0 // pred_check_branch
    %527 = sbr.rel (0) target = $region17
  $region16: #{gcn_forward.6} parent=0 // pred_region
    _
  $region17: #{gcn_forward.6} parent=0 // pred_fallthru
    _
  // Predicated region
  $region18: #{gcn_forward.6} parent=0 // pred_check
    _
  $region19: #{gcn_forward.6} parent=0 // pred_check_branch
    %529 = sbr.rel (0) target = $region21
  $region20: #{gcn_forward.6} parent=0 // pred_region
    _
  $region21: #{gcn_forward.6} parent=0 // pred_fallthru
    _

// kernel: gcn_forward.8
$region0: #{gcn_forward.8}
  #allocation0 [shape = 'u32[]', space=smem, size = 0x4, offset = 0x4, fixed_abs, tag = 'smem constant byte address 0x4 - core index']
  #allocation1 [shape = 'u32[144,128]{1,0:T(1,128)}', space=vmem, size = 0x12000, scoped, tag = 'internal scratch']
  %s0 = inlined_call_operand.vmem [shape: f32[128,512], index: 0, kind: input, shape index: {}]
  %s1 = inlined_call_operand.vmem [shape: f32[512,16], index: 1, kind: input, shape index: {}]
  %s2 = inlined_call_operand.vmem [shape: f32[128,1], index: 2, kind: input, shape index: {}]
  %s3 = inlined_call_operand.vmem [shape: f32[128,16], index: 3, kind: output, shape index: {}]
  %s4 = sld [smem:[#allocation0]]
  $region22: #{gcn_forward.8} parent=0
    _
  %s6 = ssub.s32 1, %s4
  %s7 = scalar_select 0, %s6, %s4
  // Predicated region
  $region2: #{gcn_forward.8} parent=0 // pred_check
    _
  $region3: #{gcn_forward.8} parent=0 // pred_check_branch
    %9 = sbr.rel (0) target = $region5
  $region4: #{gcn_forward.8} parent=0 // pred_region
    _
  $region5: #{gcn_forward.8} parent=0 // pred_fallthru
    _
  // Predicated region
  $region6: #{gcn_forward.8} parent=0 // pred_check
    _
  $region7: #{gcn_forward.8} parent=0 // pred_check_branch
    %11 = sbr.rel (0) target = $region9
  $region8: #{gcn_forward.8} parent=0 // pred_region
    _
  $region9: #{gcn_forward.8} parent=0 // pred_fallthru
    _
  // Predicated region
  $region10: #{gcn_forward.8} parent=0 // pred_check
    _
  $region11: #{gcn_forward.8} parent=0 // pred_check_branch
    %13 = sbr.rel (0) target = $region13
  $region12: #{gcn_forward.8} parent=0 // pred_region
    _
  $region13: #{gcn_forward.8} parent=0 // pred_fallthru
    _
  %v15 = vld [vmem:[%s0] sm:$0xff]
  %v16 = vld [vmem:[%s0 + $0x8] sm:$0xff]
  %v17 = vld [vmem:[%s0 + $0x10] sm:$0xff]
  %v18 = vld [vmem:[%s0 + $0x18] sm:$0xff]
  %v19 = vld [vmem:[%s0 + $0x20] sm:$0xff]
  %v20 = vld [vmem:[%s0 + $0x28] sm:$0xff]
  %v21 = vld [vmem:[%s0 + $0x30] sm:$0xff]
  %v22 = vld [vmem:[%s0 + $0x38] sm:$0xff]
  %v23 = vld [vmem:[%s0 + $0x40] sm:$0xff]
  %v24 = vld [vmem:[%s0 + $0x48] sm:$0xff]
  %v25 = vld [vmem:[%s0 + $0x50] sm:$0xff]
  %v26 = vld [vmem:[%s0 + $0x58] sm:$0xff]
  %v27 = vld [vmem:[%s0 + $0x60] sm:$0xff]
  %v28 = vld [vmem:[%s0 + $0x68] sm:$0xff]
  %v29 = vld [vmem:[%s0 + $0x70] sm:$0xff]
  %v30 = vld [vmem:[%s0 + $0x78] sm:$0xff]
  %v31 = vld [vmem:[%s0 + $0x80] sm:$0xff]
  %v32 = vld [vmem:[%s0 + $0x88] sm:$0xff]
  %v33 = vld [vmem:[%s0 + $0x90] sm:$0xff]
  %v34 = vld [vmem:[%s0 + $0x98] sm:$0xff]
  %v35 = vld [vmem:[%s0 + $0xa0] sm:$0xff]
  %v36 = vld [vmem:[%s0 + $0xa8] sm:$0xff]
  %v37 = vld [vmem:[%s0 + $0xb0] sm:$0xff]
  %v38 = vld [vmem:[%s0 + $0xb8] sm:$0xff]
  %v39 = vld [vmem:[%s0 + $0xc0] sm:$0xff]
  %v40 = vld [vmem:[%s0 + $0xc8] sm:$0xff]
  %v41 = vld [vmem:[%s0 + $0xd0] sm:$0xff]
  %v42 = vld [vmem:[%s0 + $0xd8] sm:$0xff]
  %v43 = vld [vmem:[%s0 + $0xe0] sm:$0xff]
  %v44 = vld [vmem:[%s0 + $0xe8] sm:$0xff]
  %v45 = vld [vmem:[%s0 + $0xf0] sm:$0xff]
  %v46 = vld [vmem:[%s0 + $0xf8] sm:$0xff]
  %v47 = vld [vmem:[%s0 + $0x100] sm:$0xff]
  %v48 = vld [vmem:[%s0 + $0x108] sm:$0xff]
  %v49 = vld [vmem:[%s0 + $0x110] sm:$0xff]
  %v50 = vld [vmem:[%s0 + $0x118] sm:$0xff]
  %v51 = vld [vmem:[%s0 + $0x120] sm:$0xff]
  %v52 = vld [vmem:[%s0 + $0x128] sm:$0xff]
  %v53 = vld [vmem:[%s0 + $0x130] sm:$0xff]
  %v54 = vld [vmem:[%s0 + $0x138] sm:$0xff]
  %v55 = vld [vmem:[%s0 + $0x140] sm:$0xff]
  %v56 = vld [vmem:[%s0 + $0x148] sm:$0xff]
  %v57 = vld [vmem:[%s0 + $0x150] sm:$0xff]
  %v58 = vld [vmem:[%s0 + $0x158] sm:$0xff]
  %v59 = vld [vmem:[%s0 + $0x160] sm:$0xff]
  %v60 = vld [vmem:[%s0 + $0x168] sm:$0xff]
  %v61 = vld [vmem:[%s0 + $0x170] sm:$0xff]
  %v62 = vld [vmem:[%s0 + $0x178] sm:$0xff]
  %v63 = vld [vmem:[%s0 + $0x180] sm:$0xff]
  %v64 = vld [vmem:[%s0 + $0x188] sm:$0xff]
  %v65 = vld [vmem:[%s0 + $0x190] sm:$0xff]
  %v66 = vld [vmem:[%s0 + $0x198] sm:$0xff]
  %v67 = vld [vmem:[%s0 + $0x1a0] sm:$0xff]
  %v68 = vld [vmem:[%s0 + $0x1a8] sm:$0xff]
  %v69 = vld [vmem:[%s0 + $0x1b0] sm:$0xff]
  %v70 = vld [vmem:[%s0 + $0x1b8] sm:$0xff]
  %v71 = vld [vmem:[%s0 + $0x1c0] sm:$0xff]
  %v72 = vld [vmem:[%s0 + $0x1c8] sm:$0xff]
  %v73 = vld [vmem:[%s0 + $0x1d0] sm:$0xff]
  %v74 = vld [vmem:[%s0 + $0x1d8] sm:$0xff]
  %v75 = vld [vmem:[%s0 + $0x1e0] sm:$0xff]
  %v76 = vld [vmem:[%s0 + $0x1e8] sm:$0xff]
  %v77 = vld [vmem:[%s0 + $0x1f0] sm:$0xff]
  %v78 = vld [vmem:[%s0 + $0x1f8] sm:$0xff]
  %v79 = vpack.c.bf16 %v19, %v15
  %v80 = vpack.c.bf16 %v20, %v16
  %v81 = vpack.c.bf16 %v21, %v17
  %v82 = vpack.c.bf16 %v22, %v18
  %v83 = vpack.c.bf16 %v27, %v23
  %v84 = vpack.c.bf16 %v28, %v24
  %v85 = vpack.c.bf16 %v29, %v25
  %v86 = vpack.c.bf16 %v30, %v26
  %v87 = vpack.c.bf16 %v35, %v31
  %v88 = vpack.c.bf16 %v36, %v32
  %v89 = vpack.c.bf16 %v37, %v33
  %v90 = vpack.c.bf16 %v38, %v34
  %v91 = vpack.c.bf16 %v43, %v39
  %v92 = vpack.c.bf16 %v44, %v40
  %v93 = vpack.c.bf16 %v45, %v41
  %v94 = vpack.c.bf16 %v46, %v42
  %v95 = vpack.c.bf16 %v51, %v47
  %v96 = vpack.c.bf16 %v52, %v48
  %v97 = vpack.c.bf16 %v53, %v49
  %v98 = vpack.c.bf16 %v54, %v50
  %v99 = vpack.c.bf16 %v59, %v55
  %v100 = vpack.c.bf16 %v60, %v56
  %v101 = vpack.c.bf16 %v61, %v57
  %v102 = vpack.c.bf16 %v62, %v58
  %v103 = vpack.c.bf16 %v67, %v63
  %v104 = vpack.c.bf16 %v68, %v64
  %v105 = vpack.c.bf16 %v69, %v65
  %v106 = vpack.c.bf16 %v70, %v66
  %v107 = vpack.c.bf16 %v75, %v71
  %v108 = vpack.c.bf16 %v76, %v72
  %v109 = vpack.c.bf16 %v77, %v73
  %v110 = vpack.c.bf16 %v78, %v74
  %v111 = vld [vmem:[%s1] sm:$0xff]
  %v112 = vld [vmem:[%s1 + $0x8] sm:$0xff]
  %v113 = vld [vmem:[%s1 + $0x10] sm:$0xff]
  %v114 = vld [vmem:[%s1 + $0x18] sm:$0xff]
  %v115 = vld [vmem:[%s1 + $0x20] sm:$0xff]
  %v116 = vld [vmem:[%s1 + $0x28] sm:$0xff]
  %v117 = vld [vmem:[%s1 + $0x30] sm:$0xff]
  %v118 = vld [vmem:[%s1 + $0x38] sm:$0xff]
  %v119 = vld [vmem:[%s1 + $0x40] sm:$0xff]
  %v120 = vld [vmem:[%s1 + $0x48] sm:$0xff]
  %v121 = vld [vmem:[%s1 + $0x50] sm:$0xff]
  %v122 = vld [vmem:[%s1 + $0x58] sm:$0xff]
  %v123 = vld [vmem:[%s1 + $0x60] sm:$0xff]
  %v124 = vld [vmem:[%s1 + $0x68] sm:$0xff]
  %v125 = vld [vmem:[%s1 + $0x70] sm:$0xff]
  %v126 = vld [vmem:[%s1 + $0x78] sm:$0xff]
  %v127 = vld [vmem:[%s1 + $0x80] sm:$0xff]
  %v128 = vld [vmem:[%s1 + $0x88] sm:$0xff]
  %v129 = vld [vmem:[%s1 + $0x90] sm:$0xff]
  %v130 = vld [vmem:[%s1 + $0x98] sm:$0xff]
  %v131 = vld [vmem:[%s1 + $0xa0] sm:$0xff]
  %v132 = vld [vmem:[%s1 + $0xa8] sm:$0xff]
  %v133 = vld [vmem:[%s1 + $0xb0] sm:$0xff]
  %v134 = vld [vmem:[%s1 + $0xb8] sm:$0xff]
  %v135 = vld [vmem:[%s1 + $0xc0] sm:$0xff]
  %v136 = vld [vmem:[%s1 + $0xc8] sm:$0xff]
  %v137 = vld [vmem:[%s1 + $0xd0] sm:$0xff]
  %v138 = vld [vmem:[%s1 + $0xd8] sm:$0xff]
  %v139 = vld [vmem:[%s1 + $0xe0] sm:$0xff]
  %v140 = vld [vmem:[%s1 + $0xe8] sm:$0xff]
  %v141 = vld [vmem:[%s1 + $0xf0] sm:$0xff]
  %v142 = vld [vmem:[%s1 + $0xf8] sm:$0xff]
  %v143 = vld [vmem:[%s1 + $0x100] sm:$0xff]
  %v144 = vld [vmem:[%s1 + $0x108] sm:$0xff]
  %v145 = vld [vmem:[%s1 + $0x110] sm:$0xff]
  %v146 = vld [vmem:[%s1 + $0x118] sm:$0xff]
  %v147 = vld [vmem:[%s1 + $0x120] sm:$0xff]
  %v148 = vld [vmem:[%s1 + $0x128] sm:$0xff]
  %v149 = vld [vmem:[%s1 + $0x130] sm:$0xff]
  %v150 = vld [vmem:[%s1 + $0x138] sm:$0xff]
  %v151 = vld [vmem:[%s1 + $0x140] sm:$0xff]
  %v152 = vld [vmem:[%s1 + $0x148] sm:$0xff]
  %v153 = vld [vmem:[%s1 + $0x150] sm:$0xff]
  %v154 = vld [vmem:[%s1 + $0x158] sm:$0xff]
  %v155 = vld [vmem:[%s1 + $0x160] sm:$0xff]
  %v156 = vld [vmem:[%s1 + $0x168] sm:$0xff]
  %v157 = vld [vmem:[%s1 + $0x170] sm:$0xff]
  %v158 = vld [vmem:[%s1 + $0x178] sm:$0xff]
  %v159 = vld [vmem:[%s1 + $0x180] sm:$0xff]
  %v160 = vld [vmem:[%s1 + $0x188] sm:$0xff]
  %v161 = vld [vmem:[%s1 + $0x190] sm:$0xff]
  %v162 = vld [vmem:[%s1 + $0x198] sm:$0xff]
  %v163 = vld [vmem:[%s1 + $0x1a0] sm:$0xff]
  %v164 = vld [vmem:[%s1 + $0x1a8] sm:$0xff]
  %v165 = vld [vmem:[%s1 + $0x1b0] sm:$0xff]
  %v166 = vld [vmem:[%s1 + $0x1b8] sm:$0xff]
  %v167 = vld [vmem:[%s1 + $0x1c0] sm:$0xff]
  %v168 = vld [vmem:[%s1 + $0x1c8] sm:$0xff]
  %v169 = vld [vmem:[%s1 + $0x1d0] sm:$0xff]
  %v170 = vld [vmem:[%s1 + $0x1d8] sm:$0xff]
  %v171 = vld [vmem:[%s1 + $0x1e0] sm:$0xff]
  %v172 = vld [vmem:[%s1 + $0x1e8] sm:$0xff]
  %v173 = vld [vmem:[%s1 + $0x1f0] sm:$0xff]
  %v174 = vld [vmem:[%s1 + $0x1f8] sm:$0xff]
  %v175 = vpack.c.bf16 %v112, %v111
  %v176 = vpack.c.bf16 %v114, %v113
  %v177 = vpack.c.bf16 %v116, %v115
  %v178 = vpack.c.bf16 %v118, %v117
  %v179 = vpack.c.bf16 %v120, %v119
  %v180 = vpack.c.bf16 %v122, %v121
  %v181 = vpack.c.bf16 %v124, %v123
  %v182 = vpack.c.bf16 %v126, %v125
  %v183 = vpack.c.bf16 %v128, %v127
  %v184 = vpack.c.bf16 %v130, %v129
  %v185 = vpack.c.bf16 %v132, %v131
  %v186 = vpack.c.bf16 %v134, %v133
  %v187 = vpack.c.bf16 %v136, %v135
  %v188 = vpack.c.bf16 %v138, %v137
  %v189 = vpack.c.bf16 %v140, %v139
  %v190 = vpack.c.bf16 %v142, %v141
  %v191 = vpack.c.bf16 %v144, %v143
  %v192 = vpack.c.bf16 %v146, %v145
  %v193 = vpack.c.bf16 %v148, %v147
  %v194 = vpack.c.bf16 %v150, %v149
  %v195 = vpack.c.bf16 %v152, %v151
  %v196 = vpack.c.bf16 %v154, %v153
  %v197 = vpack.c.bf16 %v156, %v155
  %v198 = vpack.c.bf16 %v158, %v157
  %v199 = vpack.c.bf16 %v160, %v159
  %v200 = vpack.c.bf16 %v162, %v161
  %v201 = vpack.c.bf16 %v164, %v163
  %v202 = vpack.c.bf16 %v166, %v165
  %v203 = vpack.c.bf16 %v168, %v167
  %v204 = vpack.c.bf16 %v170, %v169
  %v205 = vpack.c.bf16 %v172, %v171
  %v206 = vpack.c.bf16 %v174, %v173
  %207 = vmatprep.subr.bf16.mxu0 0
  %208 = vmatpush1.bf16.msra.mxu0 %v182
  %209 = vmatprep.subr.bf16.mxu0 0
  %210 = vmatpush1.bf16.msra.mxu0 %v181
  %211 = vmatprep.subr.bf16.mxu0 0
  %212 = vmatpush1.bf16.msra.mxu0 %v180
  %213 = vmatprep.subr.bf16.mxu0 0
  %214 = vmatpush1.bf16.msra.mxu0 %v179
  %215 = vmatprep.subr.bf16.mxu0 0
  %216 = vmatpush1.bf16.msra.mxu0 %v178
  %217 = vmatprep.subr.bf16.mxu0 0
  %218 = vmatpush1.bf16.msra.mxu0 %v177
  %219 = vmatprep.subr.bf16.mxu0 0
  %220 = vmatpush1.bf16.msra.mxu0 %v176
  %221 = vmatprep.subr.bf16.mxu0 0
  %222 = vmatpush1.bf16.msra.mxu0 %v175
  %223 = vmatprep.subr.bf16.mxu0 0
  %224 = vmatpush2.bf16.msra.mxu0 %v190
  %225 = vmatprep.subr.bf16.mxu0 0
  %226 = vmatpush2.bf16.msra.mxu0 %v189
  %227 = vmatprep.subr.bf16.mxu0 0
  %228 = vmatpush2.bf16.msra.mxu0 %v188
  %229 = vmatprep.subr.bf16.mxu0 0
  %230 = vmatpush2.bf16.msra.mxu0 %v187
  %231 = vmatprep.subr.bf16.mxu0 0
  %232 = vmatpush2.bf16.msra.mxu0 %v186
  %233 = vmatprep.subr.bf16.mxu0 0
  %234 = vmatpush2.bf16.msra.mxu0 %v185
  %235 = vmatprep.subr.bf16.mxu0 0
  %236 = vmatpush2.bf16.msra.mxu0 %v184
  %237 = vmatprep.subr.bf16.mxu0 0
  %238 = vmatpush2.bf16.msra.mxu0 %v183
  %239 = vmatprep.mubr.bf16.mxu0 %v80
  %240 = vmatmul.mubr.bf16.gmra.mxu0 %v79
  %v241 = vpop.f32.mrf.mxu0
  %v242 = vadd.f32 0.0, %v241
  %v243 = vpop.f32.mrf.mxu0
  %v244 = vpop.f32.mrf.mxu0
  %v245 = vadd.f32 0.0, %v244
  %v246 = vpop.f32.mrf.mxu0
  %247 = vmatprep.mubr.bf16.mxu0 %v84
  %248 = vmatmul.mubr.bf16.gmra.mxu0 %v83
  %v249 = vpop.f32.mrf.mxu0
  %v250 = vadd.f32 0.0, %v249
  %v251 = vpop.f32.mrf.mxu0
  %v252 = vpop.f32.mrf.mxu0
  %v253 = vadd.f32 0.0, %v252
  %v254 = vpop.f32.mrf.mxu0
  %255 = vmatprep.mubr.bf16.mxu0 %v88
  %256 = vmatmul.mubr.bf16.gmra.mxu0 %v87
  %v257 = vpop.f32.mrf.mxu0
  %v258 = vadd.f32 0.0, %v257
  %v259 = vpop.f32.mrf.mxu0
  %v260 = vpop.f32.mrf.mxu0
  %v261 = vadd.f32 0.0, %v260
  %v262 = vpop.f32.mrf.mxu0
  %263 = vmatprep.mubr.bf16.mxu0 %v92
  %264 = vmatmul.mubr.bf16.gmra.mxu0 %v91
  %v265 = vpop.f32.mrf.mxu0
  %v266 = vadd.f32 0.0, %v265
  %v267 = vpop.f32.mrf.mxu0
  %v268 = vpop.f32.mrf.mxu0
  %v269 = vadd.f32 0.0, %v268
  %v270 = vpop.f32.mrf.mxu0
  %271 = vmatprep.mubr.bf16.mxu0 %v96
  %272 = vmatmul.mubr.bf16.gmra.mxu0 %v95
  %v273 = vpop.f32.mrf.mxu0
  %v274 = vadd.f32 0.0, %v273
  %v275 = vpop.f32.mrf.mxu0
  %v276 = vpop.f32.mrf.mxu0
  %v277 = vadd.f32 0.0, %v276
  %v278 = vpop.f32.mrf.mxu0
  %279 = vmatprep.mubr.bf16.mxu0 %v100
  %280 = vmatmul.mubr.bf16.gmra.mxu0 %v99
  %v281 = vpop.f32.mrf.mxu0
  %v282 = vadd.f32 0.0, %v281
  %v283 = vpop.f32.mrf.mxu0
  %v284 = vpop.f32.mrf.mxu0
  %v285 = vadd.f32 0.0, %v284
  %v286 = vpop.f32.mrf.mxu0
  %287 = vmatprep.mubr.bf16.mxu0 %v104
  %288 = vmatmul.mubr.bf16.gmra.mxu0 %v103
  %v289 = vpop.f32.mrf.mxu0
  %v290 = vadd.f32 0.0, %v289
  %v291 = vpop.f32.mrf.mxu0
  %v292 = vpop.f32.mrf.mxu0
  %v293 = vadd.f32 0.0, %v292
  %v294 = vpop.f32.mrf.mxu0
  %295 = vmatprep.mubr.bf16.mxu0 %v108
  %296 = vmatmul.mubr.bf16.gmra.mxu0 %v107
  %v297 = vpop.f32.mrf.mxu0
  %v298 = vadd.f32 0.0, %v297
  %v299 = vpop.f32.mrf.mxu0
  %v300 = vpop.f32.mrf.mxu0
  %v301 = vadd.f32 0.0, %v300
  %v302 = vpop.f32.mrf.mxu0
  %303 = vdwg.mxu0
  %304 = vmatprep.subr.bf16.mxu0 0
  %305 = vmatpush1.bf16.msra.mxu0 %v198
  %306 = vmatprep.subr.bf16.mxu0 0
  %307 = vmatpush1.bf16.msra.mxu0 %v197
  %308 = vmatprep.subr.bf16.mxu0 0
  %309 = vmatpush1.bf16.msra.mxu0 %v196
  %310 = vmatprep.subr.bf16.mxu0 0
  %311 = vmatpush1.bf16.msra.mxu0 %v195
  %312 = vmatprep.subr.bf16.mxu0 0
  %313 = vmatpush1.bf16.msra.mxu0 %v194
  %314 = vmatprep.subr.bf16.mxu0 0
  %315 = vmatpush1.bf16.msra.mxu0 %v193
  %316 = vmatprep.subr.bf16.mxu0 0
  %317 = vmatpush1.bf16.msra.mxu0 %v192
  %318 = vmatprep.subr.bf16.mxu0 0
  %319 = vmatpush1.bf16.msra.mxu0 %v191
  %320 = vmatprep.subr.bf16.mxu0 0
  %321 = vmatpush2.bf16.msra.mxu0 %v206
  %322 = vmatprep.subr.bf16.mxu0 0
  %323 = vmatpush2.bf16.msra.mxu0 %v205
  %324 = vmatprep.subr.bf16.mxu0 0
  %325 = vmatpush2.bf16.msra.mxu0 %v204
  %326 = vmatprep.subr.bf16.mxu0 0
  %327 = vmatpush2.bf16.msra.mxu0 %v203
  %328 = vmatprep.subr.bf16.mxu0 0
  %329 = vmatpush2.bf16.msra.mxu0 %v202
  %330 = vmatprep.subr.bf16.mxu0 0
  %331 = vmatpush2.bf16.msra.mxu0 %v201
  %332 = vmatprep.subr.bf16.mxu0 0
  %333 = vmatpush2.bf16.msra.mxu0 %v200
  %334 = vmatprep.subr.bf16.mxu0 0
  %335 = vmatpush2.bf16.msra.mxu0 %v199
  %336 = vmatprep.mubr.bf16.mxu0 %v82
  %337 = vmatmul.mubr.bf16.gmra.mxu0 %v81
  %v338 = vpop.f32.mrf.mxu0
  %v339 = vadd.f32 %v242, %v338
  %v340 = vpop.f32.mrf.mxu0
  %v341 = vpop.f32.mrf.mxu0
  %v342 = vadd.f32 %v245, %v341
  %v343 = vpop.f32.mrf.mxu0
  %344 = vmatprep.mubr.bf16.mxu0 %v86
  %345 = vmatmul.mubr.bf16.gmra.mxu0 %v85
  %v346 = vpop.f32.mrf.mxu0
  %v347 = vadd.f32 %v250, %v346
  %v348 = vpop.f32.mrf.mxu0
  %v349 = vpop.f32.mrf.mxu0
  %v350 = vadd.f32 %v253, %v349
  %v351 = vpop.f32.mrf.mxu0
  %352 = vmatprep.mubr.bf16.mxu0 %v90
  %353 = vmatmul.mubr.bf16.gmra.mxu0 %v89
  %v354 = vpop.f32.mrf.mxu0
  %v355 = vadd.f32 %v258, %v354
  %v356 = vpop.f32.mrf.mxu0
  %v357 = vpop.f32.mrf.mxu0
  %v358 = vadd.f32 %v261, %v357
  %v359 = vpop.f32.mrf.mxu0
  %360 = vmatprep.mubr.bf16.mxu0 %v94
  %361 = vmatmul.mubr.bf16.gmra.mxu0 %v93
  %v362 = vpop.f32.mrf.mxu0
  %v363 = vadd.f32 %v266, %v362
  %v364 = vpop.f32.mrf.mxu0
  %v365 = vpop.f32.mrf.mxu0
  %v366 = vadd.f32 %v269, %v365
  %v367 = vpop.f32.mrf.mxu0
  %368 = vmatprep.mubr.bf16.mxu0 %v98
  %369 = vmatmul.mubr.bf16.gmra.mxu0 %v97
  %v370 = vpop.f32.mrf.mxu0
  %v371 = vadd.f32 %v274, %v370
  %v372 = vpop.f32.mrf.mxu0
  %v373 = vpop.f32.mrf.mxu0
  %v374 = vadd.f32 %v277, %v373
  %v375 = vpop.f32.mrf.mxu0
  %376 = vmatprep.mubr.bf16.mxu0 %v102
  %377 = vmatmul.mubr.bf16.gmra.mxu0 %v101
  %v378 = vpop.f32.mrf.mxu0
  %v379 = vadd.f32 %v282, %v378
  %v380 = vpop.f32.mrf.mxu0
  %v381 = vpop.f32.mrf.mxu0
  %v382 = vadd.f32 %v285, %v381
  %v383 = vpop.f32.mrf.mxu0
  %384 = vmatprep.mubr.bf16.mxu0 %v106
  %385 = vmatmul.mubr.bf16.gmra.mxu0 %v105
  %v386 = vpop.f32.mrf.mxu0
  %v387 = vadd.f32 %v290, %v386
  %v388 = vpop.f32.mrf.mxu0
  %v389 = vpop.f32.mrf.mxu0
  %v390 = vadd.f32 %v293, %v389
  %v391 = vpop.f32.mrf.mxu0
  %392 = vmatprep.mubr.bf16.mxu0 %v110
  %393 = vmatmul.mubr.bf16.gmra.mxu0 %v109
  %v394 = vpop.f32.mrf.mxu0
  %v395 = vadd.f32 %v298, %v394
  %v396 = vpop.f32.mrf.mxu0
  %v397 = vpop.f32.mrf.mxu0
  %v398 = vadd.f32 %v301, %v397
  %v399 = vpop.f32.mrf.mxu0
  %400 = vdwg.mxu0
  %v401 = vld [vmem:[%s2] sm:$0xff]
  %v402 = vld [vmem:[%s2 + $0x8] sm:$0xff]
  %v403 = vld [vmem:[%s2 + $0x10] sm:$0xff]
  %v404 = vld [vmem:[%s2 + $0x18] sm:$0xff]
  %v405 = vld [vmem:[%s2 + $0x20] sm:$0xff]
  %v406 = vld [vmem:[%s2 + $0x28] sm:$0xff]
  %v407 = vld [vmem:[%s2 + $0x30] sm:$0xff]
  %v408 = vld [vmem:[%s2 + $0x38] sm:$0xff]
  %v409 = vld [vmem:[%s2 + $0x40] sm:$0xff]
  %v410 = vld [vmem:[%s2 + $0x48] sm:$0xff]
  %v411 = vld [vmem:[%s2 + $0x50] sm:$0xff]
  %v412 = vld [vmem:[%s2 + $0x58] sm:$0xff]
  %v413 = vld [vmem:[%s2 + $0x60] sm:$0xff]
  %v414 = vld [vmem:[%s2 + $0x68] sm:$0xff]
  %v415 = vld [vmem:[%s2 + $0x70] sm:$0xff]
  %v416 = vld [vmem:[%s2 + $0x78] sm:$0xff]
  %418 = vset.pattern.permute.xlu0 0
  %419 = vperm.xlu0 %418, %v401
  %v420 = vpop.permute.xlu0 %419
  %423 = vset.pattern.permute.xlu0 0
  %424 = vperm.xlu0 %423, %v402
  %v425 = vpop.permute.xlu0 %424
  %428 = vset.pattern.permute.xlu0 0
  %429 = vperm.xlu0 %428, %v403
  %v430 = vpop.permute.xlu0 %429
  %433 = vset.pattern.permute.xlu0 0
  %434 = vperm.xlu0 %433, %v404
  %v435 = vpop.permute.xlu0 %434
  %438 = vset.pattern.permute.xlu0 0
  %439 = vperm.xlu0 %438, %v405
  %v440 = vpop.permute.xlu0 %439
  %443 = vset.pattern.permute.xlu0 0
  %444 = vperm.xlu0 %443, %v406
  %v445 = vpop.permute.xlu0 %444
  %448 = vset.pattern.permute.xlu0 0
  %449 = vperm.xlu0 %448, %v407
  %v450 = vpop.permute.xlu0 %449
  %453 = vset.pattern.permute.xlu0 0
  %454 = vperm.xlu0 %453, %v408
  %v455 = vpop.permute.xlu0 %454
  %458 = vset.pattern.permute.xlu0 0
  %459 = vperm.xlu0 %458, %v409
  %v460 = vpop.permute.xlu0 %459
  %463 = vset.pattern.permute.xlu0 0
  %464 = vperm.xlu0 %463, %v410
  %v465 = vpop.permute.xlu0 %464
  %468 = vset.pattern.permute.xlu0 0
  %469 = vperm.xlu0 %468, %v411
  %v470 = vpop.permute.xlu0 %469
  %473 = vset.pattern.permute.xlu0 0
  %474 = vperm.xlu0 %473, %v412
  %v475 = vpop.permute.xlu0 %474
  %478 = vset.pattern.permute.xlu0 0
  %479 = vperm.xlu0 %478, %v413
  %v480 = vpop.permute.xlu0 %479
  %483 = vset.pattern.permute.xlu0 0
  %484 = vperm.xlu0 %483, %v414
  %v485 = vpop.permute.xlu0 %484
  %488 = vset.pattern.permute.xlu0 0
  %489 = vperm.xlu0 %488, %v415
  %v490 = vpop.permute.xlu0 %489
  %493 = vset.pattern.permute.xlu0 0
  %494 = vperm.xlu0 %493, %v416
  %v495 = vpop.permute.xlu0 %494
  %v497 = vmul.f32 %v420, %v339
  %v498 = vmul.f32 %v425, %v342
  %v499 = vmul.f32 %v430, %v347
  %v500 = vmul.f32 %v435, %v350
  %v501 = vmul.f32 %v440, %v355
  %v502 = vmul.f32 %v445, %v358
  %v503 = vmul.f32 %v450, %v363
  %v504 = vmul.f32 %v455, %v366
  %v505 = vmul.f32 %v460, %v371
  %v506 = vmul.f32 %v465, %v374
  %v507 = vmul.f32 %v470, %v379
  %v508 = vmul.f32 %v475, %v382
  %v509 = vmul.f32 %v480, %v387
  %v510 = vmul.f32 %v485, %v390
  %v511 = vmul.f32 %v490, %v395
  %v512 = vmul.f32 %v495, %v398
  %vm513 = vcmask 130048
  %514 = vst.msk [vmem:[%s3] sm:$0xff] %vm513, %v497
  %515 = vst.msk [vmem:[%s3 + $0x8] sm:$0xff] %vm513, %v498
  %516 = vst.msk [vmem:[%s3 + $0x10] sm:$0xff] %vm513, %v499
  %517 = vst.msk [vmem:[%s3 + $0x18] sm:$0xff] %vm513, %v500
  %518 = vst.msk [vmem:[%s3 + $0x20] sm:$0xff] %vm513, %v501
  %519 = vst.msk [vmem:[%s3 + $0x28] sm:$0xff] %vm513, %v502
  %520 = vst.msk [vmem:[%s3 + $0x30] sm:$0xff] %vm513, %v503
  %521 = vst.msk [vmem:[%s3 + $0x38] sm:$0xff] %vm513, %v504
  %522 = vst.msk [vmem:[%s3 + $0x40] sm:$0xff] %vm513, %v505
  %523 = vst.msk [vmem:[%s3 + $0x48] sm:$0xff] %vm513, %v506
  %524 = vst.msk [vmem:[%s3 + $0x50] sm:$0xff] %vm513, %v507
  %525 = vst.msk [vmem:[%s3 + $0x58] sm:$0xff] %vm513, %v508
  %526 = vst.msk [vmem:[%s3 + $0x60] sm:$0xff] %vm513, %v509
  %527 = vst.msk [vmem:[%s3 + $0x68] sm:$0xff] %vm513, %v510
  %528 = vst.msk [vmem:[%s3 + $0x70] sm:$0xff] %vm513, %v511
  %529 = vst.msk [vmem:[%s3 + $0x78] sm:$0xff] %vm513, %v512
  // Predicated region
  $region14: #{gcn_forward.8} parent=0 // pred_check
    _
  $region15: #{gcn_forward.8} parent=0 // pred_check_branch
    %531 = sbr.rel (0) target = $region17
  $region16: #{gcn_forward.8} parent=0 // pred_region
    _
  $region17: #{gcn_forward.8} parent=0 // pred_fallthru
    _
  // Predicated region
  $region18: #{gcn_forward.8} parent=0 // pred_check
    _
  $region19: #{gcn_forward.8} parent=0 // pred_check_branch
    %533 = sbr.rel (0) target = $region21
  $region20: #{gcn_forward.8} parent=0 // pred_region
    _
  $region21: #{gcn_forward.8} parent=0 // pred_fallthru
    _

// kernel: gcn_forward.9
$region0: #{gcn_forward.9}
  #allocation0 [shape = 'u32[]', space=smem, size = 0x4, offset = 0x4, fixed_abs, tag = 'smem constant byte address 0x4 - core index']
  #allocation1 [shape = 'u32[144,128]{1,0:T(1,128)}', space=vmem, size = 0x12000, scoped, tag = 'internal scratch']
  #allocation2 [shape = 'f32[128,16]{1,0:T(8,128)}', space=vmem, size = 0x10000, scoped, tag = 'scratch operand']
  %s0 = inlined_call_operand.vmem [shape: f32[128,128], index: 0, kind: input, shape index: {}]
  %s1 = inlined_call_operand.vmem [shape: f32[128,16], index: 1, kind: input, shape index: {}, may-alias: {1,2}]
  %s2 = inlined_call_operand.vmem [shape: f32[128,16], index: 2, kind: input, shape index: {}, may-alias: {1,2}]
  %s3 = inlined_call_operand.vmem [shape: f32[128,1], index: 3, kind: input, shape index: {}]
  %s4 = inlined_call_operand.vmem [shape: f32[128,16], index: 4, kind: output, shape index: {}]
  %s5 = sld [smem:[#allocation0]]
  $region34: #{gcn_forward.9} parent=0
    _
  %s7 = ssub.s32 1, %s5
  %s8 = scalar_select 0, %s7, %s5
  // Predicated region
  $region2: #{gcn_forward.9} parent=0 // pred_check
    _
  $region3: #{gcn_forward.9} parent=0 // pred_check_branch
    %10 = sbr.rel (0) target = $region5
  $region4: #{gcn_forward.9} parent=0 // pred_region
    _
  $region5: #{gcn_forward.9} parent=0 // pred_fallthru
    _
  // Predicated region
  $region6: #{gcn_forward.9} parent=0 // pred_check
    _
  $region7: #{gcn_forward.9} parent=0 // pred_check_branch
    %12 = sbr.rel (0) target = $region9
  $region8: #{gcn_forward.9} parent=0 // pred_region
    _
  $region9: #{gcn_forward.9} parent=0 // pred_fallthru
    _
  // Predicated region
  $region10: #{gcn_forward.9} parent=0 // pred_check
    _
  $region11: #{gcn_forward.9} parent=0 // pred_check_branch
    %14 = sbr.rel (0) target = $region13
  $region12: #{gcn_forward.9} parent=0 // pred_region
    _
  $region13: #{gcn_forward.9} parent=0 // pred_fallthru
    _
  // Predicated region
  $region14: #{gcn_forward.9} parent=0 // pred_check
    _
  $region15: #{gcn_forward.9} parent=0 // pred_check_branch
    %16 = sbr.rel (0) target = $region17
  $region16: #{gcn_forward.9} parent=0 // pred_region
    _
  $region17: #{gcn_forward.9} parent=0 // pred_fallthru
    _
  %p18 = scmp.eq.s32.totalorder 0, 0
  // Predicated region
  $region18: #{gcn_forward.9} parent=0 // pred_check
    %p19 = pneg %p18
  $region19: #{gcn_forward.9} parent=0 // pred_check_branch
    %21 = sbr.rel (%p19) target = $region21
  $region20: #{gcn_forward.9} parent=0 // pred_region
    %v22 = vld [vmem:[%s2] sm:$0xff]
    %v23 = vld [vmem:[%s2 + $0x8] sm:$0xff]
    %v24 = vld [vmem:[%s2 + $0x10] sm:$0xff]
    %v25 = vld [vmem:[%s2 + $0x18] sm:$0xff]
    %v26 = vld [vmem:[%s2 + $0x20] sm:$0xff]
    %v27 = vld [vmem:[%s2 + $0x28] sm:$0xff]
    %v28 = vld [vmem:[%s2 + $0x30] sm:$0xff]
    %v29 = vld [vmem:[%s2 + $0x38] sm:$0xff]
    %v30 = vld [vmem:[%s2 + $0x40] sm:$0xff]
    %v31 = vld [vmem:[%s2 + $0x48] sm:$0xff]
    %v32 = vld [vmem:[%s2 + $0x50] sm:$0xff]
    %v33 = vld [vmem:[%s2 + $0x58] sm:$0xff]
    %v34 = vld [vmem:[%s2 + $0x60] sm:$0xff]
    %v35 = vld [vmem:[%s2 + $0x68] sm:$0xff]
    %v36 = vld [vmem:[%s2 + $0x70] sm:$0xff]
    %v37 = vld [vmem:[%s2 + $0x78] sm:$0xff]
    %vm38 = vcmask 130048
    %39 = vst.msk [vmem:[#allocation2] sm:$0xff] %vm38, %v22
    %40 = vst.msk [vmem:[#allocation2 + $0x8] sm:$0xff] %vm38, %v23
    %41 = vst.msk [vmem:[#allocation2 + $0x10] sm:$0xff] %vm38, %v24
    %42 = vst.msk [vmem:[#allocation2 + $0x18] sm:$0xff] %vm38, %v25
    %43 = vst.msk [vmem:[#allocation2 + $0x20] sm:$0xff] %vm38, %v26
    %44 = vst.msk [vmem:[#allocation2 + $0x28] sm:$0xff] %vm38, %v27
    %45 = vst.msk [vmem:[#allocation2 + $0x30] sm:$0xff] %vm38, %v28
    %46 = vst.msk [vmem:[#allocation2 + $0x38] sm:$0xff] %vm38, %v29
    %47 = vst.msk [vmem:[#allocation2 + $0x40] sm:$0xff] %vm38, %v30
    %48 = vst.msk [vmem:[#allocation2 + $0x48] sm:$0xff] %vm38, %v31
    %49 = vst.msk [vmem:[#allocation2 + $0x50] sm:$0xff] %vm38, %v32
    %50 = vst.msk [vmem:[#allocation2 + $0x58] sm:$0xff] %vm38, %v33
    %51 = vst.msk [vmem:[#allocation2 + $0x60] sm:$0xff] %vm38, %v34
    %52 = vst.msk [vmem:[#allocation2 + $0x68] sm:$0xff] %vm38, %v35
    %53 = vst.msk [vmem:[#allocation2 + $0x70] sm:$0xff] %vm38, %v36
    %54 = vst.msk [vmem:[#allocation2 + $0x78] sm:$0xff] %vm38, %v37
  $region21: #{gcn_forward.9} parent=0 // pred_fallthru
    _
  %v55 = vld [vmem:[%s0] sm:$0xff]
  %v56 = vld [vmem:[%s0 + $0x8] sm:$0xff]
  %v57 = vld [vmem:[%s0 + $0x10] sm:$0xff]
  %v58 = vld [vmem:[%s0 + $0x18] sm:$0xff]
  %v59 = vld [vmem:[%s0 + $0x20] sm:$0xff]
  %v60 = vld [vmem:[%s0 + $0x28] sm:$0xff]
  %v61 = vld [vmem:[%s0 + $0x30] sm:$0xff]
  %v62 = vld [vmem:[%s0 + $0x38] sm:$0xff]
  %v63 = vld [vmem:[%s0 + $0x40] sm:$0xff]
  %v64 = vld [vmem:[%s0 + $0x48] sm:$0xff]
  %v65 = vld [vmem:[%s0 + $0x50] sm:$0xff]
  %v66 = vld [vmem:[%s0 + $0x58] sm:$0xff]
  %v67 = vld [vmem:[%s0 + $0x60] sm:$0xff]
  %v68 = vld [vmem:[%s0 + $0x68] sm:$0xff]
  %v69 = vld [vmem:[%s0 + $0x70] sm:$0xff]
  %v70 = vld [vmem:[%s0 + $0x78] sm:$0xff]
  %v71 = vpack.c.bf16 %v56, %v55
  %v72 = vpack.c.bf16 %v58, %v57
  %v73 = vpack.c.bf16 %v60, %v59
  %v74 = vpack.c.bf16 %v62, %v61
  %v75 = vpack.c.bf16 %v64, %v63
  %v76 = vpack.c.bf16 %v66, %v65
  %v77 = vpack.c.bf16 %v68, %v67
  %v78 = vpack.c.bf16 %v70, %v69
  %v79 = vld [vmem:[%s1] sm:$0xff]
  %v80 = vld [vmem:[%s1 + $0x8] sm:$0xff]
  %v81 = vld [vmem:[%s1 + $0x10] sm:$0xff]
  %v82 = vld [vmem:[%s1 + $0x18] sm:$0xff]
  %v83 = vld [vmem:[%s1 + $0x20] sm:$0xff]
  %v84 = vld [vmem:[%s1 + $0x28] sm:$0xff]
  %v85 = vld [vmem:[%s1 + $0x30] sm:$0xff]
  %v86 = vld [vmem:[%s1 + $0x38] sm:$0xff]
  %v87 = vld [vmem:[%s1 + $0x40] sm:$0xff]
  %v88 = vld [vmem:[%s1 + $0x48] sm:$0xff]
  %v89 = vld [vmem:[%s1 + $0x50] sm:$0xff]
  %v90 = vld [vmem:[%s1 + $0x58] sm:$0xff]
  %v91 = vld [vmem:[%s1 + $0x60] sm:$0xff]
  %v92 = vld [vmem:[%s1 + $0x68] sm:$0xff]
  %v93 = vld [vmem:[%s1 + $0x70] sm:$0xff]
  %v94 = vld [vmem:[%s1 + $0x78] sm:$0xff]
  %v95 = vpack.c.bf16 %v80, %v79
  %v96 = vpack.c.bf16 %v82, %v81
  %v97 = vpack.c.bf16 %v84, %v83
  %v98 = vpack.c.bf16 %v86, %v85
  %v99 = vpack.c.bf16 %v88, %v87
  %v100 = vpack.c.bf16 %v90, %v89
  %v101 = vpack.c.bf16 %v92, %v91
  %v102 = vpack.c.bf16 %v94, %v93
  %v103 = vld [vmem:[#allocation2] sm:$0xff]
  %v104 = vld [vmem:[#allocation2 + $0x8] sm:$0xff]
  %v105 = vld [vmem:[#allocation2 + $0x10] sm:$0xff]
  %v106 = vld [vmem:[#allocation2 + $0x18] sm:$0xff]
  %v107 = vld [vmem:[#allocation2 + $0x20] sm:$0xff]
  %v108 = vld [vmem:[#allocation2 + $0x28] sm:$0xff]
  %v109 = vld [vmem:[#allocation2 + $0x30] sm:$0xff]
  %v110 = vld [vmem:[#allocation2 + $0x38] sm:$0xff]
  %v111 = vld [vmem:[#allocation2 + $0x40] sm:$0xff]
  %v112 = vld [vmem:[#allocation2 + $0x48] sm:$0xff]
  %v113 = vld [vmem:[#allocation2 + $0x50] sm:$0xff]
  %v114 = vld [vmem:[#allocation2 + $0x58] sm:$0xff]
  %v115 = vld [vmem:[#allocation2 + $0x60] sm:$0xff]
  %v116 = vld [vmem:[#allocation2 + $0x68] sm:$0xff]
  %v117 = vld [vmem:[#allocation2 + $0x70] sm:$0xff]
  %v118 = vld [vmem:[#allocation2 + $0x78] sm:$0xff]
  %119 = vxpose.xlu0.c.b16.start [1/8] %v71, 128
  %120 = vxpose.xlu0.c.b16.cont [2/8] %v72, 128
  %121 = vxpose.xlu0.c.b16.cont [3/8] %v73, 128
  %122 = vxpose.xlu0.c.b16.cont [4/8] %v74, 128
  %123 = vxpose.xlu0.c.b16.cont [5/8] %v75, 128
  %124 = vxpose.xlu0.c.b16.cont [6/8] %v76, 128
  %125 = vxpose.xlu0.c.b16.cont [7/8] %v77, 128
  %126 = vxpose.xlu0.c.b16.end [8/8] %v78, 128
  %v127 = vpop.trf.xlu0
  %v128 = vpop.trf.xlu0
  %v129 = vpop.trf.xlu0
  %v130 = vpop.trf.xlu0
  %v131 = vpop.trf.xlu0
  %v132 = vpop.trf.xlu0
  %v133 = vpop.trf.xlu0
  %v134 = vpop.trf.xlu0
  %135 = vmatprep.subr.bf16.mxu0 0
  %136 = vmatpush1.bf16.msra.mxu0 %v102
  %137 = vmatprep.subr.bf16.mxu0 0
  %138 = vmatpush1.bf16.msra.mxu0 %v101
  %139 = vmatprep.subr.bf16.mxu0 0
  %140 = vmatpush1.bf16.msra.mxu0 %v100
  %141 = vmatprep.subr.bf16.mxu0 0
  %142 = vmatpush1.bf16.msra.mxu0 %v99
  %143 = vmatprep.subr.bf16.mxu0 0
  %144 = vmatpush1.bf16.msra.mxu0 %v98
  %145 = vmatprep.subr.bf16.mxu0 0
  %146 = vmatpush1.bf16.msra.mxu0 %v97
  %147 = vmatprep.subr.bf16.mxu0 0
  %148 = vmatpush1.bf16.msra.mxu0 %v96
  %149 = vmatprep.subr.bf16.mxu0 0
  %150 = vmatpush1.bf16.msra.mxu0 %v95
  %151 = vmatprep.subr.bf16.mxu0 0
  %152 = vmatpush2.bf16.msra.mxu0 0
  %153 = vmatprep.subr.bf16.mxu0 0
  %154 = vmatpush2.bf16.msra.mxu0 0
  %155 = vmatprep.subr.bf16.mxu0 0
  %156 = vmatpush2.bf16.msra.mxu0 0
  %157 = vmatprep.subr.bf16.mxu0 0
  %158 = vmatpush2.bf16.msra.mxu0 0
  %159 = vmatprep.subr.bf16.mxu0 0
  %160 = vmatpush2.bf16.msra.mxu0 0
  %161 = vmatprep.subr.bf16.mxu0 0
  %162 = vmatpush2.bf16.msra.mxu0 0
  %163 = vmatprep.subr.bf16.mxu0 0
  %164 = vmatpush2.bf16.msra.mxu0 0
  %165 = vmatprep.subr.bf16.mxu0 0
  %166 = vmatpush2.bf16.msra.mxu0 0
  %167 = vmatprep.mubr.bf16.mxu0 0
  %168 = vmatmul.mubr.bf16.gmra.mxu0 %v127
  %v169 = vpop.f32.mrf.mxu0
  %v170 = vadd.f32 0.0, %v169
  %v171 = vpop.f32.mrf.mxu0
  %v172 = vpop.f32.mrf.mxu0
  %v173 = vadd.f32 0.0, %v172
  %v174 = vpop.f32.mrf.mxu0
  %175 = vmatprep.mubr.bf16.mxu0 0
  %176 = vmatmul.mubr.bf16.gmra.mxu0 %v128
  %v177 = vpop.f32.mrf.mxu0
  %v178 = vadd.f32 0.0, %v177
  %v179 = vpop.f32.mrf.mxu0
  %v180 = vpop.f32.mrf.mxu0
  %v181 = vadd.f32 0.0, %v180
  %v182 = vpop.f32.mrf.mxu0
  %183 = vmatprep.mubr.bf16.mxu0 0
  %184 = vmatmul.mubr.bf16.gmra.mxu0 %v129
  %v185 = vpop.f32.mrf.mxu0
  %v186 = vadd.f32 0.0, %v185
  %v187 = vpop.f32.mrf.mxu0
  %v188 = vpop.f32.mrf.mxu0
  %v189 = vadd.f32 0.0, %v188
  %v190 = vpop.f32.mrf.mxu0
  %191 = vmatprep.mubr.bf16.mxu0 0
  %192 = vmatmul.mubr.bf16.gmra.mxu0 %v130
  %v193 = vpop.f32.mrf.mxu0
  %v194 = vadd.f32 0.0, %v193
  %v195 = vpop.f32.mrf.mxu0
  %v196 = vpop.f32.mrf.mxu0
  %v197 = vadd.f32 0.0, %v196
  %v198 = vpop.f32.mrf.mxu0
  %199 = vmatprep.mubr.bf16.mxu0 0
  %200 = vmatmul.mubr.bf16.gmra.mxu0 %v131
  %v201 = vpop.f32.mrf.mxu0
  %v202 = vadd.f32 0.0, %v201
  %v203 = vpop.f32.mrf.mxu0
  %v204 = vpop.f32.mrf.mxu0
  %v205 = vadd.f32 0.0, %v204
  %v206 = vpop.f32.mrf.mxu0
  %207 = vmatprep.mubr.bf16.mxu0 0
  %208 = vmatmul.mubr.bf16.gmra.mxu0 %v132
  %v209 = vpop.f32.mrf.mxu0
  %v210 = vadd.f32 0.0, %v209
  %v211 = vpop.f32.mrf.mxu0
  %v212 = vpop.f32.mrf.mxu0
  %v213 = vadd.f32 0.0, %v212
  %v214 = vpop.f32.mrf.mxu0
  %215 = vmatprep.mubr.bf16.mxu0 0
  %216 = vmatmul.mubr.bf16.gmra.mxu0 %v133
  %v217 = vpop.f32.mrf.mxu0
  %v218 = vadd.f32 0.0, %v217
  %v219 = vpop.f32.mrf.mxu0
  %v220 = vpop.f32.mrf.mxu0
  %v221 = vadd.f32 0.0, %v220
  %v222 = vpop.f32.mrf.mxu0
  %223 = vmatprep.mubr.bf16.mxu0 0
  %224 = vmatmul.mubr.bf16.gmra.mxu0 %v134
  %v225 = vpop.f32.mrf.mxu0
  %v226 = vadd.f32 0.0, %v225
  %v227 = vpop.f32.mrf.mxu0
  %v228 = vpop.f32.mrf.mxu0
  %v229 = vadd.f32 0.0, %v228
  %v230 = vpop.f32.mrf.mxu0
  %231 = vdwg.mxu0
  %v232 = vadd.f32 %v103, %v170
  %v233 = vadd.f32 %v104, %v173
  %v234 = vadd.f32 %v105, %v178
  %v235 = vadd.f32 %v106, %v181
  %v236 = vadd.f32 %v107, %v186
  %v237 = vadd.f32 %v108, %v189
  %v238 = vadd.f32 %v109, %v194
  %v239 = vadd.f32 %v110, %v197
  %v240 = vadd.f32 %v111, %v202
  %v241 = vadd.f32 %v112, %v205
  %v242 = vadd.f32 %v113, %v210
  %v243 = vadd.f32 %v114, %v213
  %v244 = vadd.f32 %v115, %v218
  %v245 = vadd.f32 %v116, %v221
  %v246 = vadd.f32 %v117, %v226
  %v247 = vadd.f32 %v118, %v229
  %vm248 = vcmask 130048
  %249 = vst.msk [vmem:[#allocation2] sm:$0xff] %vm248, %v232
  %250 = vst.msk [vmem:[#allocation2 + $0x8] sm:$0xff] %vm248, %v233
  %251 = vst.msk [vmem:[#allocation2 + $0x10] sm:$0xff] %vm248, %v234
  %252 = vst.msk [vmem:[#allocation2 + $0x18] sm:$0xff] %vm248, %v235
  %253 = vst.msk [vmem:[#allocation2 + $0x20] sm:$0xff] %vm248, %v236
  %254 = vst.msk [vmem:[#allocation2 + $0x28] sm:$0xff] %vm248, %v237
  %255 = vst.msk [vmem:[#allocation2 + $0x30] sm:$0xff] %vm248, %v238
  %256 = vst.msk [vmem:[#allocation2 + $0x38] sm:$0xff] %vm248, %v239
  %257 = vst.msk [vmem:[#allocation2 + $0x40] sm:$0xff] %vm248, %v240
  %258 = vst.msk [vmem:[#allocation2 + $0x48] sm:$0xff] %vm248, %v241
  %259 = vst.msk [vmem:[#allocation2 + $0x50] sm:$0xff] %vm248, %v242
  %260 = vst.msk [vmem:[#allocation2 + $0x58] sm:$0xff] %vm248, %v243
  %261 = vst.msk [vmem:[#allocation2 + $0x60] sm:$0xff] %vm248, %v244
  %262 = vst.msk [vmem:[#allocation2 + $0x68] sm:$0xff] %vm248, %v245
  %263 = vst.msk [vmem:[#allocation2 + $0x70] sm:$0xff] %vm248, %v246
  %264 = vst.msk [vmem:[#allocation2 + $0x78] sm:$0xff] %vm248, %v247
  // Predicated region
  $region22: #{gcn_forward.9} parent=0 // pred_check
    %p265 = pneg %p18
  $region23: #{gcn_forward.9} parent=0 // pred_check_branch
    %267 = sbr.rel (%p265) target = $region25
  $region24: #{gcn_forward.9} parent=0 // pred_region
    %v268 = vld [vmem:[%s3] sm:$0xff]
    %v269 = vld [vmem:[%s3 + $0x8] sm:$0xff]
    %v270 = vld [vmem:[%s3 + $0x10] sm:$0xff]
    %v271 = vld [vmem:[%s3 + $0x18] sm:$0xff]
    %v272 = vld [vmem:[%s3 + $0x20] sm:$0xff]
    %v273 = vld [vmem:[%s3 + $0x28] sm:$0xff]
    %v274 = vld [vmem:[%s3 + $0x30] sm:$0xff]
    %v275 = vld [vmem:[%s3 + $0x38] sm:$0xff]
    %v276 = vld [vmem:[%s3 + $0x40] sm:$0xff]
    %v277 = vld [vmem:[%s3 + $0x48] sm:$0xff]
    %v278 = vld [vmem:[%s3 + $0x50] sm:$0xff]
    %v279 = vld [vmem:[%s3 + $0x58] sm:$0xff]
    %v280 = vld [vmem:[%s3 + $0x60] sm:$0xff]
    %v281 = vld [vmem:[%s3 + $0x68] sm:$0xff]
    %v282 = vld [vmem:[%s3 + $0x70] sm:$0xff]
    %v283 = vld [vmem:[%s3 + $0x78] sm:$0xff]
    %v284 = vld [vmem:[#allocation2] sm:$0xff]
    %v285 = vld [vmem:[#allocation2 + $0x8] sm:$0xff]
    %v286 = vld [vmem:[#allocation2 + $0x10] sm:$0xff]
    %v287 = vld [vmem:[#allocation2 + $0x18] sm:$0xff]
    %v288 = vld [vmem:[#allocation2 + $0x20] sm:$0xff]
    %v289 = vld [vmem:[#allocation2 + $0x28] sm:$0xff]
    %v290 = vld [vmem:[#allocation2 + $0x30] sm:$0xff]
    %v291 = vld [vmem:[#allocation2 + $0x38] sm:$0xff]
    %v292 = vld [vmem:[#allocation2 + $0x40] sm:$0xff]
    %v293 = vld [vmem:[#allocation2 + $0x48] sm:$0xff]
    %v294 = vld [vmem:[#allocation2 + $0x50] sm:$0xff]
    %v295 = vld [vmem:[#allocation2 + $0x58] sm:$0xff]
    %v296 = vld [vmem:[#allocation2 + $0x60] sm:$0xff]
    %v297 = vld [vmem:[#allocation2 + $0x68] sm:$0xff]
    %v298 = vld [vmem:[#allocation2 + $0x70] sm:$0xff]
    %v299 = vld [vmem:[#allocation2 + $0x78] sm:$0xff]
    %301 = vset.pattern.permute.xlu0 0
    %302 = vperm.xlu0 %301, %v268
    %v303 = vpop.permute.xlu0 %302
    %306 = vset.pattern.permute.xlu0 0
    %307 = vperm.xlu0 %306, %v269
    %v308 = vpop.permute.xlu0 %307
    %311 = vset.pattern.permute.xlu0 0
    %312 = vperm.xlu0 %311, %v270
    %v313 = vpop.permute.xlu0 %312
    %316 = vset.pattern.permute.xlu0 0
    %317 = vperm.xlu0 %316, %v271
    %v318 = vpop.permute.xlu0 %317
    %321 = vset.pattern.permute.xlu0 0
    %322 = vperm.xlu0 %321, %v272
    %v323 = vpop.permute.xlu0 %322
    %326 = vset.pattern.permute.xlu0 0
    %327 = vperm.xlu0 %326, %v273
    %v328 = vpop.permute.xlu0 %327
    %331 = vset.pattern.permute.xlu0 0
    %332 = vperm.xlu0 %331, %v274
    %v333 = vpop.permute.xlu0 %332
    %336 = vset.pattern.permute.xlu0 0
    %337 = vperm.xlu0 %336, %v275
    %v338 = vpop.permute.xlu0 %337
    %341 = vset.pattern.permute.xlu0 0
    %342 = vperm.xlu0 %341, %v276
    %v343 = vpop.permute.xlu0 %342
    %346 = vset.pattern.permute.xlu0 0
    %347 = vperm.xlu0 %346, %v277
    %v348 = vpop.permute.xlu0 %347
    %351 = vset.pattern.permute.xlu0 0
    %352 = vperm.xlu0 %351, %v278
    %v353 = vpop.permute.xlu0 %352
    %356 = vset.pattern.permute.xlu0 0
    %357 = vperm.xlu0 %356, %v279
    %v358 = vpop.permute.xlu0 %357
    %361 = vset.pattern.permute.xlu0 0
    %362 = vperm.xlu0 %361, %v280
    %v363 = vpop.permute.xlu0 %362
    %366 = vset.pattern.permute.xlu0 0
    %367 = vperm.xlu0 %366, %v281
    %v368 = vpop.permute.xlu0 %367
    %371 = vset.pattern.permute.xlu0 0
    %372 = vperm.xlu0 %371, %v282
    %v373 = vpop.permute.xlu0 %372
    %376 = vset.pattern.permute.xlu0 0
    %377 = vperm.xlu0 %376, %v283
    %v378 = vpop.permute.xlu0 %377
    %v380 = vmul.f32 %v303, %v284
    %v381 = vmul.f32 %v308, %v285
    %v382 = vmul.f32 %v313, %v286
    %v383 = vmul.f32 %v318, %v287
    %v384 = vmul.f32 %v323, %v288
    %v385 = vmul.f32 %v328, %v289
    %v386 = vmul.f32 %v333, %v290
    %v387 = vmul.f32 %v338, %v291
    %v388 = vmul.f32 %v343, %v292
    %v389 = vmul.f32 %v348, %v293
    %v390 = vmul.f32 %v353, %v294
    %v391 = vmul.f32 %v358, %v295
    %v392 = vmul.f32 %v363, %v296
    %v393 = vmul.f32 %v368, %v297
    %v394 = vmul.f32 %v373, %v298
    %v395 = vmul.f32 %v378, %v299
    %396 = vst.msk [vmem:[%s4] sm:$0xff] %vm248, %v380
    %397 = vst.msk [vmem:[%s4 + $0x8] sm:$0xff] %vm248, %v381
    %398 = vst.msk [vmem:[%s4 + $0x10] sm:$0xff] %vm248, %v382
    %399 = vst.msk [vmem:[%s4 + $0x18] sm:$0xff] %vm248, %v383
    %400 = vst.msk [vmem:[%s4 + $0x20] sm:$0xff] %vm248, %v384
    %401 = vst.msk [vmem:[%s4 + $0x28] sm:$0xff] %vm248, %v385
    %402 = vst.msk [vmem:[%s4 + $0x30] sm:$0xff] %vm248, %v386
    %403 = vst.msk [vmem:[%s4 + $0x38] sm:$0xff] %vm248, %v387
    %404 = vst.msk [vmem:[%s4 + $0x40] sm:$0xff] %vm248, %v388
    %405 = vst.msk [vmem:[%s4 + $0x48] sm:$0xff] %vm248, %v389
    %406 = vst.msk [vmem:[%s4 + $0x50] sm:$0xff] %vm248, %v390
    %407 = vst.msk [vmem:[%s4 + $0x58] sm:$0xff] %vm248, %v391
    %408 = vst.msk [vmem:[%s4 + $0x60] sm:$0xff] %vm248, %v392
    %409 = vst.msk [vmem:[%s4 + $0x68] sm:$0xff] %vm248, %v393
    %410 = vst.msk [vmem:[%s4 + $0x70] sm:$0xff] %vm248, %v394
    %411 = vst.msk [vmem:[%s4 + $0x78] sm:$0xff] %vm248, %v395
  $region25: #{gcn_forward.9} parent=0 // pred_fallthru
    _
  // Predicated region
  $region26: #{gcn_forward.9} parent=0 // pred_check
    _
  $region27: #{gcn_forward.9} parent=0 // pred_check_branch
    %413 = sbr.rel (0) target = $region29
  $region28: #{gcn_forward.9} parent=0 // pred_region
    _
  $region29: #{gcn_forward.9} parent=0 // pred_fallthru
    _
  // Predicated region
  $region30: #{gcn_forward.9} parent=0 // pred_check
    _
  $region31: #{gcn_forward.9} parent=0 // pred_check_branch
    %415 = sbr.rel (0) target = $region33
  $region32: #{gcn_forward.9} parent=0 // pred_region
    _
  $region33: #{gcn_forward.9} parent=0 // pred_fallthru
    _

// kernel: gcn_forward.7
$region0: #{gcn_forward.7}
  #allocation0 [shape = 'u32[]', space=smem, size = 0x4, offset = 0x4, fixed_abs, tag = 'smem constant byte address 0x4 - core index']
  #allocation1 [shape = 'u32[144,128]{1,0:T(1,128)}', space=vmem, size = 0x12000, scoped, tag = 'internal scratch']
  #allocation2 [shape = 'f32[128,512]{1,0:T(8,128)}', space=vmem, size = 0x40000, scoped, tag = 'scratch operand']
  %s0 = inlined_call_operand.vmem [shape: f32[128,128], index: 0, kind: input, shape index: {}]
  %s1 = inlined_call_operand.vmem [shape: f32[128,512], index: 1, kind: input, shape index: {}, may-alias: {1,2}]
  %s2 = inlined_call_operand.vmem [shape: f32[128,512], index: 2, kind: input, shape index: {}, may-alias: {1,2}]
  %s3 = inlined_call_operand.vmem [shape: f32[128,1], index: 3, kind: input, shape index: {}]
  %s4 = inlined_call_operand.vmem [shape: f32[128,512], index: 4, kind: output, shape index: {}]
  %s5 = sld [smem:[#allocation0]]
  $region34: #{gcn_forward.7} parent=0
    _
  %s7 = ssub.s32 1, %s5
  %s8 = scalar_select 0, %s7, %s5
  // Predicated region
  $region2: #{gcn_forward.7} parent=0 // pred_check
    _
  $region3: #{gcn_forward.7} parent=0 // pred_check_branch
    %10 = sbr.rel (0) target = $region5
  $region4: #{gcn_forward.7} parent=0 // pred_region
    _
  $region5: #{gcn_forward.7} parent=0 // pred_fallthru
    _
  // Predicated region
  $region6: #{gcn_forward.7} parent=0 // pred_check
    _
  $region7: #{gcn_forward.7} parent=0 // pred_check_branch
    %12 = sbr.rel (0) target = $region9
  $region8: #{gcn_forward.7} parent=0 // pred_region
    _
  $region9: #{gcn_forward.7} parent=0 // pred_fallthru
    _
  // Predicated region
  $region10: #{gcn_forward.7} parent=0 // pred_check
    _
  $region11: #{gcn_forward.7} parent=0 // pred_check_branch
    %14 = sbr.rel (0) target = $region13
  $region12: #{gcn_forward.7} parent=0 // pred_region
    _
  $region13: #{gcn_forward.7} parent=0 // pred_fallthru
    _
  // Predicated region
  $region14: #{gcn_forward.7} parent=0 // pred_check
    _
  $region15: #{gcn_forward.7} parent=0 // pred_check_branch
    %16 = sbr.rel (0) target = $region17
  $region16: #{gcn_forward.7} parent=0 // pred_region
    _
  $region17: #{gcn_forward.7} parent=0 // pred_fallthru
    _
  %p18 = scmp.eq.s32.totalorder 0, 0
  // Predicated region
  $region18: #{gcn_forward.7} parent=0 // pred_check
    %p19 = pneg %p18
  $region19: #{gcn_forward.7} parent=0 // pred_check_branch
    %21 = sbr.rel (%p19) target = $region21
  $region20: #{gcn_forward.7} parent=0 // pred_region
    %v22 = vld [vmem:[%s2] sm:$0xff]
    %v23 = vld [vmem:[%s2 + $0x8] sm:$0xff]
    %v24 = vld [vmem:[%s2 + $0x10] sm:$0xff]
    %v25 = vld [vmem:[%s2 + $0x18] sm:$0xff]
    %v26 = vld [vmem:[%s2 + $0x20] sm:$0xff]
    %v27 = vld [vmem:[%s2 + $0x28] sm:$0xff]
    %v28 = vld [vmem:[%s2 + $0x30] sm:$0xff]
    %v29 = vld [vmem:[%s2 + $0x38] sm:$0xff]
    %v30 = vld [vmem:[%s2 + $0x40] sm:$0xff]
    %v31 = vld [vmem:[%s2 + $0x48] sm:$0xff]
    %v32 = vld [vmem:[%s2 + $0x50] sm:$0xff]
    %v33 = vld [vmem:[%s2 + $0x58] sm:$0xff]
    %v34 = vld [vmem:[%s2 + $0x60] sm:$0xff]
    %v35 = vld [vmem:[%s2 + $0x68] sm:$0xff]
    %v36 = vld [vmem:[%s2 + $0x70] sm:$0xff]
    %v37 = vld [vmem:[%s2 + $0x78] sm:$0xff]
    %v38 = vld [vmem:[%s2 + $0x80] sm:$0xff]
    %v39 = vld [vmem:[%s2 + $0x88] sm:$0xff]
    %v40 = vld [vmem:[%s2 + $0x90] sm:$0xff]
    %v41 = vld [vmem:[%s2 + $0x98] sm:$0xff]
    %v42 = vld [vmem:[%s2 + $0xa0] sm:$0xff]
    %v43 = vld [vmem:[%s2 + $0xa8] sm:$0xff]
    %v44 = vld [vmem:[%s2 + $0xb0] sm:$0xff]
    %v45 = vld [vmem:[%s2 + $0xb8] sm:$0xff]
    %v46 = vld [vmem:[%s2 + $0xc0] sm:$0xff]
    %v47 = vld [vmem:[%s2 + $0xc8] sm:$0xff]
    %v48 = vld [vmem:[%s2 + $0xd0] sm:$0xff]
    %v49 = vld [vmem:[%s2 + $0xd8] sm:$0xff]
    %v50 = vld [vmem:[%s2 + $0xe0] sm:$0xff]
    %v51 = vld [vmem:[%s2 + $0xe8] sm:$0xff]
    %v52 = vld [vmem:[%s2 + $0xf0] sm:$0xff]
    %v53 = vld [vmem:[%s2 + $0xf8] sm:$0xff]
    %v54 = vld [vmem:[%s2 + $0x100] sm:$0xff]
    %v55 = vld [vmem:[%s2 + $0x108] sm:$0xff]
    %v56 = vld [vmem:[%s2 + $0x110] sm:$0xff]
    %v57 = vld [vmem:[%s2 + $0x118] sm:$0xff]
    %v58 = vld [vmem:[%s2 + $0x120] sm:$0xff]
    %v59 = vld [vmem:[%s2 + $0x128] sm:$0xff]
    %v60 = vld [vmem:[%s2 + $0x130] sm:$0xff]
    %v61 = vld [vmem:[%s2 + $0x138] sm:$0xff]
    %v62 = vld [vmem:[%s2 + $0x140] sm:$0xff]
    %v63 = vld [vmem:[%s2 + $0x148] sm:$0xff]
    %v64 = vld [vmem:[%s2 + $0x150] sm:$0xff]
    %v65 = vld [vmem:[%s2 + $0x158] sm:$0xff]
    %v66 = vld [vmem:[%s2 + $0x160] sm:$0xff]
    %v67 = vld [vmem:[%s2 + $0x168] sm:$0xff]
    %v68 = vld [vmem:[%s2 + $0x170] sm:$0xff]
    %v69 = vld [vmem:[%s2 + $0x178] sm:$0xff]
    %v70 = vld [vmem:[%s2 + $0x180] sm:$0xff]
    %v71 = vld [vmem:[%s2 + $0x188] sm:$0xff]
    %v72 = vld [vmem:[%s2 + $0x190] sm:$0xff]
    %v73 = vld [vmem:[%s2 + $0x198] sm:$0xff]
    %v74 = vld [vmem:[%s2 + $0x1a0] sm:$0xff]
    %v75 = vld [vmem:[%s2 + $0x1a8] sm:$0xff]
    %v76 = vld [vmem:[%s2 + $0x1b0] sm:$0xff]
    %v77 = vld [vmem:[%s2 + $0x1b8] sm:$0xff]
    %v78 = vld [vmem:[%s2 + $0x1c0] sm:$0xff]
    %v79 = vld [vmem:[%s2 + $0x1c8] sm:$0xff]
    %v80 = vld [vmem:[%s2 + $0x1d0] sm:$0xff]
    %v81 = vld [vmem:[%s2 + $0x1d8] sm:$0xff]
    %v82 = vld [vmem:[%s2 + $0x1e0] sm:$0xff]
    %v83 = vld [vmem:[%s2 + $0x1e8] sm:$0xff]
    %v84 = vld [vmem:[%s2 + $0x1f0] sm:$0xff]
    %v85 = vld [vmem:[%s2 + $0x1f8] sm:$0xff]
    %86 = vst [vmem:[#allocation2] sm:$0xff] %v22
    %87 = vst [vmem:[#allocation2 + $0x8] sm:$0xff] %v23
    %88 = vst [vmem:[#allocation2 + $0x10] sm:$0xff] %v24
    %89 = vst [vmem:[#allocation2 + $0x18] sm:$0xff] %v25
    %90 = vst [vmem:[#allocation2 + $0x20] sm:$0xff] %v26
    %91 = vst [vmem:[#allocation2 + $0x28] sm:$0xff] %v27
    %92 = vst [vmem:[#allocation2 + $0x30] sm:$0xff] %v28
    %93 = vst [vmem:[#allocation2 + $0x38] sm:$0xff] %v29
    %94 = vst [vmem:[#allocation2 + $0x40] sm:$0xff] %v30
    %95 = vst [vmem:[#allocation2 + $0x48] sm:$0xff] %v31
    %96 = vst [vmem:[#allocation2 + $0x50] sm:$0xff] %v32
    %97 = vst [vmem:[#allocation2 + $0x58] sm:$0xff] %v33
    %98 = vst [vmem:[#allocation2 + $0x60] sm:$0xff] %v34
    %99 = vst [vmem:[#allocation2 + $0x68] sm:$0xff] %v35
    %100 = vst [vmem:[#allocation2 + $0x70] sm:$0xff] %v36
    %101 = vst [vmem:[#allocation2 + $0x78] sm:$0xff] %v37
    %102 = vst [vmem:[#allocation2 + $0x80] sm:$0xff] %v38
    %103 = vst [vmem:[#allocation2 + $0x88] sm:$0xff] %v39
    %104 = vst [vmem:[#allocation2 + $0x90] sm:$0xff] %v40
    %105 = vst [vmem:[#allocation2 + $0x98] sm:$0xff] %v41
    %106 = vst [vmem:[#allocation2 + $0xa0] sm:$0xff] %v42
    %107 = vst [vmem:[#allocation2 + $0xa8] sm:$0xff] %v43
    %108 = vst [vmem:[#allocation2 + $0xb0] sm:$0xff] %v44
    %109 = vst [vmem:[#allocation2 + $0xb8] sm:$0xff] %v45
    %110 = vst [vmem:[#allocation2 + $0xc0] sm:$0xff] %v46
    %111 = vst [vmem:[#allocation2 + $0xc8] sm:$0xff] %v47
    %112 = vst [vmem:[#allocation2 + $0xd0] sm:$0xff] %v48
    %113 = vst [vmem:[#allocation2 + $0xd8] sm:$0xff] %v49
    %114 = vst [vmem:[#allocation2 + $0xe0] sm:$0xff] %v50
    %115 = vst [vmem:[#allocation2 + $0xe8] sm:$0xff] %v51
    %116 = vst [vmem:[#allocation2 + $0xf0] sm:$0xff] %v52
    %117 = vst [vmem:[#allocation2 + $0xf8] sm:$0xff] %v53
    %118 = vst [vmem:[#allocation2 + $0x100] sm:$0xff] %v54
    %119 = vst [vmem:[#allocation2 + $0x108] sm:$0xff] %v55
    %120 = vst [vmem:[#allocation2 + $0x110] sm:$0xff] %v56
    %121 = vst [vmem:[#allocation2 + $0x118] sm:$0xff] %v57
    %122 = vst [vmem:[#allocation2 + $0x120] sm:$0xff] %v58
    %123 = vst [vmem:[#allocation2 + $0x128] sm:$0xff] %v59
    %124 = vst [vmem:[#allocation2 + $0x130] sm:$0xff] %v60
    %125 = vst [vmem:[#allocation2 + $0x138] sm:$0xff] %v61
    %126 = vst [vmem:[#allocation2 + $0x140] sm:$0xff] %v62
    %127 = vst [vmem:[#allocation2 + $0x148] sm:$0xff] %v63
    %128 = vst [vmem:[#allocation2 + $0x150] sm:$0xff] %v64
    %129 = vst [vmem:[#allocation2 + $0x158] sm:$0xff] %v65
    %130 = vst [vmem:[#allocation2 + $0x160] sm:$0xff] %v66
    %131 = vst [vmem:[#allocation2 + $0x168] sm:$0xff] %v67
    %132 = vst [vmem:[#allocation2 + $0x170] sm:$0xff] %v68
    %133 = vst [vmem:[#allocation2 + $0x178] sm:$0xff] %v69
    %134 = vst [vmem:[#allocation2 + $0x180] sm:$0xff] %v70
    %135 = vst [vmem:[#allocation2 + $0x188] sm:$0xff] %v71
    %136 = vst [vmem:[#allocation2 + $0x190] sm:$0xff] %v72
    %137 = vst [vmem:[#allocation2 + $0x198] sm:$0xff] %v73
    %138 = vst [vmem:[#allocation2 + $0x1a0] sm:$0xff] %v74
    %139 = vst [vmem:[#allocation2 + $0x1a8] sm:$0xff] %v75
    %140 = vst [vmem:[#allocation2 + $0x1b0] sm:$0xff] %v76
    %141 = vst [vmem:[#allocation2 + $0x1b8] sm:$0xff] %v77
    %142 = vst [vmem:[#allocation2 + $0x1c0] sm:$0xff] %v78
    %143 = vst [vmem:[#allocation2 + $0x1c8] sm:$0xff] %v79
    %144 = vst [vmem:[#allocation2 + $0x1d0] sm:$0xff] %v80
    %145 = vst [vmem:[#allocation2 + $0x1d8] sm:$0xff] %v81
    %146 = vst [vmem:[#allocation2 + $0x1e0] sm:$0xff] %v82
    %147 = vst [vmem:[#allocation2 + $0x1e8] sm:$0xff] %v83
    %148 = vst [vmem:[#allocation2 + $0x1f0] sm:$0xff] %v84
    %149 = vst [vmem:[#allocation2 + $0x1f8] sm:$0xff] %v85
  $region21: #{gcn_forward.7} parent=0 // pred_fallthru
    _
  %v150 = vld [vmem:[%s0] sm:$0xff]
  %v151 = vld [vmem:[%s0 + $0x8] sm:$0xff]
  %v152 = vld [vmem:[%s0 + $0x10] sm:$0xff]
  %v153 = vld [vmem:[%s0 + $0x18] sm:$0xff]
  %v154 = vld [vmem:[%s0 + $0x20] sm:$0xff]
  %v155 = vld [vmem:[%s0 + $0x28] sm:$0xff]
  %v156 = vld [vmem:[%s0 + $0x30] sm:$0xff]
  %v157 = vld [vmem:[%s0 + $0x38] sm:$0xff]
  %v158 = vld [vmem:[%s0 + $0x40] sm:$0xff]
  %v159 = vld [vmem:[%s0 + $0x48] sm:$0xff]
  %v160 = vld [vmem:[%s0 + $0x50] sm:$0xff]
  %v161 = vld [vmem:[%s0 + $0x58] sm:$0xff]
  %v162 = vld [vmem:[%s0 + $0x60] sm:$0xff]
  %v163 = vld [vmem:[%s0 + $0x68] sm:$0xff]
  %v164 = vld [vmem:[%s0 + $0x70] sm:$0xff]
  %v165 = vld [vmem:[%s0 + $0x78] sm:$0xff]
  %v166 = vpack.c.bf16 %v151, %v150
  %v167 = vpack.c.bf16 %v153, %v152
  %v168 = vpack.c.bf16 %v155, %v154
  %v169 = vpack.c.bf16 %v157, %v156
  %v170 = vpack.c.bf16 %v159, %v158
  %v171 = vpack.c.bf16 %v161, %v160
  %v172 = vpack.c.bf16 %v163, %v162
  %v173 = vpack.c.bf16 %v165, %v164
  %v174 = vld [vmem:[%s1] sm:$0xff]
  %v175 = vld [vmem:[%s1 + $0x8] sm:$0xff]
  %v176 = vld [vmem:[%s1 + $0x10] sm:$0xff]
  %v177 = vld [vmem:[%s1 + $0x18] sm:$0xff]
  %v178 = vld [vmem:[%s1 + $0x20] sm:$0xff]
  %v179 = vld [vmem:[%s1 + $0x28] sm:$0xff]
  %v180 = vld [vmem:[%s1 + $0x30] sm:$0xff]
  %v181 = vld [vmem:[%s1 + $0x38] sm:$0xff]
  %v182 = vld [vmem:[%s1 + $0x40] sm:$0xff]
  %v183 = vld [vmem:[%s1 + $0x48] sm:$0xff]
  %v184 = vld [vmem:[%s1 + $0x50] sm:$0xff]
  %v185 = vld [vmem:[%s1 + $0x58] sm:$0xff]
  %v186 = vld [vmem:[%s1 + $0x60] sm:$0xff]
  %v187 = vld [vmem:[%s1 + $0x68] sm:$0xff]
  %v188 = vld [vmem:[%s1 + $0x70] sm:$0xff]
  %v189 = vld [vmem:[%s1 + $0x78] sm:$0xff]
  %v190 = vld [vmem:[%s1 + $0x80] sm:$0xff]
  %v191 = vld [vmem:[%s1 + $0x88] sm:$0xff]
  %v192 = vld [vmem:[%s1 + $0x90] sm:$0xff]
  %v193 = vld [vmem:[%s1 + $0x98] sm:$0xff]
  %v194 = vld [vmem:[%s1 + $0xa0] sm:$0xff]
  %v195 = vld [vmem:[%s1 + $0xa8] sm:$0xff]
  %v196 = vld [vmem:[%s1 + $0xb0] sm:$0xff]
  %v197 = vld [vmem:[%s1 + $0xb8] sm:$0xff]
  %v198 = vld [vmem:[%s1 + $0xc0] sm:$0xff]
  %v199 = vld [vmem:[%s1 + $0xc8] sm:$0xff]
  %v200 = vld [vmem:[%s1 + $0xd0] sm:$0xff]
  %v201 = vld [vmem:[%s1 + $0xd8] sm:$0xff]
  %v202 = vld [vmem:[%s1 + $0xe0] sm:$0xff]
  %v203 = vld [vmem:[%s1 + $0xe8] sm:$0xff]
  %v204 = vld [vmem:[%s1 + $0xf0] sm:$0xff]
  %v205 = vld [vmem:[%s1 + $0xf8] sm:$0xff]
  %v206 = vld [vmem:[%s1 + $0x100] sm:$0xff]
  %v207 = vld [vmem:[%s1 + $0x108] sm:$0xff]
  %v208 = vld [vmem:[%s1 + $0x110] sm:$0xff]
  %v209 = vld [vmem:[%s1 + $0x118] sm:$0xff]
  %v210 = vld [vmem:[%s1 + $0x120] sm:$0xff]
  %v211 = vld [vmem:[%s1 + $0x128] sm:$0xff]
  %v212 = vld [vmem:[%s1 + $0x130] sm:$0xff]
  %v213 = vld [vmem:[%s1 + $0x138] sm:$0xff]
  %v214 = vld [vmem:[%s1 + $0x140] sm:$0xff]
  %v215 = vld [vmem:[%s1 + $0x148] sm:$0xff]
  %v216 = vld [vmem:[%s1 + $0x150] sm:$0xff]
  %v217 = vld [vmem:[%s1 + $0x158] sm:$0xff]
  %v218 = vld [vmem:[%s1 + $0x160] sm:$0xff]
  %v219 = vld [vmem:[%s1 + $0x168] sm:$0xff]
  %v220 = vld [vmem:[%s1 + $0x170] sm:$0xff]
  %v221 = vld [vmem:[%s1 + $0x178] sm:$0xff]
  %v222 = vld [vmem:[%s1 + $0x180] sm:$0xff]
  %v223 = vld [vmem:[%s1 + $0x188] sm:$0xff]
  %v224 = vld [vmem:[%s1 + $0x190] sm:$0xff]
  %v225 = vld [vmem:[%s1 + $0x198] sm:$0xff]
  %v226 = vld [vmem:[%s1 + $0x1a0] sm:$0xff]
  %v227 = vld [vmem:[%s1 + $0x1a8] sm:$0xff]
  %v228 = vld [vmem:[%s1 + $0x1b0] sm:$0xff]
  %v229 = vld [vmem:[%s1 + $0x1b8] sm:$0xff]
  %v230 = vld [vmem:[%s1 + $0x1c0] sm:$0xff]
  %v231 = vld [vmem:[%s1 + $0x1c8] sm:$0xff]
  %v232 = vld [vmem:[%s1 + $0x1d0] sm:$0xff]
  %v233 = vld [vmem:[%s1 + $0x1d8] sm:$0xff]
  %v234 = vld [vmem:[%s1 + $0x1e0] sm:$0xff]
  %v235 = vld [vmem:[%s1 + $0x1e8] sm:$0xff]
  %v236 = vld [vmem:[%s1 + $0x1f0] sm:$0xff]
  %v237 = vld [vmem:[%s1 + $0x1f8] sm:$0xff]
  %v238 = vpack.c.bf16 %v178, %v174
  %v239 = vpack.c.bf16 %v179, %v175
  %v240 = vpack.c.bf16 %v180, %v176
  %v241 = vpack.c.bf16 %v181, %v177
  %v242 = vpack.c.bf16 %v186, %v182
  %v243 = vpack.c.bf16 %v187, %v183
  %v244 = vpack.c.bf16 %v188, %v184
  %v245 = vpack.c.bf16 %v189, %v185
  %v246 = vpack.c.bf16 %v194, %v190
  %v247 = vpack.c.bf16 %v195, %v191
  %v248 = vpack.c.bf16 %v196, %v192
  %v249 = vpack.c.bf16 %v197, %v193
  %v250 = vpack.c.bf16 %v202, %v198
  %v251 = vpack.c.bf16 %v203, %v199
  %v252 = vpack.c.bf16 %v204, %v200
  %v253 = vpack.c.bf16 %v205, %v201
  %v254 = vpack.c.bf16 %v210, %v206
  %v255 = vpack.c.bf16 %v211, %v207
  %v256 = vpack.c.bf16 %v212, %v208
  %v257 = vpack.c.bf16 %v213, %v209
  %v258 = vpack.c.bf16 %v218, %v214
  %v259 = vpack.c.bf16 %v219, %v215
  %v260 = vpack.c.bf16 %v220, %v216
  %v261 = vpack.c.bf16 %v221, %v217
  %v262 = vpack.c.bf16 %v226, %v222
  %v263 = vpack.c.bf16 %v227, %v223
  %v264 = vpack.c.bf16 %v228, %v224
  %v265 = vpack.c.bf16 %v229, %v225
  %v266 = vpack.c.bf16 %v234, %v230
  %v267 = vpack.c.bf16 %v235, %v231
  %v268 = vpack.c.bf16 %v236, %v232
  %v269 = vpack.c.bf16 %v237, %v233
  %v270 = vld [vmem:[#allocation2] sm:$0xff]
  %v271 = vld [vmem:[#allocation2 + $0x8] sm:$0xff]
  %v272 = vld [vmem:[#allocation2 + $0x10] sm:$0xff]
  %v273 = vld [vmem:[#allocation2 + $0x18] sm:$0xff]
  %v274 = vld [vmem:[#allocation2 + $0x20] sm:$0xff]
  %v275 = vld [vmem:[#allocation2 + $0x28] sm:$0xff]
  %v276 = vld [vmem:[#allocation2 + $0x30] sm:$0xff]
  %v277 = vld [vmem:[#allocation2 + $0x38] sm:$0xff]
  %v278 = vld [vmem:[#allocation2 + $0x40] sm:$0xff]
  %v279 = vld [vmem:[#allocation2 + $0x48] sm:$0xff]
  %v280 = vld [vmem:[#allocation2 + $0x50] sm:$0xff]
  %v281 = vld [vmem:[#allocation2 + $0x58] sm:$0xff]
  %v282 = vld [vmem:[#allocation2 + $0x60] sm:$0xff]
  %v283 = vld [vmem:[#allocation2 + $0x68] sm:$0xff]
  %v284 = vld [vmem:[#allocation2 + $0x70] sm:$0xff]
  %v285 = vld [vmem:[#allocation2 + $0x78] sm:$0xff]
  %v286 = vld [vmem:[#allocation2 + $0x80] sm:$0xff]
  %v287 = vld [vmem:[#allocation2 + $0x88] sm:$0xff]
  %v288 = vld [vmem:[#allocation2 + $0x90] sm:$0xff]
  %v289 = vld [vmem:[#allocation2 + $0x98] sm:$0xff]
  %v290 = vld [vmem:[#allocation2 + $0xa0] sm:$0xff]
  %v291 = vld [vmem:[#allocation2 + $0xa8] sm:$0xff]
  %v292 = vld [vmem:[#allocation2 + $0xb0] sm:$0xff]
  %v293 = vld [vmem:[#allocation2 + $0xb8] sm:$0xff]
  %v294 = vld [vmem:[#allocation2 + $0xc0] sm:$0xff]
  %v295 = vld [vmem:[#allocation2 + $0xc8] sm:$0xff]
  %v296 = vld [vmem:[#allocation2 + $0xd0] sm:$0xff]
  %v297 = vld [vmem:[#allocation2 + $0xd8] sm:$0xff]
  %v298 = vld [vmem:[#allocation2 + $0xe0] sm:$0xff]
  %v299 = vld [vmem:[#allocation2 + $0xe8] sm:$0xff]
  %v300 = vld [vmem:[#allocation2 + $0xf0] sm:$0xff]
  %v301 = vld [vmem:[#allocation2 + $0xf8] sm:$0xff]
  %v302 = vld [vmem:[#allocation2 + $0x100] sm:$0xff]
  %v303 = vld [vmem:[#allocation2 + $0x108] sm:$0xff]
  %v304 = vld [vmem:[#allocation2 + $0x110] sm:$0xff]
  %v305 = vld [vmem:[#allocation2 + $0x118] sm:$0xff]
  %v306 = vld [vmem:[#allocation2 + $0x120] sm:$0xff]
  %v307 = vld [vmem:[#allocation2 + $0x128] sm:$0xff]
  %v308 = vld [vmem:[#allocation2 + $0x130] sm:$0xff]
  %v309 = vld [vmem:[#allocation2 + $0x138] sm:$0xff]
  %v310 = vld [vmem:[#allocation2 + $0x140] sm:$0xff]
  %v311 = vld [vmem:[#allocation2 + $0x148] sm:$0xff]
  %v312 = vld [vmem:[#allocation2 + $0x150] sm:$0xff]
  %v313 = vld [vmem:[#allocation2 + $0x158] sm:$0xff]
  %v314 = vld [vmem:[#allocation2 + $0x160] sm:$0xff]
  %v315 = vld [vmem:[#allocation2 + $0x168] sm:$0xff]
  %v316 = vld [vmem:[#allocation2 + $0x170] sm:$0xff]
  %v317 = vld [vmem:[#allocation2 + $0x178] sm:$0xff]
  %v318 = vld [vmem:[#allocation2 + $0x180] sm:$0xff]
  %v319 = vld [vmem:[#allocation2 + $0x188] sm:$0xff]
  %v320 = vld [vmem:[#allocation2 + $0x190] sm:$0xff]
  %v321 = vld [vmem:[#allocation2 + $0x198] sm:$0xff]
  %v322 = vld [vmem:[#allocation2 + $0x1a0] sm:$0xff]
  %v323 = vld [vmem:[#allocation2 + $0x1a8] sm:$0xff]
  %v324 = vld [vmem:[#allocation2 + $0x1b0] sm:$0xff]
  %v325 = vld [vmem:[#allocation2 + $0x1b8] sm:$0xff]
  %v326 = vld [vmem:[#allocation2 + $0x1c0] sm:$0xff]
  %v327 = vld [vmem:[#allocation2 + $0x1c8] sm:$0xff]
  %v328 = vld [vmem:[#allocation2 + $0x1d0] sm:$0xff]
  %v329 = vld [vmem:[#allocation2 + $0x1d8] sm:$0xff]
  %v330 = vld [vmem:[#allocation2 + $0x1e0] sm:$0xff]
  %v331 = vld [vmem:[#allocation2 + $0x1e8] sm:$0xff]
  %v332 = vld [vmem:[#allocation2 + $0x1f0] sm:$0xff]
  %v333 = vld [vmem:[#allocation2 + $0x1f8] sm:$0xff]
  %334 = vxpose.xlu0.c.b16.start [1/8] %v166, 128
  %335 = vxpose.xlu0.c.b16.cont [2/8] %v167, 128
  %336 = vxpose.xlu0.c.b16.cont [3/8] %v168, 128
  %337 = vxpose.xlu0.c.b16.cont [4/8] %v169, 128
  %338 = vxpose.xlu0.c.b16.cont [5/8] %v170, 128
  %339 = vxpose.xlu0.c.b16.cont [6/8] %v171, 128
  %340 = vxpose.xlu0.c.b16.cont [7/8] %v172, 128
  %341 = vxpose.xlu0.c.b16.end [8/8] %v173, 128
  %v342 = vpop.trf.xlu0
  %v343 = vpop.trf.xlu0
  %v344 = vpop.trf.xlu0
  %v345 = vpop.trf.xlu0
  %v346 = vpop.trf.xlu0
  %v347 = vpop.trf.xlu0
  %v348 = vpop.trf.xlu0
  %v349 = vpop.trf.xlu0
  %350 = vmatprep.subr.bf16.mxu0 %v267
  %351 = vmatpush1.bf16.msra.mxu0 %v266
  %352 = vmatprep.subr.bf16.mxu0 %v263
  %353 = vmatpush1.bf16.msra.mxu0 %v262
  %354 = vmatprep.subr.bf16.mxu0 %v259
  %355 = vmatpush1.bf16.msra.mxu0 %v258
  %356 = vmatprep.subr.bf16.mxu0 %v255
  %357 = vmatpush1.bf16.msra.mxu0 %v254
  %358 = vmatprep.subr.bf16.mxu0 %v251
  %359 = vmatpush1.bf16.msra.mxu0 %v250
  %360 = vmatprep.subr.bf16.mxu0 %v247
  %361 = vmatpush1.bf16.msra.mxu0 %v246
  %362 = vmatprep.subr.bf16.mxu0 %v243
  %363 = vmatpush1.bf16.msra.mxu0 %v242
  %364 = vmatprep.subr.bf16.mxu0 %v239
  %365 = vmatpush1.bf16.msra.mxu0 %v238
  %366 = vmatprep.subr.bf16.mxu0 0
  %367 = vmatpush2.bf16.msra.mxu0 0
  %368 = vmatprep.subr.bf16.mxu0 0
  %369 = vmatpush2.bf16.msra.mxu0 0
  %370 = vmatprep.subr.bf16.mxu0 0
  %371 = vmatpush2.bf16.msra.mxu0 0
  %372 = vmatprep.subr.bf16.mxu0 0
  %373 = vmatpush2.bf16.msra.mxu0 0
  %374 = vmatprep.subr.bf16.mxu0 0
  %375 = vmatpush2.bf16.msra.mxu0 0
  %376 = vmatprep.subr.bf16.mxu0 0
  %377 = vmatpush2.bf16.msra.mxu0 0
  %378 = vmatprep.subr.bf16.mxu0 0
  %379 = vmatpush2.bf16.msra.mxu0 0
  %380 = vmatprep.subr.bf16.mxu0 0
  %381 = vmatpush2.bf16.msra.mxu0 0
  %382 = vmatprep.mubr.bf16.mxu0 0
  %383 = vmatmul.mubr.bf16.gmra.mxu0 %v342
  %v384 = vpop.f32.mrf.mxu0
  %v385 = vadd.f32 0.0, %v384
  %v386 = vpop.f32.mrf.mxu0
  %v387 = vadd.f32 0.0, %v386
  %v388 = vpop.f32.mrf.mxu0
  %v389 = vadd.f32 0.0, %v388
  %v390 = vpop.f32.mrf.mxu0
  %v391 = vadd.f32 0.0, %v390
  %392 = vmatprep.mubr.bf16.mxu0 0
  %393 = vmatmul.mubr.bf16.gmra.mxu0 %v343
  %v394 = vpop.f32.mrf.mxu0
  %v395 = vadd.f32 0.0, %v394
  %v396 = vpop.f32.mrf.mxu0
  %v397 = vadd.f32 0.0, %v396
  %v398 = vpop.f32.mrf.mxu0
  %v399 = vadd.f32 0.0, %v398
  %v400 = vpop.f32.mrf.mxu0
  %v401 = vadd.f32 0.0, %v400
  %402 = vmatprep.mubr.bf16.mxu0 0
  %403 = vmatmul.mubr.bf16.gmra.mxu0 %v344
  %v404 = vpop.f32.mrf.mxu0
  %v405 = vadd.f32 0.0, %v404
  %v406 = vpop.f32.mrf.mxu0
  %v407 = vadd.f32 0.0, %v406
  %v408 = vpop.f32.mrf.mxu0
  %v409 = vadd.f32 0.0, %v408
  %v410 = vpop.f32.mrf.mxu0
  %v411 = vadd.f32 0.0, %v410
  %412 = vmatprep.mubr.bf16.mxu0 0
  %413 = vmatmul.mubr.bf16.gmra.mxu0 %v345
  %v414 = vpop.f32.mrf.mxu0
  %v415 = vadd.f32 0.0, %v414
  %v416 = vpop.f32.mrf.mxu0
  %v417 = vadd.f32 0.0, %v416
  %v418 = vpop.f32.mrf.mxu0
  %v419 = vadd.f32 0.0, %v418
  %v420 = vpop.f32.mrf.mxu0
  %v421 = vadd.f32 0.0, %v420
  %422 = vmatprep.mubr.bf16.mxu0 0
  %423 = vmatmul.mubr.bf16.gmra.mxu0 %v346
  %v424 = vpop.f32.mrf.mxu0
  %v425 = vadd.f32 0.0, %v424
  %v426 = vpop.f32.mrf.mxu0
  %v427 = vadd.f32 0.0, %v426
  %v428 = vpop.f32.mrf.mxu0
  %v429 = vadd.f32 0.0, %v428
  %v430 = vpop.f32.mrf.mxu0
  %v431 = vadd.f32 0.0, %v430
  %432 = vmatprep.mubr.bf16.mxu0 0
  %433 = vmatmul.mubr.bf16.gmra.mxu0 %v347
  %v434 = vpop.f32.mrf.mxu0
  %v435 = vadd.f32 0.0, %v434
  %v436 = vpop.f32.mrf.mxu0
  %v437 = vadd.f32 0.0, %v436
  %v438 = vpop.f32.mrf.mxu0
  %v439 = vadd.f32 0.0, %v438
  %v440 = vpop.f32.mrf.mxu0
  %v441 = vadd.f32 0.0, %v440
  %442 = vmatprep.mubr.bf16.mxu0 0
  %443 = vmatmul.mubr.bf16.gmra.mxu0 %v348
  %v444 = vpop.f32.mrf.mxu0
  %v445 = vadd.f32 0.0, %v444
  %v446 = vpop.f32.mrf.mxu0
  %v447 = vadd.f32 0.0, %v446
  %v448 = vpop.f32.mrf.mxu0
  %v449 = vadd.f32 0.0, %v448
  %v450 = vpop.f32.mrf.mxu0
  %v451 = vadd.f32 0.0, %v450
  %452 = vmatprep.mubr.bf16.mxu0 0
  %453 = vmatmul.mubr.bf16.gmra.mxu0 %v349
  %v454 = vpop.f32.mrf.mxu0
  %v455 = vadd.f32 0.0, %v454
  %v456 = vpop.f32.mrf.mxu0
  %v457 = vadd.f32 0.0, %v456
  %v458 = vpop.f32.mrf.mxu0
  %v459 = vadd.f32 0.0, %v458
  %v460 = vpop.f32.mrf.mxu0
  %v461 = vadd.f32 0.0, %v460
  %462 = vdwg.mxu0
  %463 = vmatprep.subr.bf16.mxu0 %v269
  %464 = vmatpush1.bf16.msra.mxu0 %v268
  %465 = vmatprep.subr.bf16.mxu0 %v265
  %466 = vmatpush1.bf16.msra.mxu0 %v264
  %467 = vmatprep.subr.bf16.mxu0 %v261
  %468 = vmatpush1.bf16.msra.mxu0 %v260
  %469 = vmatprep.subr.bf16.mxu0 %v257
  %470 = vmatpush1.bf16.msra.mxu0 %v256
  %471 = vmatprep.subr.bf16.mxu0 %v253
  %472 = vmatpush1.bf16.msra.mxu0 %v252
  %473 = vmatprep.subr.bf16.mxu0 %v249
  %474 = vmatpush1.bf16.msra.mxu0 %v248
  %475 = vmatprep.subr.bf16.mxu0 %v245
  %476 = vmatpush1.bf16.msra.mxu0 %v244
  %477 = vmatprep.subr.bf16.mxu0 %v241
  %478 = vmatpush1.bf16.msra.mxu0 %v240
  %479 = vmatprep.subr.bf16.mxu0 0
  %480 = vmatpush2.bf16.msra.mxu0 0
  %481 = vmatprep.subr.bf16.mxu0 0
  %482 = vmatpush2.bf16.msra.mxu0 0
  %483 = vmatprep.subr.bf16.mxu0 0
  %484 = vmatpush2.bf16.msra.mxu0 0
  %485 = vmatprep.subr.bf16.mxu0 0
  %486 = vmatpush2.bf16.msra.mxu0 0
  %487 = vmatprep.subr.bf16.mxu0 0
  %488 = vmatpush2.bf16.msra.mxu0 0
  %489 = vmatprep.subr.bf16.mxu0 0
  %490 = vmatpush2.bf16.msra.mxu0 0
  %491 = vmatprep.subr.bf16.mxu0 0
  %492 = vmatpush2.bf16.msra.mxu0 0
  %493 = vmatprep.subr.bf16.mxu0 0
  %494 = vmatpush2.bf16.msra.mxu0 0
  %495 = vmatprep.mubr.bf16.mxu0 0
  %496 = vmatmul.mubr.bf16.gmra.mxu0 %v342
  %v497 = vpop.f32.mrf.mxu0
  %v498 = vadd.f32 0.0, %v497
  %v499 = vpop.f32.mrf.mxu0
  %v500 = vadd.f32 0.0, %v499
  %v501 = vpop.f32.mrf.mxu0
  %v502 = vadd.f32 0.0, %v501
  %v503 = vpop.f32.mrf.mxu0
  %v504 = vadd.f32 0.0, %v503
  %505 = vmatprep.mubr.bf16.mxu0 0
  %506 = vmatmul.mubr.bf16.gmra.mxu0 %v343
  %v507 = vpop.f32.mrf.mxu0
  %v508 = vadd.f32 0.0, %v507
  %v509 = vpop.f32.mrf.mxu0
  %v510 = vadd.f32 0.0, %v509
  %v511 = vpop.f32.mrf.mxu0
  %v512 = vadd.f32 0.0, %v511
  %v513 = vpop.f32.mrf.mxu0
  %v514 = vadd.f32 0.0, %v513
  %515 = vmatprep.mubr.bf16.mxu0 0
  %516 = vmatmul.mubr.bf16.gmra.mxu0 %v344
  %v517 = vpop.f32.mrf.mxu0
  %v518 = vadd.f32 0.0, %v517
  %v519 = vpop.f32.mrf.mxu0
  %v520 = vadd.f32 0.0, %v519
  %v521 = vpop.f32.mrf.mxu0
  %v522 = vadd.f32 0.0, %v521
  %v523 = vpop.f32.mrf.mxu0
  %v524 = vadd.f32 0.0, %v523
  %525 = vmatprep.mubr.bf16.mxu0 0
  %526 = vmatmul.mubr.bf16.gmra.mxu0 %v345
  %v527 = vpop.f32.mrf.mxu0
  %v528 = vadd.f32 0.0, %v527
  %v529 = vpop.f32.mrf.mxu0
  %v530 = vadd.f32 0.0, %v529
  %v531 = vpop.f32.mrf.mxu0
  %v532 = vadd.f32 0.0, %v531
  %v533 = vpop.f32.mrf.mxu0
  %v534 = vadd.f32 0.0, %v533
  %535 = vmatprep.mubr.bf16.mxu0 0
  %536 = vmatmul.mubr.bf16.gmra.mxu0 %v346
  %v537 = vpop.f32.mrf.mxu0
  %v538 = vadd.f32 0.0, %v537
  %v539 = vpop.f32.mrf.mxu0
  %v540 = vadd.f32 0.0, %v539
  %v541 = vpop.f32.mrf.mxu0
  %v542 = vadd.f32 0.0, %v541
  %v543 = vpop.f32.mrf.mxu0
  %v544 = vadd.f32 0.0, %v543
  %545 = vmatprep.mubr.bf16.mxu0 0
  %546 = vmatmul.mubr.bf16.gmra.mxu0 %v347
  %v547 = vpop.f32.mrf.mxu0
  %v548 = vadd.f32 0.0, %v547
  %v549 = vpop.f32.mrf.mxu0
  %v550 = vadd.f32 0.0, %v549
  %v551 = vpop.f32.mrf.mxu0
  %v552 = vadd.f32 0.0, %v551
  %v553 = vpop.f32.mrf.mxu0
  %v554 = vadd.f32 0.0, %v553
  %555 = vmatprep.mubr.bf16.mxu0 0
  %556 = vmatmul.mubr.bf16.gmra.mxu0 %v348
  %v557 = vpop.f32.mrf.mxu0
  %v558 = vadd.f32 0.0, %v557
  %v559 = vpop.f32.mrf.mxu0
  %v560 = vadd.f32 0.0, %v559
  %v561 = vpop.f32.mrf.mxu0
  %v562 = vadd.f32 0.0, %v561
  %v563 = vpop.f32.mrf.mxu0
  %v564 = vadd.f32 0.0, %v563
  %565 = vmatprep.mubr.bf16.mxu0 0
  %566 = vmatmul.mubr.bf16.gmra.mxu0 %v349
  %v567 = vpop.f32.mrf.mxu0
  %v568 = vadd.f32 0.0, %v567
  %v569 = vpop.f32.mrf.mxu0
  %v570 = vadd.f32 0.0, %v569
  %v571 = vpop.f32.mrf.mxu0
  %v572 = vadd.f32 0.0, %v571
  %v573 = vpop.f32.mrf.mxu0
  %v574 = vadd.f32 0.0, %v573
  %575 = vdwg.mxu0
  %v576 = vadd.f32 %v270, %v385
  %v577 = vadd.f32 %v271, %v387
  %v578 = vadd.f32 %v272, %v498
  %v579 = vadd.f32 %v273, %v500
  %v580 = vadd.f32 %v274, %v389
  %v581 = vadd.f32 %v275, %v391
  %v582 = vadd.f32 %v276, %v502
  %v583 = vadd.f32 %v277, %v504
  %v584 = vadd.f32 %v278, %v395
  %v585 = vadd.f32 %v279, %v397
  %v586 = vadd.f32 %v280, %v508
  %v587 = vadd.f32 %v281, %v510
  %v588 = vadd.f32 %v282, %v399
  %v589 = vadd.f32 %v283, %v401
  %v590 = vadd.f32 %v284, %v512
  %v591 = vadd.f32 %v285, %v514
  %v592 = vadd.f32 %v286, %v405
  %v593 = vadd.f32 %v287, %v407
  %v594 = vadd.f32 %v288, %v518
  %v595 = vadd.f32 %v289, %v520
  %v596 = vadd.f32 %v290, %v409
  %v597 = vadd.f32 %v291, %v411
  %v598 = vadd.f32 %v292, %v522
  %v599 = vadd.f32 %v293, %v524
  %v600 = vadd.f32 %v294, %v415
  %v601 = vadd.f32 %v295, %v417
  %v602 = vadd.f32 %v296, %v528
  %v603 = vadd.f32 %v297, %v530
  %v604 = vadd.f32 %v298, %v419
  %v605 = vadd.f32 %v299, %v421
  %v606 = vadd.f32 %v300, %v532
  %v607 = vadd.f32 %v301, %v534
  %v608 = vadd.f32 %v302, %v425
  %v609 = vadd.f32 %v303, %v427
  %v610 = vadd.f32 %v304, %v538
  %v611 = vadd.f32 %v305, %v540
  %v612 = vadd.f32 %v306, %v429
  %v613 = vadd.f32 %v307, %v431
  %v614 = vadd.f32 %v308, %v542
  %v615 = vadd.f32 %v309, %v544
  %v616 = vadd.f32 %v310, %v435
  %v617 = vadd.f32 %v311, %v437
  %v618 = vadd.f32 %v312, %v548
  %v619 = vadd.f32 %v313, %v550
  %v620 = vadd.f32 %v314, %v439
  %v621 = vadd.f32 %v315, %v441
  %v622 = vadd.f32 %v316, %v552
  %v623 = vadd.f32 %v317, %v554
  %v624 = vadd.f32 %v318, %v445
  %v625 = vadd.f32 %v319, %v447
  %v626 = vadd.f32 %v320, %v558
  %v627 = vadd.f32 %v321, %v560
  %v628 = vadd.f32 %v322, %v449
  %v629 = vadd.f32 %v323, %v451
  %v630 = vadd.f32 %v324, %v562
  %v631 = vadd.f32 %v325, %v564
  %v632 = vadd.f32 %v326, %v455
  %v633 = vadd.f32 %v327, %v457
  %v634 = vadd.f32 %v328, %v568
  %v635 = vadd.f32 %v329, %v570
  %v636 = vadd.f32 %v330, %v459
  %v637 = vadd.f32 %v331, %v461
  %v638 = vadd.f32 %v332, %v572
  %v639 = vadd.f32 %v333, %v574
  %640 = vst [vmem:[#allocation2] sm:$0xff] %v576
  %641 = vst [vmem:[#allocation2 + $0x8] sm:$0xff] %v577
  %642 = vst [vmem:[#allocation2 + $0x10] sm:$0xff] %v578
  %643 = vst [vmem:[#allocation2 + $0x18] sm:$0xff] %v579
  %644 = vst [vmem:[#allocation2 + $0x20] sm:$0xff] %v580
  %645 = vst [vmem:[#allocation2 + $0x28] sm:$0xff] %v581
  %646 = vst [vmem:[#allocation2 + $0x30] sm:$0xff] %v582
  %647 = vst [vmem:[#allocation2 + $0x38] sm:$0xff] %v583
  %648 = vst [vmem:[#allocation2 + $0x40] sm:$0xff] %v584
  %649 = vst [vmem:[#allocation2 + $0x48] sm:$0xff] %v585
  %650 = vst [vmem:[#allocation2 + $0x50] sm:$0xff] %v586
  %651 = vst [vmem:[#allocation2 + $0x58] sm:$0xff] %v587
  %652 = vst [vmem:[#allocation2 + $0x60] sm:$0xff] %v588
  %653 = vst [vmem:[#allocation2 + $0x68] sm:$0xff] %v589
  %654 = vst [vmem:[#allocation2 + $0x70] sm:$0xff] %v590
  %655 = vst [vmem:[#allocation2 + $0x78] sm:$0xff] %v591
  %656 = vst [vmem:[#allocation2 + $0x80] sm:$0xff] %v592
  %657 = vst [vmem:[#allocation2 + $0x88] sm:$0xff] %v593
  %658 = vst [vmem:[#allocation2 + $0x90] sm:$0xff] %v594
  %659 = vst [vmem:[#allocation2 + $0x98] sm:$0xff] %v595
  %660 = vst [vmem:[#allocation2 + $0xa0] sm:$0xff] %v596
  %661 = vst [vmem:[#allocation2 + $0xa8] sm:$0xff] %v597
  %662 = vst [vmem:[#allocation2 + $0xb0] sm:$0xff] %v598
  %663 = vst [vmem:[#allocation2 + $0xb8] sm:$0xff] %v599
  %664 = vst [vmem:[#allocation2 + $0xc0] sm:$0xff] %v600
  %665 = vst [vmem:[#allocation2 + $0xc8] sm:$0xff] %v601
  %666 = vst [vmem:[#allocation2 + $0xd0] sm:$0xff] %v602
  %667 = vst [vmem:[#allocation2 + $0xd8] sm:$0xff] %v603
  %668 = vst [vmem:[#allocation2 + $0xe0] sm:$0xff] %v604
  %669 = vst [vmem:[#allocation2 + $0xe8] sm:$0xff] %v605
  %670 = vst [vmem:[#allocation2 + $0xf0] sm:$0xff] %v606
  %671 = vst [vmem:[#allocation2 + $0xf8] sm:$0xff] %v607
  %672 = vst [vmem:[#allocation2 + $0x100] sm:$0xff] %v608
  %673 = vst [vmem:[#allocation2 + $0x108] sm:$0xff] %v609
  %674 = vst [vmem:[#allocation2 + $0x110] sm:$0xff] %v610
  %675 = vst [vmem:[#allocation2 + $0x118] sm:$0xff] %v611
  %676 = vst [vmem:[#allocation2 + $0x120] sm:$0xff] %v612
  %677 = vst [vmem:[#allocation2 + $0x128] sm:$0xff] %v613
  %678 = vst [vmem:[#allocation2 + $0x130] sm:$0xff] %v614
  %679 = vst [vmem:[#allocation2 + $0x138] sm:$0xff] %v615
  %680 = vst [vmem:[#allocation2 + $0x140] sm:$0xff] %v616
  %681 = vst [vmem:[#allocation2 + $0x148] sm:$0xff] %v617
  %682 = vst [vmem:[#allocation2 + $0x150] sm:$0xff] %v618
  %683 = vst [vmem:[#allocation2 + $0x158] sm:$0xff] %v619
  %684 = vst [vmem:[#allocation2 + $0x160] sm:$0xff] %v620
  %685 = vst [vmem:[#allocation2 + $0x168] sm:$0xff] %v621
  %686 = vst [vmem:[#allocation2 + $0x170] sm:$0xff] %v622
  %687 = vst [vmem:[#allocation2 + $0x178] sm:$0xff] %v623
  %688 = vst [vmem:[#allocation2 + $0x180] sm:$0xff] %v624
  %689 = vst [vmem:[#allocation2 + $0x188] sm:$0xff] %v625
  %690 = vst [vmem:[#allocation2 + $0x190] sm:$0xff] %v626
  %691 = vst [vmem:[#allocation2 + $0x198] sm:$0xff] %v627
  %692 = vst [vmem:[#allocation2 + $0x1a0] sm:$0xff] %v628
  %693 = vst [vmem:[#allocation2 + $0x1a8] sm:$0xff] %v629
  %694 = vst [vmem:[#allocation2 + $0x1b0] sm:$0xff] %v630
  %695 = vst [vmem:[#allocation2 + $0x1b8] sm:$0xff] %v631
  %696 = vst [vmem:[#allocation2 + $0x1c0] sm:$0xff] %v632
  %697 = vst [vmem:[#allocation2 + $0x1c8] sm:$0xff] %v633
  %698 = vst [vmem:[#allocation2 + $0x1d0] sm:$0xff] %v634
  %699 = vst [vmem:[#allocation2 + $0x1d8] sm:$0xff] %v635
  %700 = vst [vmem:[#allocation2 + $0x1e0] sm:$0xff] %v636
  %701 = vst [vmem:[#allocation2 + $0x1e8] sm:$0xff] %v637
  %702 = vst [vmem:[#allocation2 + $0x1f0] sm:$0xff] %v638
  %703 = vst [vmem:[#allocation2 + $0x1f8] sm:$0xff] %v639
  // Predicated region
  $region22: #{gcn_forward.7} parent=0 // pred_check
    %p704 = pneg %p18
  $region23: #{gcn_forward.7} parent=0 // pred_check_branch
    %706 = sbr.rel (%p704) target = $region25
  $region24: #{gcn_forward.7} parent=0 // pred_region
    %v707 = vld [vmem:[%s3] sm:$0xff]
    %v708 = vld [vmem:[%s3 + $0x8] sm:$0xff]
    %v709 = vld [vmem:[%s3 + $0x10] sm:$0xff]
    %v710 = vld [vmem:[%s3 + $0x18] sm:$0xff]
    %v711 = vld [vmem:[%s3 + $0x20] sm:$0xff]
    %v712 = vld [vmem:[%s3 + $0x28] sm:$0xff]
    %v713 = vld [vmem:[%s3 + $0x30] sm:$0xff]
    %v714 = vld [vmem:[%s3 + $0x38] sm:$0xff]
    %v715 = vld [vmem:[%s3 + $0x40] sm:$0xff]
    %v716 = vld [vmem:[%s3 + $0x48] sm:$0xff]
    %v717 = vld [vmem:[%s3 + $0x50] sm:$0xff]
    %v718 = vld [vmem:[%s3 + $0x58] sm:$0xff]
    %v719 = vld [vmem:[%s3 + $0x60] sm:$0xff]
    %v720 = vld [vmem:[%s3 + $0x68] sm:$0xff]
    %v721 = vld [vmem:[%s3 + $0x70] sm:$0xff]
    %v722 = vld [vmem:[%s3 + $0x78] sm:$0xff]
    %v723 = vld [vmem:[#allocation2] sm:$0xff]
    %v724 = vld [vmem:[#allocation2 + $0x8] sm:$0xff]
    %v725 = vld [vmem:[#allocation2 + $0x10] sm:$0xff]
    %v726 = vld [vmem:[#allocation2 + $0x18] sm:$0xff]
    %v727 = vld [vmem:[#allocation2 + $0x20] sm:$0xff]
    %v728 = vld [vmem:[#allocation2 + $0x28] sm:$0xff]
    %v729 = vld [vmem:[#allocation2 + $0x30] sm:$0xff]
    %v730 = vld [vmem:[#allocation2 + $0x38] sm:$0xff]
    %v731 = vld [vmem:[#allocation2 + $0x40] sm:$0xff]
    %v732 = vld [vmem:[#allocation2 + $0x48] sm:$0xff]
    %v733 = vld [vmem:[#allocation2 + $0x50] sm:$0xff]
    %v734 = vld [vmem:[#allocation2 + $0x58] sm:$0xff]
    %v735 = vld [vmem:[#allocation2 + $0x60] sm:$0xff]
    %v736 = vld [vmem:[#allocation2 + $0x68] sm:$0xff]
    %v737 = vld [vmem:[#allocation2 + $0x70] sm:$0xff]
    %v738 = vld [vmem:[#allocation2 + $0x78] sm:$0xff]
    %v739 = vld [vmem:[#allocation2 + $0x80] sm:$0xff]
    %v740 = vld [vmem:[#allocation2 + $0x88] sm:$0xff]
    %v741 = vld [vmem:[#allocation2 + $0x90] sm:$0xff]
    %v742 = vld [vmem:[#allocation2 + $0x98] sm:$0xff]
    %v743 = vld [vmem:[#allocation2 + $0xa0] sm:$0xff]
    %v744 = vld [vmem:[#allocation2 + $0xa8] sm:$0xff]
    %v745 = vld [vmem:[#allocation2 + $0xb0] sm:$0xff]
    %v746 = vld [vmem:[#allocation2 + $0xb8] sm:$0xff]
    %v747 = vld [vmem:[#allocation2 + $0xc0] sm:$0xff]
    %v748 = vld [vmem:[#allocation2 + $0xc8] sm:$0xff]
    %v749 = vld [vmem:[#allocation2 + $0xd0] sm:$0xff]
    %v750 = vld [vmem:[#allocation2 + $0xd8] sm:$0xff]
    %v751 = vld [vmem:[#allocation2 + $0xe0] sm:$0xff]
    %v752 = vld [vmem:[#allocation2 + $0xe8] sm:$0xff]
    %v753 = vld [vmem:[#allocation2 + $0xf0] sm:$0xff]
    %v754 = vld [vmem:[#allocation2 + $0xf8] sm:$0xff]
    %v755 = vld [vmem:[#allocation2 + $0x100] sm:$0xff]
    %v756 = vld [vmem:[#allocation2 + $0x108] sm:$0xff]
    %v757 = vld [vmem:[#allocation2 + $0x110] sm:$0xff]
    %v758 = vld [vmem:[#allocation2 + $0x118] sm:$0xff]
    %v759 = vld [vmem:[#allocation2 + $0x120] sm:$0xff]
    %v760 = vld [vmem:[#allocation2 + $0x128] sm:$0xff]
    %v761 = vld [vmem:[#allocation2 + $0x130] sm:$0xff]
    %v762 = vld [vmem:[#allocation2 + $0x138] sm:$0xff]
    %v763 = vld [vmem:[#allocation2 + $0x140] sm:$0xff]
    %v764 = vld [vmem:[#allocation2 + $0x148] sm:$0xff]
    %v765 = vld [vmem:[#allocation2 + $0x150] sm:$0xff]
    %v766 = vld [vmem:[#allocation2 + $0x158] sm:$0xff]
    %v767 = vld [vmem:[#allocation2 + $0x160] sm:$0xff]
    %v768 = vld [vmem:[#allocation2 + $0x168] sm:$0xff]
    %v769 = vld [vmem:[#allocation2 + $0x170] sm:$0xff]
    %v770 = vld [vmem:[#allocation2 + $0x178] sm:$0xff]
    %v771 = vld [vmem:[#allocation2 + $0x180] sm:$0xff]
    %v772 = vld [vmem:[#allocation2 + $0x188] sm:$0xff]
    %v773 = vld [vmem:[#allocation2 + $0x190] sm:$0xff]
    %v774 = vld [vmem:[#allocation2 + $0x198] sm:$0xff]
    %v775 = vld [vmem:[#allocation2 + $0x1a0] sm:$0xff]
    %v776 = vld [vmem:[#allocation2 + $0x1a8] sm:$0xff]
    %v777 = vld [vmem:[#allocation2 + $0x1b0] sm:$0xff]
    %v778 = vld [vmem:[#allocation2 + $0x1b8] sm:$0xff]
    %v779 = vld [vmem:[#allocation2 + $0x1c0] sm:$0xff]
    %v780 = vld [vmem:[#allocation2 + $0x1c8] sm:$0xff]
    %v781 = vld [vmem:[#allocation2 + $0x1d0] sm:$0xff]
    %v782 = vld [vmem:[#allocation2 + $0x1d8] sm:$0xff]
    %v783 = vld [vmem:[#allocation2 + $0x1e0] sm:$0xff]
    %v784 = vld [vmem:[#allocation2 + $0x1e8] sm:$0xff]
    %v785 = vld [vmem:[#allocation2 + $0x1f0] sm:$0xff]
    %v786 = vld [vmem:[#allocation2 + $0x1f8] sm:$0xff]
    %788 = vset.pattern.permute.xlu0 0
    %789 = vperm.xlu0 %788, %v707
    %v790 = vpop.permute.xlu0 %789
    %793 = vset.pattern.permute.xlu0 0
    %794 = vperm.xlu0 %793, %v708
    %v795 = vpop.permute.xlu0 %794
    %798 = vset.pattern.permute.xlu0 0
    %799 = vperm.xlu0 %798, %v709
    %v800 = vpop.permute.xlu0 %799
    %803 = vset.pattern.permute.xlu0 0
    %804 = vperm.xlu0 %803, %v710
    %v805 = vpop.permute.xlu0 %804
    %808 = vset.pattern.permute.xlu0 0
    %809 = vperm.xlu0 %808, %v711
    %v810 = vpop.permute.xlu0 %809
    %813 = vset.pattern.permute.xlu0 0
    %814 = vperm.xlu0 %813, %v712
    %v815 = vpop.permute.xlu0 %814
    %818 = vset.pattern.permute.xlu0 0
    %819 = vperm.xlu0 %818, %v713
    %v820 = vpop.permute.xlu0 %819
    %823 = vset.pattern.permute.xlu0 0
    %824 = vperm.xlu0 %823, %v714
    %v825 = vpop.permute.xlu0 %824
    %828 = vset.pattern.permute.xlu0 0
    %829 = vperm.xlu0 %828, %v715
    %v830 = vpop.permute.xlu0 %829
    %833 = vset.pattern.permute.xlu0 0
    %834 = vperm.xlu0 %833, %v716
    %v835 = vpop.permute.xlu0 %834
    %838 = vset.pattern.permute.xlu0 0
    %839 = vperm.xlu0 %838, %v717
    %v840 = vpop.permute.xlu0 %839
    %843 = vset.pattern.permute.xlu0 0
    %844 = vperm.xlu0 %843, %v718
    %v845 = vpop.permute.xlu0 %844
    %848 = vset.pattern.permute.xlu0 0
    %849 = vperm.xlu0 %848, %v719
    %v850 = vpop.permute.xlu0 %849
    %853 = vset.pattern.permute.xlu0 0
    %854 = vperm.xlu0 %853, %v720
    %v855 = vpop.permute.xlu0 %854
    %858 = vset.pattern.permute.xlu0 0
    %859 = vperm.xlu0 %858, %v721
    %v860 = vpop.permute.xlu0 %859
    %863 = vset.pattern.permute.xlu0 0
    %864 = vperm.xlu0 %863, %v722
    %v865 = vpop.permute.xlu0 %864
    %v867 = vmul.f32 %v790, %v723
    %v868 = vmul.f32 %v790, %v724
    %v869 = vmul.f32 %v790, %v725
    %v870 = vmul.f32 %v790, %v726
    %v871 = vmul.f32 %v795, %v727
    %v872 = vmul.f32 %v795, %v728
    %v873 = vmul.f32 %v795, %v729
    %v874 = vmul.f32 %v795, %v730
    %v875 = vmul.f32 %v800, %v731
    %v876 = vmul.f32 %v800, %v732
    %v877 = vmul.f32 %v800, %v733
    %v878 = vmul.f32 %v800, %v734
    %v879 = vmul.f32 %v805, %v735
    %v880 = vmul.f32 %v805, %v736
    %v881 = vmul.f32 %v805, %v737
    %v882 = vmul.f32 %v805, %v738
    %v883 = vmul.f32 %v810, %v739
    %v884 = vmul.f32 %v810, %v740
    %v885 = vmul.f32 %v810, %v741
    %v886 = vmul.f32 %v810, %v742
    %v887 = vmul.f32 %v815, %v743
    %v888 = vmul.f32 %v815, %v744
    %v889 = vmul.f32 %v815, %v745
    %v890 = vmul.f32 %v815, %v746
    %v891 = vmul.f32 %v820, %v747
    %v892 = vmul.f32 %v820, %v748
    %v893 = vmul.f32 %v820, %v749
    %v894 = vmul.f32 %v820, %v750
    %v895 = vmul.f32 %v825, %v751
    %v896 = vmul.f32 %v825, %v752
    %v897 = vmul.f32 %v825, %v753
    %v898 = vmul.f32 %v825, %v754
    %v899 = vmul.f32 %v830, %v755
    %v900 = vmul.f32 %v830, %v756
    %v901 = vmul.f32 %v830, %v757
    %v902 = vmul.f32 %v830, %v758
    %v903 = vmul.f32 %v835, %v759
    %v904 = vmul.f32 %v835, %v760
    %v905 = vmul.f32 %v835, %v761
    %v906 = vmul.f32 %v835, %v762
    %v907 = vmul.f32 %v840, %v763
    %v908 = vmul.f32 %v840, %v764
    %v909 = vmul.f32 %v840, %v765
    %v910 = vmul.f32 %v840, %v766
    %v911 = vmul.f32 %v845, %v767
    %v912 = vmul.f32 %v845, %v768
    %v913 = vmul.f32 %v845, %v769
    %v914 = vmul.f32 %v845, %v770
    %v915 = vmul.f32 %v850, %v771
    %v916 = vmul.f32 %v850, %v772
    %v917 = vmul.f32 %v850, %v773
    %v918 = vmul.f32 %v850, %v774
    %v919 = vmul.f32 %v855, %v775
    %v920 = vmul.f32 %v855, %v776
    %v921 = vmul.f32 %v855, %v777
    %v922 = vmul.f32 %v855, %v778
    %v923 = vmul.f32 %v860, %v779
    %v924 = vmul.f32 %v860, %v780
    %v925 = vmul.f32 %v860, %v781
    %v926 = vmul.f32 %v860, %v782
    %v927 = vmul.f32 %v865, %v783
    %v928 = vmul.f32 %v865, %v784
    %v929 = vmul.f32 %v865, %v785
    %v930 = vmul.f32 %v865, %v786
    %vm931 = vcmp.ge.f32.partialorder %v867, 0.0
    %vm932 = vcmp.ge.f32.partialorder %v868, 0.0
    %vm933 = vcmp.ge.f32.partialorder %v869, 0.0
    %vm934 = vcmp.ge.f32.partialorder %v870, 0.0
    %vm935 = vcmp.ge.f32.partialorder %v871, 0.0
    %vm936 = vcmp.ge.f32.partialorder %v872, 0.0
    %vm937 = vcmp.ge.f32.partialorder %v873, 0.0
    %vm938 = vcmp.ge.f32.partialorder %v874, 0.0
    %vm939 = vcmp.ge.f32.partialorder %v875, 0.0
    %vm940 = vcmp.ge.f32.partialorder %v876, 0.0
    %vm941 = vcmp.ge.f32.partialorder %v877, 0.0
    %vm942 = vcmp.ge.f32.partialorder %v878, 0.0
    %vm943 = vcmp.ge.f32.partialorder %v879, 0.0
    %vm944 = vcmp.ge.f32.partialorder %v880, 0.0
    %vm945 = vcmp.ge.f32.partialorder %v881, 0.0
    %vm946 = vcmp.ge.f32.partialorder %v882, 0.0
    %vm947 = vcmp.ge.f32.partialorder %v883, 0.0
    %vm948 = vcmp.ge.f32.partialorder %v884, 0.0
    %vm949 = vcmp.ge.f32.partialorder %v885, 0.0
    %vm950 = vcmp.ge.f32.partialorder %v886, 0.0
    %vm951 = vcmp.ge.f32.partialorder %v887, 0.0
    %vm952 = vcmp.ge.f32.partialorder %v888, 0.0
    %vm953 = vcmp.ge.f32.partialorder %v889, 0.0
    %vm954 = vcmp.ge.f32.partialorder %v890, 0.0
    %vm955 = vcmp.ge.f32.partialorder %v891, 0.0
    %vm956 = vcmp.ge.f32.partialorder %v892, 0.0
    %vm957 = vcmp.ge.f32.partialorder %v893, 0.0
    %vm958 = vcmp.ge.f32.partialorder %v894, 0.0
    %vm959 = vcmp.ge.f32.partialorder %v895, 0.0
    %vm960 = vcmp.ge.f32.partialorder %v896, 0.0
    %vm961 = vcmp.ge.f32.partialorder %v897, 0.0
    %vm962 = vcmp.ge.f32.partialorder %v898, 0.0
    %vm963 = vcmp.ge.f32.partialorder %v899, 0.0
    %vm964 = vcmp.ge.f32.partialorder %v900, 0.0
    %vm965 = vcmp.ge.f32.partialorder %v901, 0.0
    %vm966 = vcmp.ge.f32.partialorder %v902, 0.0
    %vm967 = vcmp.ge.f32.partialorder %v903, 0.0
    %vm968 = vcmp.ge.f32.partialorder %v904, 0.0
    %vm969 = vcmp.ge.f32.partialorder %v905, 0.0
    %vm970 = vcmp.ge.f32.partialorder %v906, 0.0
    %vm971 = vcmp.ge.f32.partialorder %v907, 0.0
    %vm972 = vcmp.ge.f32.partialorder %v908, 0.0
    %vm973 = vcmp.ge.f32.partialorder %v909, 0.0
    %vm974 = vcmp.ge.f32.partialorder %v910, 0.0
    %vm975 = vcmp.ge.f32.partialorder %v911, 0.0
    %vm976 = vcmp.ge.f32.partialorder %v912, 0.0
    %vm977 = vcmp.ge.f32.partialorder %v913, 0.0
    %vm978 = vcmp.ge.f32.partialorder %v914, 0.0
    %vm979 = vcmp.ge.f32.partialorder %v915, 0.0
    %vm980 = vcmp.ge.f32.partialorder %v916, 0.0
    %vm981 = vcmp.ge.f32.partialorder %v917, 0.0
    %vm982 = vcmp.ge.f32.partialorder %v918, 0.0
    %vm983 = vcmp.ge.f32.partialorder %v919, 0.0
    %vm984 = vcmp.ge.f32.partialorder %v920, 0.0
    %vm985 = vcmp.ge.f32.partialorder %v921, 0.0
    %vm986 = vcmp.ge.f32.partialorder %v922, 0.0
    %vm987 = vcmp.ge.f32.partialorder %v923, 0.0
    %vm988 = vcmp.ge.f32.partialorder %v924, 0.0
    %vm989 = vcmp.ge.f32.partialorder %v925, 0.0
    %vm990 = vcmp.ge.f32.partialorder %v926, 0.0
    %vm991 = vcmp.ge.f32.partialorder %v927, 0.0
    %vm992 = vcmp.ge.f32.partialorder %v928, 0.0
    %vm993 = vcmp.ge.f32.partialorder %v929, 0.0
    %vm994 = vcmp.ge.f32.partialorder %v930, 0.0
    %v995 = vmul.f32 %v867, 0.2
    %v996 = vmul.f32 %v868, 0.2
    %v997 = vmul.f32 %v869, 0.2
    %v998 = vmul.f32 %v870, 0.2
    %v999 = vmul.f32 %v871, 0.2
    %v1000 = vmul.f32 %v872, 0.2
    %v1001 = vmul.f32 %v873, 0.2
    %v1002 = vmul.f32 %v874, 0.2
    %v1003 = vmul.f32 %v875, 0.2
    %v1004 = vmul.f32 %v876, 0.2
    %v1005 = vmul.f32 %v877, 0.2
    %v1006 = vmul.f32 %v878, 0.2
    %v1007 = vmul.f32 %v879, 0.2
    %v1008 = vmul.f32 %v880, 0.2
    %v1009 = vmul.f32 %v881, 0.2
    %v1010 = vmul.f32 %v882, 0.2
    %v1011 = vmul.f32 %v883, 0.2
    %v1012 = vmul.f32 %v884, 0.2
    %v1013 = vmul.f32 %v885, 0.2
    %v1014 = vmul.f32 %v886, 0.2
    %v1015 = vmul.f32 %v887, 0.2
    %v1016 = vmul.f32 %v888, 0.2
    %v1017 = vmul.f32 %v889, 0.2
    %v1018 = vmul.f32 %v890, 0.2
    %v1019 = vmul.f32 %v891, 0.2
    %v1020 = vmul.f32 %v892, 0.2
    %v1021 = vmul.f32 %v893, 0.2
    %v1022 = vmul.f32 %v894, 0.2
    %v1023 = vmul.f32 %v895, 0.2
    %v1024 = vmul.f32 %v896, 0.2
    %v1025 = vmul.f32 %v897, 0.2
    %v1026 = vmul.f32 %v898, 0.2
    %v1027 = vmul.f32 %v899, 0.2
    %v1028 = vmul.f32 %v900, 0.2
    %v1029 = vmul.f32 %v901, 0.2
    %v1030 = vmul.f32 %v902, 0.2
    %v1031 = vmul.f32 %v903, 0.2
    %v1032 = vmul.f32 %v904, 0.2
    %v1033 = vmul.f32 %v905, 0.2
    %v1034 = vmul.f32 %v906, 0.2
    %v1035 = vmul.f32 %v907, 0.2
    %v1036 = vmul.f32 %v908, 0.2
    %v1037 = vmul.f32 %v909, 0.2
    %v1038 = vmul.f32 %v910, 0.2
    %v1039 = vmul.f32 %v911, 0.2
    %v1040 = vmul.f32 %v912, 0.2
    %v1041 = vmul.f32 %v913, 0.2
    %v1042 = vmul.f32 %v914, 0.2
    %v1043 = vmul.f32 %v915, 0.2
    %v1044 = vmul.f32 %v916, 0.2
    %v1045 = vmul.f32 %v917, 0.2
    %v1046 = vmul.f32 %v918, 0.2
    %v1047 = vmul.f32 %v919, 0.2
    %v1048 = vmul.f32 %v920, 0.2
    %v1049 = vmul.f32 %v921, 0.2
    %v1050 = vmul.f32 %v922, 0.2
    %v1051 = vmul.f32 %v923, 0.2
    %v1052 = vmul.f32 %v924, 0.2
    %v1053 = vmul.f32 %v925, 0.2
    %v1054 = vmul.f32 %v926, 0.2
    %v1055 = vmul.f32 %v927, 0.2
    %v1056 = vmul.f32 %v928, 0.2
    %v1057 = vmul.f32 %v929, 0.2
    %v1058 = vmul.f32 %v930, 0.2
    %v1059 = vsel %vm931, %v867, %v995
    %v1060 = vsel %vm932, %v868, %v996
    %v1061 = vsel %vm933, %v869, %v997
    %v1062 = vsel %vm934, %v870, %v998
    %v1063 = vsel %vm935, %v871, %v999
    %v1064 = vsel %vm936, %v872, %v1000
    %v1065 = vsel %vm937, %v873, %v1001
    %v1066 = vsel %vm938, %v874, %v1002
    %v1067 = vsel %vm939, %v875, %v1003
    %v1068 = vsel %vm940, %v876, %v1004
    %v1069 = vsel %vm941, %v877, %v1005
    %v1070 = vsel %vm942, %v878, %v1006
    %v1071 = vsel %vm943, %v879, %v1007
    %v1072 = vsel %vm944, %v880, %v1008
    %v1073 = vsel %vm945, %v881, %v1009
    %v1074 = vsel %vm946, %v882, %v1010
    %v1075 = vsel %vm947, %v883, %v1011
    %v1076 = vsel %vm948, %v884, %v1012
    %v1077 = vsel %vm949, %v885, %v1013
    %v1078 = vsel %vm950, %v886, %v1014
    %v1079 = vsel %vm951, %v887, %v1015
    %v1080 = vsel %vm952, %v888, %v1016
    %v1081 = vsel %vm953, %v889, %v1017
    %v1082 = vsel %vm954, %v890, %v1018
    %v1083 = vsel %vm955, %v891, %v1019
    %v1084 = vsel %vm956, %v892, %v1020
    %v1085 = vsel %vm957, %v893, %v1021
    %v1086 = vsel %vm958, %v894, %v1022
    %v1087 = vsel %vm959, %v895, %v1023
    %v1088 = vsel %vm960, %v896, %v1024
    %v1089 = vsel %vm961, %v897, %v1025
    %v1090 = vsel %vm962, %v898, %v1026
    %v1091 = vsel %vm963, %v899, %v1027
    %v1092 = vsel %vm964, %v900, %v1028
    %v1093 = vsel %vm965, %v901, %v1029
    %v1094 = vsel %vm966, %v902, %v1030
    %v1095 = vsel %vm967, %v903, %v1031
    %v1096 = vsel %vm968, %v904, %v1032
    %v1097 = vsel %vm969, %v905, %v1033
    %v1098 = vsel %vm970, %v906, %v1034
    %v1099 = vsel %vm971, %v907, %v1035
    %v1100 = vsel %vm972, %v908, %v1036
    %v1101 = vsel %vm973, %v909, %v1037
    %v1102 = vsel %vm974, %v910, %v1038
    %v1103 = vsel %vm975, %v911, %v1039
    %v1104 = vsel %vm976, %v912, %v1040
    %v1105 = vsel %vm977, %v913, %v1041
    %v1106 = vsel %vm978, %v914, %v1042
    %v1107 = vsel %vm979, %v915, %v1043
    %v1108 = vsel %vm980, %v916, %v1044
    %v1109 = vsel %vm981, %v917, %v1045
    %v1110 = vsel %vm982, %v918, %v1046
    %v1111 = vsel %vm983, %v919, %v1047
    %v1112 = vsel %vm984, %v920, %v1048
    %v1113 = vsel %vm985, %v921, %v1049
    %v1114 = vsel %vm986, %v922, %v1050
    %v1115 = vsel %vm987, %v923, %v1051
    %v1116 = vsel %vm988, %v924, %v1052
    %v1117 = vsel %vm989, %v925, %v1053
    %v1118 = vsel %vm990, %v926, %v1054
    %v1119 = vsel %vm991, %v927, %v1055
    %v1120 = vsel %vm992, %v928, %v1056
    %v1121 = vsel %vm993, %v929, %v1057
    %v1122 = vsel %vm994, %v930, %v1058
    %1123 = vst [vmem:[%s4] sm:$0xff] %v1059
    %1124 = vst [vmem:[%s4 + $0x8] sm:$0xff] %v1060
    %1125 = vst [vmem:[%s4 + $0x10] sm:$0xff] %v1061
    %1126 = vst [vmem:[%s4 + $0x18] sm:$0xff] %v1062
    %1127 = vst [vmem:[%s4 + $0x20] sm:$0xff] %v1063
    %1128 = vst [vmem:[%s4 + $0x28] sm:$0xff] %v1064
    %1129 = vst [vmem:[%s4 + $0x30] sm:$0xff] %v1065
    %1130 = vst [vmem:[%s4 + $0x38] sm:$0xff] %v1066
    %1131 = vst [vmem:[%s4 + $0x40] sm:$0xff] %v1067
    %1132 = vst [vmem:[%s4 + $0x48] sm:$0xff] %v1068
    %1133 = vst [vmem:[%s4 + $0x50] sm:$0xff] %v1069
    %1134 = vst [vmem:[%s4 + $0x58] sm:$0xff] %v1070
    %1135 = vst [vmem:[%s4 + $0x60] sm:$0xff] %v1071
    %1136 = vst [vmem:[%s4 + $0x68] sm:$0xff] %v1072
    %1137 = vst [vmem:[%s4 + $0x70] sm:$0xff] %v1073
    %1138 = vst [vmem:[%s4 + $0x78] sm:$0xff] %v1074
    %1139 = vst [vmem:[%s4 + $0x80] sm:$0xff] %v1075
    %1140 = vst [vmem:[%s4 + $0x88] sm:$0xff] %v1076
    %1141 = vst [vmem:[%s4 + $0x90] sm:$0xff] %v1077
    %1142 = vst [vmem:[%s4 + $0x98] sm:$0xff] %v1078
    %1143 = vst [vmem:[%s4 + $0xa0] sm:$0xff] %v1079
    %1144 = vst [vmem:[%s4 + $0xa8] sm:$0xff] %v1080
    %1145 = vst [vmem:[%s4 + $0xb0] sm:$0xff] %v1081
    %1146 = vst [vmem:[%s4 + $0xb8] sm:$0xff] %v1082
    %1147 = vst [vmem:[%s4 + $0xc0] sm:$0xff] %v1083
    %1148 = vst [vmem:[%s4 + $0xc8] sm:$0xff] %v1084
    %1149 = vst [vmem:[%s4 + $0xd0] sm:$0xff] %v1085
    %1150 = vst [vmem:[%s4 + $0xd8] sm:$0xff] %v1086
    %1151 = vst [vmem:[%s4 + $0xe0] sm:$0xff] %v1087
    %1152 = vst [vmem:[%s4 + $0xe8] sm:$0xff] %v1088
    %1153 = vst [vmem:[%s4 + $0xf0] sm:$0xff] %v1089
    %1154 = vst [vmem:[%s4 + $0xf8] sm:$0xff] %v1090
    %1155 = vst [vmem:[%s4 + $0x100] sm:$0xff] %v1091
    %1156 = vst [vmem:[%s4 + $0x108] sm:$0xff] %v1092
    %1157 = vst [vmem:[%s4 + $0x110] sm:$0xff] %v1093
    %1158 = vst [vmem:[%s4 + $0x118] sm:$0xff] %v1094
    %1159 = vst [vmem:[%s4 + $0x120] sm:$0xff] %v1095
    %1160 = vst [vmem:[%s4 + $0x128] sm:$0xff] %v1096
    %1161 = vst [vmem:[%s4 + $0x130] sm:$0xff] %v1097
    %1162 = vst [vmem:[%s4 + $0x138] sm:$0xff] %v1098
    %1163 = vst [vmem:[%s4 + $0x140] sm:$0xff] %v1099
    %1164 = vst [vmem:[%s4 + $0x148] sm:$0xff] %v1100
    %1165 = vst [vmem:[%s4 + $0x150] sm:$0xff] %v1101
    %1166 = vst [vmem:[%s4 + $0x158] sm:$0xff] %v1102
    %1167 = vst [vmem:[%s4 + $0x160] sm:$0xff] %v1103
    %1168 = vst [vmem:[%s4 + $0x168] sm:$0xff] %v1104
    %1169 = vst [vmem:[%s4 + $0x170] sm:$0xff] %v1105
    %1170 = vst [vmem:[%s4 + $0x178] sm:$0xff] %v1106
    %1171 = vst [vmem:[%s4 + $0x180] sm:$0xff] %v1107
    %1172 = vst [vmem:[%s4 + $0x188] sm:$0xff] %v1108
    %1173 = vst [vmem:[%s4 + $0x190] sm:$0xff] %v1109
    %1174 = vst [vmem:[%s4 + $0x198] sm:$0xff] %v1110
    %1175 = vst [vmem:[%s4 + $0x1a0] sm:$0xff] %v1111
    %1176 = vst [vmem:[%s4 + $0x1a8] sm:$0xff] %v1112
    %1177 = vst [vmem:[%s4 + $0x1b0] sm:$0xff] %v1113
    %1178 = vst [vmem:[%s4 + $0x1b8] sm:$0xff] %v1114
    %1179 = vst [vmem:[%s4 + $0x1c0] sm:$0xff] %v1115
    %1180 = vst [vmem:[%s4 + $0x1c8] sm:$0xff] %v1116
    %1181 = vst [vmem:[%s4 + $0x1d0] sm:$0xff] %v1117
    %1182 = vst [vmem:[%s4 + $0x1d8] sm:$0xff] %v1118
    %1183 = vst [vmem:[%s4 + $0x1e0] sm:$0xff] %v1119
    %1184 = vst [vmem:[%s4 + $0x1e8] sm:$0xff] %v1120
    %1185 = vst [vmem:[%s4 + $0x1f0] sm:$0xff] %v1121
    %1186 = vst [vmem:[%s4 + $0x1f8] sm:$0xff] %v1122
  $region25: #{gcn_forward.7} parent=0 // pred_fallthru
    _
  // Predicated region
  $region26: #{gcn_forward.7} parent=0 // pred_check
    _
  $region27: #{gcn_forward.7} parent=0 // pred_check_branch
    %1188 = sbr.rel (0) target = $region29
  $region28: #{gcn_forward.7} parent=0 // pred_region
    _
  $region29: #{gcn_forward.7} parent=0 // pred_fallthru
    _
  // Predicated region
  $region30: #{gcn_forward.7} parent=0 // pred_check
    _
  $region31: #{gcn_forward.7} parent=0 // pred_check_branch
    %1190 = sbr.rel (0) target = $region33
  $region32: #{gcn_forward.7} parent=0 // pred_region
    _
  $region33: #{gcn_forward.7} parent=0 // pred_fallthru
    _

</llo_original>
